<compile_context>
chip_gen: v7x
topology: tpu7x:2x2x1
jax: 0.10.0
libtpu: 0.0.40
codegen_flags: <defaults>
</compile_context>

<pallas_src>
import functools

import jax
import jax.numpy as jnp
from jax import lax
from jax.experimental import pallas as pl
from jax.experimental.pallas import tpu as pltpu

NEG = -1e30  # bias value for padded decoder lanes (never wins argmax)


# ----------------------------- Pallas kernel --------------------------------

def _autocope_rollout_kernel(tok0_ref, h0_ref, c0_ref,
                             tab_ref, whh_ref, wd_ref, bd_ref,
                             logits_ref, h_out_ref, c_out_ref,
                             *, hidden_size):
    """One grid point = one batch block; the full T-step recurrence runs in-kernel."""
    H = hidden_size
    T = logits_ref.shape[0]
    B, A_pad = tok0_ref.shape

    # ---- loop-invariant hoists: weights read once, broadcasts / iota built once ----
    tab = tab_ref[...]                                   # (A_pad, 4H) bf16 (emb@Wih^T + b)
    whh = whh_ref[...]                                   # (H, 4H)     bf16
    wd = wd_ref[...]                                     # (H, A_pad)  bf16
    bd = jnp.broadcast_to(bd_ref[...], (B, A_pad))       # (B, A_pad)  f32
    lane = lax.broadcasted_iota(jnp.int32, (B, A_pad), 1).astype(jnp.float32)

    onehot0 = tok0_ref[...].astype(tab.dtype)            # (B, A_pad) bf16
    h0 = h0_ref[...]                                     # (B, H) f32
    c0 = c0_ref[...]                                     # (B, H) f32

    def step(t, carry):
        onehot_bf, h_bf, h_f32, c_f32 = carry

        # Fused LSTM gates: dot(onehot, emb@Wih^T + b) + dot(h, Whh^T) -- two independent
        # MXU dots that pipeline back-to-back; f32 accumulation.
        gates = (jnp.dot(onehot_bf, tab, preferred_element_type=jnp.float32)
                 + jnp.dot(h_bf, whh, preferred_element_type=jnp.float32))     # (B, 4H)

        # Full-vreg transcendentals (EUP), then static lane slices (gate order i, f, g, o).
        s = jax.nn.sigmoid(gates)
        tg = jnp.tanh(gates)
        i_g = s[:, 0 * H:1 * H]
        f_g = s[:, 1 * H:2 * H]
        g_g = tg[:, 2 * H:3 * H]
        o_g = s[:, 3 * H:4 * H]

        c_new = f_g * c_f32 + i_g * g_g
        h_new = o_g * jnp.tanh(c_new)
        h_new_bf = h_new.astype(wd.dtype)     # cast once; reused by decoder & next step

        # Decoder (lane-dense, padded to 128 lanes).
        logits = jnp.dot(h_new_bf, wd, preferred_element_type=jnp.float32) + bd   # (B, A_pad)
        logits_ref[pl.ds(t, 1)] = logits[None]

        # Greedy next-token selection in-kernel (first-argmax one-hot, matches jnp.argmax).
        # TODO(synk): Categorical sampling (as in AUTOCOPE.sample()) would need in-kernel
        # PRNG / Gumbel noise; this kernel implements the deterministic greedy token chain.
        m = jnp.max(logits, axis=-1, keepdims=True)
        idx = jnp.min(jnp.where(logits == m, lane, float(A_pad)), axis=-1, keepdims=True)
        next_onehot = (lane == idx).astype(tab.dtype)

        return (next_onehot, h_new_bf, h_new, c_new)

    _, _, h_fin, c_fin = lax.fori_loop(
        0, T, step, (onehot0, h0.astype(tab.dtype), h0, c0), unroll=True)

    h_out_ref[...] = h_fin
    c_out_ref[...] = c_fin


# ------------------------------- wrapper -------------------------------------

def autocope_rollout(init_tok, h0, c0, params, num_steps, decoder="std",
                     batch_block=None):
    """Runs `num_steps` AUTOCOPE.forward steps (greedy token chain) in one pallas_call.

    init_tok : (B,) int32 initial token ids (row 0 of sample() uses token 0).
    h0, c0   : (B, H) f32 initial LSTM state.
    Returns (logits_all (T, B, A_pad) f32, h_final (B, H), c_final (B, H)).
    """
    B, H = h0.shape
    tab = params["emb_wih_b"]                # (A_pad, 4H) bf16  (pre-fused emb@Wih^T + b)
    whh = params["w_hh_t"]                   # (H, 4H)     bf16
    if decoder == "std":
        wd, bd = params["std_w_pad"], params["std_b_pad"]
    else:
        wd, bd = params["moi_w_pad"], params["moi_b_pad"]
    A_pad = wd.shape[1]

    if batch_block is None:
        batch_block = B
    assert B % batch_block == 0
    nb = B // batch_block
    Bb = batch_block

    tok0 = jax.nn.one_hot(init_tok, A_pad, dtype=jnp.float32)    # (B, A_pad)

    kernel = functools.partial(_autocope_rollout_kernel, hidden_size=H)
    const2 = lambda b: (0, 0)     # resident weights: fetched once, reused every grid point

    grid_spec = pltpu.PrefetchScalarGridSpec(
        num_scalar_prefetch=0,
        grid=(nb,),                                             # batch blocks only
        in_specs=[
            pl.BlockSpec((Bb, A_pad), lambda b: (b, 0)),        # tok0 one-hot
            pl.BlockSpec((Bb, H), lambda b: (b, 0)),            # h0
            pl.BlockSpec((Bb, H), lambda b: (b, 0)),            # c0
            pl.BlockSpec(tab.shape, const2),                    # pre-fused emb/gate table
            pl.BlockSpec(whh.shape, const2),                    # W_hh^T
            pl.BlockSpec(wd.shape, const2),                     # decoder weight
            pl.BlockSpec(bd.shape, const2),                     # decoder bias
        ],
        out_specs=[
            pl.BlockSpec((num_steps, Bb, A_pad), lambda b: (0, b, 0)),   # per-step logits
            pl.BlockSpec((Bb, H), lambda b: (b, 0)),                     # final h
            pl.BlockSpec((Bb, H), lambda b: (b, 0)),                     # final c
        ],
    )

    logits_all, h_fin, c_fin = pl.pallas_call(
        kernel,
        grid_spec=grid_spec,
        out_shape=(
            jax.ShapeDtypeStruct((num_steps, B, A_pad), jnp.float32),
            jax.ShapeDtypeStruct((B, H), jnp.float32),
            jax.ShapeDtypeStruct((B, H), jnp.float32),
        ),
        compiler_params=pltpu.CompilerParams(
            # Batch blocks are independent -> megacore-shard them on v7x (no-op on 1-TC chips).
            dimension_semantics=("parallel",)),
    )(tok0, h0, c0, tab, whh, wd, bd)
    return logits_all, h_fin, c_fin


# ------------------------- parameter construction ---------------------------

def init_autocope_params(key, len_std, len_moi, embedding_size, hidden_size, a_pad=128):
    """Mirror AUTOCOPE.__init__ + init_parameters(): uniform(-0.1, 0.1), decoder biases
    zeroed; moi == False so len_action == len_std.  The embedding is pre-fused into the
    input-gate matmul (emb @ W_ih^T + b_ih + b_hh), weights padded / cast to bf16."""
    init_range = 0.1
    len_action = len_std
    E, H = embedding_size, hidden_size
    ks = jax.random.split(key, 8)

    def u(k, shape):
        return jax.random.uniform(k, shape, jnp.float32, -init_range, init_range)

    embedding = u(ks[0], (len_action, E))       # (A, E)
    w_ih = u(ks[1], (4 * H, E))                 # PyTorch LSTMCell layout (i, f, g, o)
    w_hh = u(ks[2], (4 * H, H))
    b_ih = u(ks[3], (4 * H,))
    b_hh = u(ks[4], (4 * H,))
    std_w = u(ks[5], (len_std, H))
    moi_w = u(ks[6], (len_moi, H))

    emb_pad = jnp.zeros((a_pad, E), jnp.float32).at[:len_action].set(embedding)
    # Pre-fuse: row a of table = embedding[a] @ W_ih^T + (b_ih + b_hh)
    # (valid because the one-hot input sums to exactly 1).
    emb_wih_b = emb_pad @ w_ih.T + (b_ih + b_hh)[None, :]        # (A_pad, 4H) f32
    w_hh_t = w_hh.T                                              # (H, 4H)

    def pad_decoder(w, n_out):
        w_pad = jnp.zeros((H, a_pad), jnp.float32).at[:, :n_out].set(w.T)
        b_pad = jnp.full((1, a_pad), NEG, jnp.float32).at[:, :n_out].set(0.0)  # bias fill(0)
        return w_pad, b_pad

    std_w_pad, std_b_pad = pad_decoder(std_w, len_std)
    moi_w_pad, moi_b_pad = pad_decoder(moi_w, len_moi)

    return {
        "emb_wih_b": emb_wih_b.astype(jnp.bfloat16),
        "w_hh_t": w_hh_t.astype(jnp.bfloat16),
        "std_w_pad": std_w_pad.astype(jnp.bfloat16),
        "std_b_pad": std_b_pad,
        "moi_w_pad": moi_w_pad.astype(jnp.bfloat16),
        "moi_b_pad": moi_b_pad,
    }


def init_hidden(batch, hidden_size):
    h = jnp.zeros((batch, hidden_size), jnp.float32)
    c = jnp.zeros((batch, hidden_size), jnp.float32)
    return h, c


# ------------------------------ reference -----------------------------------

def _reference_rollout(tok0_onehot, h0, c0, params, num_steps, decoder="std"):
    """Pure-JAX reference of the same greedy rollout, using the SAME fused bf16 formulation."""
    tab, whh = params["emb_wih_b"], params["w_hh_t"]
    if decoder == "std":
        wd, bd = params["std_w_pad"], params["std_b_pad"]
    else:
        wd, bd = params["moi_w_pad"], params["moi_b_pad"]
    H = h0.shape[1]
    A_pad = wd.shape[1]
    onehot = tok0_onehot.astype(jnp.bfloat16)
    h, c = h0, c0
    h_bf = h0.astype(jnp.bfloat16)
    logits_all = []
    for _ in range(num_steps):
        gates = (jnp.dot(onehot, tab, preferred_element_type=jnp.float32)
                 + jnp.dot(h_bf, whh, preferred_element_type=jnp.float32))
        s = jax.nn.sigmoid(gates)
        tg = jnp.tanh(gates)
        i_g, f_g, g_g, o_g = s[:, :H], s[:, H:2 * H], tg[:, 2 * H:3 * H], s[:, 3 * H:]
        c = f_g * c + i_g * g_g
        h = o_g * jnp.tanh(c)
        h_bf = h.astype(jnp.bfloat16)
        logits = jnp.dot(h_bf, wd, preferred_element_type=jnp.float32) + bd
        logits_all.append(logits)
        onehot = jax.nn.one_hot(jnp.argmax(logits, axis=-1), A_pad, dtype=jnp.bfloat16)
    return jnp.stack(logits_all), h, c


# --------------------------------- main --------------------------------------

if __name__ == "__main__":
    # Small shapes consistent with the module's __init__ (args.*).
    LEN_STD = 8          # len(lib.nodes_std)
    LEN_MOI = 4          # len(lib.nodes_moi)
    EMBEDDING_SIZE = 32  # args.embedding_size
    HIDDEN_SIZE = 32     # args.hidden_size
    BATCH = 64           # independent rollouts batched on the sublane dim (fills MXU rows)
    BATCH_BLOCK = 32     # per-grid-point batch block; "parallel" axis -> 2 TCs on v7x
    NUM_STEPS = 8        # ~ args.graph_max_size (fixed-length rollout in-kernel)
    A_PAD = 128          # lane-dense decoder / logits width

    key = jax.random.PRNGKey(0)
    params = init_autocope_params(key, LEN_STD, LEN_MOI,
                                  EMBEDDING_SIZE, HIDDEN_SIZE, a_pad=A_PAD)

    # Row 0 mirrors sample()'s LongTensor([0]) start; other rows are extra rollouts.
    init_tok = jnp.arange(BATCH, dtype=jnp.int32) % LEN_STD
    h0, c0 = init_hidden(BATCH, HIDDEN_SIZE)

    rollout = jax.jit(functools.partial(autocope_rollout, num_steps=NUM_STEPS,
                                        decoder="std", batch_block=BATCH_BLOCK))
    logits_pad, h_fin, c_fin = rollout(init_tok, h0, c0, params)
    jax.block_until_ready((logits_pad, h_fin, c_fin))

    logits = logits_pad[:, :, :LEN_STD]            # strip lane padding

    # Correctness check against a pure-JAX reference of the same (fused) rollout.
    tok0 = jax.nn.one_hot(init_tok, A_PAD, dtype=jnp.float32)
    r_logits_pad, r_h, r_c = _reference_rollout(tok0, h0, c0, params, NUM_STEPS, "std")
    r_logits = r_logits_pad[:, :, :LEN_STD]

    assert jnp.allclose(logits, r_logits, atol=1e-3), "logits mismatch"
    assert jnp.allclose(h_fin, r_h, atol=1e-3), "h mismatch"
    assert jnp.allclose(c_fin, r_c, atol=1e-3), "c mismatch"
    # The greedy token chains must agree step-for-step.
    assert jnp.array_equal(jnp.argmax(logits, axis=-1),
                           jnp.argmax(r_logits, axis=-1)), "token chain mismatch"

    print("KERNEL_OK")
</pallas_src>

<mosaic_0001>
module attributes {stable_mosaic.version = 11 : i64} {
  func.func @_autocope_rollout_kernel(%arg0: i32, %arg1: memref<32x128xf32, #tpu.memory_space<vmem>>, %arg2: memref<32x32xf32, #tpu.memory_space<vmem>>, %arg3: memref<32x32xf32, #tpu.memory_space<vmem>>, %arg4: memref<128x128xbf16, #tpu.memory_space<vmem>>, %arg5: memref<32x128xbf16, #tpu.memory_space<vmem>>, %arg6: memref<32x128xbf16, #tpu.memory_space<vmem>>, %arg7: memref<1x128xf32, #tpu.memory_space<vmem>>, %arg8: memref<8x32x128xf32, #tpu.memory_space<vmem>>, %arg9: memref<32x32xf32, #tpu.memory_space<vmem>>, %arg10: memref<32x32xf32, #tpu.memory_space<vmem>>) attributes {dimension_semantics = [#tpu.dimension_semantics<parallel>], iteration_bounds = array<i64: 2>, scalar_prefetch = 0 : i64, scratch_operands = 0 : i64, tpu.core_type = #tpu.core_type<tc>, window_params = [{transform_indices = @transform_0, window_bounds = array<i64: 32, 128>}, {transform_indices = @transform_1, window_bounds = array<i64: 32, 32>}, {transform_indices = @transform_2, window_bounds = array<i64: 32, 32>}, {pipeline_mode = #tpu.pipeline_mode<synchronous>, transform_indices = @transform_3, window_bounds = array<i64: 128, 128>}, {pipeline_mode = #tpu.pipeline_mode<synchronous>, transform_indices = @transform_4, window_bounds = array<i64: 32, 128>}, {pipeline_mode = #tpu.pipeline_mode<synchronous>, transform_indices = @transform_5, window_bounds = array<i64: 32, 128>}, {pipeline_mode = #tpu.pipeline_mode<synchronous>, transform_indices = @transform_6, window_bounds = array<i64: 1, 128>}, {transform_indices = @transform_7, window_bounds = array<i64: 8, 32, 128>}, {transform_indices = @transform_8, window_bounds = array<i64: 32, 32>}, {transform_indices = @transform_9, window_bounds = array<i64: 32, 32>}]} {
    %c0 = arith.constant 0 : index
    %c0_0 = arith.constant 0 : index
    %0 = vector.load %arg4[%c0, %c0_0] : memref<128x128xbf16, #tpu.memory_space<vmem>>, vector<128x128xbf16>
    %c0_1 = arith.constant 0 : index
    %c0_2 = arith.constant 0 : index
    %1 = vector.load %arg5[%c0_1, %c0_2] : memref<32x128xbf16, #tpu.memory_space<vmem>>, vector<32x128xbf16>
    %c0_3 = arith.constant 0 : index
    %c0_4 = arith.constant 0 : index
    %2 = vector.load %arg6[%c0_3, %c0_4] : memref<32x128xbf16, #tpu.memory_space<vmem>>, vector<32x128xbf16>
    %c0_5 = arith.constant 0 : index
    %c0_6 = arith.constant 0 : index
    %3 = vector.load %arg7[%c0_5, %c0_6] : memref<1x128xf32, #tpu.memory_space<vmem>>, vector<1x128xf32>
    %4 = vector.shape_cast %3 : vector<1x128xf32> to vector<1x128xf32>
    %5 = vector.broadcast %4 : vector<1x128xf32> to vector<32x128xf32>
    %6 = tpu.iota {dimensions = array<i32: 1>} : vector<32x128xi32>
    %7 = arith.sitofp %6 : vector<32x128xi32> to vector<32x128xf32>
    %c0_7 = arith.constant 0 : index
    %c0_8 = arith.constant 0 : index
    %8 = vector.load %arg1[%c0_7, %c0_8] : memref<32x128xf32, #tpu.memory_space<vmem>>, vector<32x128xf32>
    %9 = arith.truncf %8 : vector<32x128xf32> to vector<32x128xbf16>
    %c0_9 = arith.constant 0 : index
    %c0_10 = arith.constant 0 : index
    %10 = vector.load %arg2[%c0_9, %c0_10] : memref<32x32xf32, #tpu.memory_space<vmem>>, vector<32x32xf32>
    %c0_11 = arith.constant 0 : index
    %c0_12 = arith.constant 0 : index
    %11 = vector.load %arg3[%c0_11, %c0_12] : memref<32x32xf32, #tpu.memory_space<vmem>>, vector<32x32xf32>
    %12 = arith.truncf %10 : vector<32x32xf32> to vector<32x32xbf16>
    %c0_i32 = arith.constant 0 : i32
    %cst = arith.constant dense<0.000000e+00> : vector<32x128xf32>
    %13 = tpu.matmul %9, %0, %cst {dimension_numbers = #tpu.dot_dimension_numbers<[1], [0], [0], [1], [0, 0, 1, 1], [], []>} : vector<32x128xbf16>, vector<128x128xbf16>, vector<32x128xf32> -> vector<32x128xf32>
    %cst_13 = arith.constant dense<0.000000e+00> : vector<32x128xf32>
    %14 = tpu.matmul %12, %1, %cst_13 {dimension_numbers = #tpu.dot_dimension_numbers<[1], [0], [0], [1], [0, 0, 1, 1], [], []>} : vector<32x32xbf16>, vector<32x128xbf16>, vector<32x128xf32> -> vector<32x128xf32>
    %15 = arith.addf %13, %14 : vector<32x128xf32>
    %16 = arith.negf %15 : vector<32x128xf32>
    %17 = math.exp %16 : vector<32x128xf32>
    %cst_14 = arith.constant 1.000000e+00 : f32
    %18 = vector.broadcast %cst_14 : f32 to vector<32x128xf32>
    %19 = arith.addf %18, %17 : vector<32x128xf32>
    %20 = arith.divf %18, %19 : vector<32x128xf32>
    %21 = math.tanh %15 : vector<32x128xf32>
    %22 = vector.extract_strided_slice %20 {offsets = [0, 0], sizes = [32, 32], strides = [1, 1]} : vector<32x128xf32> to vector<32x32xf32>
    %23 = vector.extract_strided_slice %20 {offsets = [0, 32], sizes = [32, 32], strides = [1, 1]} : vector<32x128xf32> to vector<32x32xf32>
    %24 = vector.extract_strided_slice %21 {offsets = [0, 64], sizes = [32, 32], strides = [1, 1]} : vector<32x128xf32> to vector<32x32xf32>
    %25 = vector.extract_strided_slice %20 {offsets = [0, 96], sizes = [32, 32], strides = [1, 1]} : vector<32x128xf32> to vector<32x32xf32>
    %26 = arith.mulf %23, %11 : vector<32x32xf32>
    %27 = arith.mulf %22, %24 : vector<32x32xf32>
    %28 = arith.addf %26, %27 : vector<32x32xf32>
    %29 = math.tanh %28 : vector<32x32xf32>
    %30 = arith.mulf %25, %29 : vector<32x32xf32>
    %31 = arith.truncf %30 : vector<32x32xf32> to vector<32x32xbf16>
    %cst_15 = arith.constant dense<0.000000e+00> : vector<32x128xf32>
    %32 = tpu.matmul %31, %2, %cst_15 {dimension_numbers = #tpu.dot_dimension_numbers<[1], [0], [0], [1], [0, 0, 1, 1], [], []>} : vector<32x32xbf16>, vector<32x128xbf16>, vector<32x128xf32> -> vector<32x128xf32>
    %33 = arith.addf %32, %5 : vector<32x128xf32>
    %34 = vector.shape_cast %33 : vector<32x128xf32> to vector<1x32x128xf32>
    %35 = arith.index_cast %c0_i32 : i32 to index
    %c0_16 = arith.constant 0 : index
    %c0_17 = arith.constant 0 : index
    %36 = vector.load %arg8[%35, %c0_16, %c0_17] : memref<8x32x128xf32, #tpu.memory_space<vmem>>, vector<1x32x128xf32>
    tpu.vector_store %arg8[%35, %c0_16, %c0_17], %34 {strides = array<i32>} : memref<8x32x128xf32, #tpu.memory_space<vmem>>, vector<1x32x128xf32>,
    %cst_18 = arith.constant dense<0xFF800000> : vector<32xf32>
    %37 = vector.multi_reduction <maximumf>, %33, %cst_18 [1] : vector<32x128xf32> to vector<32xf32>
    %38 = vector.shape_cast %37 : vector<32xf32> to vector<32x1xf32>
    %39 = vector.broadcast %38 : vector<32x1xf32> to vector<32x128xf32>
    %40 = arith.cmpf oeq, %33, %39 : vector<32x128xf32>
    %cst_19 = arith.constant 1.280000e+02 : f32
    %41 = vector.broadcast %cst_19 : f32 to vector<32x128xf32>
    %42 = arith.select %40, %7, %41 : vector<32x128xi1>, vector<32x128xf32>
    %cst_20 = arith.constant dense<0x7F800000> : vector<32xf32>
    %43 = vector.multi_reduction <minimumf>, %42, %cst_20 [1] : vector<32x128xf32> to vector<32xf32>
    %44 = vector.shape_cast %43 : vector<32xf32> to vector<32x1xf32>
    %45 = vector.broadcast %44 : vector<32x1xf32> to vector<32x128xf32>
    %46 = arith.cmpf oeq, %7, %45 : vector<32x128xf32>
    %47 = arith.extui %46 : vector<32x128xi1> to vector<32x128xi32>
    %48 = arith.sitofp %47 : vector<32x128xi32> to vector<32x128xf32>
    %49 = arith.truncf %48 : vector<32x128xf32> to vector<32x128xbf16>
    %c1_i32 = arith.constant 1 : i32
    %cst_21 = arith.constant dense<0.000000e+00> : vector<32x128xf32>
    %50 = tpu.matmul %49, %0, %cst_21 {dimension_numbers = #tpu.dot_dimension_numbers<[1], [0], [0], [1], [0, 0, 1, 1], [], []>} : vector<32x128xbf16>, vector<128x128xbf16>, vector<32x128xf32> -> vector<32x128xf32>
    %cst_22 = arith.constant dense<0.000000e+00> : vector<32x128xf32>
    %51 = tpu.matmul %31, %1, %cst_22 {dimension_numbers = #tpu.dot_dimension_numbers<[1], [0], [0], [1], [0, 0, 1, 1], [], []>} : vector<32x32xbf16>, vector<32x128xbf16>, vector<32x128xf32> -> vector<32x128xf32>
    %52 = arith.addf %50, %51 : vector<32x128xf32>
    %53 = arith.negf %52 : vector<32x128xf32>
    %54 = math.exp %53 : vector<32x128xf32>
    %cst_23 = arith.constant 1.000000e+00 : f32
    %55 = vector.broadcast %cst_23 : f32 to vector<32x128xf32>
    %56 = arith.addf %55, %54 : vector<32x128xf32>
    %57 = arith.divf %55, %56 : vector<32x128xf32>
    %58 = math.tanh %52 : vector<32x128xf32>
    %59 = vector.extract_strided_slice %57 {offsets = [0, 0], sizes = [32, 32], strides = [1, 1]} : vector<32x128xf32> to vector<32x32xf32>
    %60 = vector.extract_strided_slice %57 {offsets = [0, 32], sizes = [32, 32], strides = [1, 1]} : vector<32x128xf32> to vector<32x32xf32>
    %61 = vector.extract_strided_slice %58 {offsets = [0, 64], sizes = [32, 32], strides = [1, 1]} : vector<32x128xf32> to vector<32x32xf32>
    %62 = vector.extract_strided_slice %57 {offsets = [0, 96], sizes = [32, 32], strides = [1, 1]} : vector<32x128xf32> to vector<32x32xf32>
    %63 = arith.mulf %60, %28 : vector<32x32xf32>
    %64 = arith.mulf %59, %61 : vector<32x32xf32>
    %65 = arith.addf %63, %64 : vector<32x32xf32>
    %66 = math.tanh %65 : vector<32x32xf32>
    %67 = arith.mulf %62, %66 : vector<32x32xf32>
    %68 = arith.truncf %67 : vector<32x32xf32> to vector<32x32xbf16>
    %cst_24 = arith.constant dense<0.000000e+00> : vector<32x128xf32>
    %69 = tpu.matmul %68, %2, %cst_24 {dimension_numbers = #tpu.dot_dimension_numbers<[1], [0], [0], [1], [0, 0, 1, 1], [], []>} : vector<32x32xbf16>, vector<32x128xbf16>, vector<32x128xf32> -> vector<32x128xf32>
    %70 = arith.addf %69, %5 : vector<32x128xf32>
    %71 = vector.shape_cast %70 : vector<32x128xf32> to vector<1x32x128xf32>
    %72 = arith.index_cast %c1_i32 : i32 to index
    %c0_25 = arith.constant 0 : index
    %c0_26 = arith.constant 0 : index
    %73 = vector.load %arg8[%72, %c0_25, %c0_26] : memref<8x32x128xf32, #tpu.memory_space<vmem>>, vector<1x32x128xf32>
    tpu.vector_store %arg8[%72, %c0_25, %c0_26], %71 {strides = array<i32>} : memref<8x32x128xf32, #tpu.memory_space<vmem>>, vector<1x32x128xf32>,
    %cst_27 = arith.constant dense<0xFF800000> : vector<32xf32>
    %74 = vector.multi_reduction <maximumf>, %70, %cst_27 [1] : vector<32x128xf32> to vector<32xf32>
    %75 = vector.shape_cast %74 : vector<32xf32> to vector<32x1xf32>
    %76 = vector.broadcast %75 : vector<32x1xf32> to vector<32x128xf32>
    %77 = arith.cmpf oeq, %70, %76 : vector<32x128xf32>
    %cst_28 = arith.constant 1.280000e+02 : f32
    %78 = vector.broadcast %cst_28 : f32 to vector<32x128xf32>
    %79 = arith.select %77, %7, %78 : vector<32x128xi1>, vector<32x128xf32>
    %cst_29 = arith.constant dense<0x7F800000> : vector<32xf32>
    %80 = vector.multi_reduction <minimumf>, %79, %cst_29 [1] : vector<32x128xf32> to vector<32xf32>
    %81 = vector.shape_cast %80 : vector<32xf32> to vector<32x1xf32>
    %82 = vector.broadcast %81 : vector<32x1xf32> to vector<32x128xf32>
    %83 = arith.cmpf oeq, %7, %82 : vector<32x128xf32>
    %84 = arith.extui %83 : vector<32x128xi1> to vector<32x128xi32>
    %85 = arith.sitofp %84 : vector<32x128xi32> to vector<32x128xf32>
    %86 = arith.truncf %85 : vector<32x128xf32> to vector<32x128xbf16>
    %c2_i32 = arith.constant 2 : i32
    %cst_30 = arith.constant dense<0.000000e+00> : vector<32x128xf32>
    %87 = tpu.matmul %86, %0, %cst_30 {dimension_numbers = #tpu.dot_dimension_numbers<[1], [0], [0], [1], [0, 0, 1, 1], [], []>} : vector<32x128xbf16>, vector<128x128xbf16>, vector<32x128xf32> -> vector<32x128xf32>
    %cst_31 = arith.constant dense<0.000000e+00> : vector<32x128xf32>
    %88 = tpu.matmul %68, %1, %cst_31 {dimension_numbers = #tpu.dot_dimension_numbers<[1], [0], [0], [1], [0, 0, 1, 1], [], []>} : vector<32x32xbf16>, vector<32x128xbf16>, vector<32x128xf32> -> vector<32x128xf32>
    %89 = arith.addf %87, %88 : vector<32x128xf32>
    %90 = arith.negf %89 : vector<32x128xf32>
    %91 = math.exp %90 : vector<32x128xf32>
    %cst_32 = arith.constant 1.000000e+00 : f32
    %92 = vector.broadcast %cst_32 : f32 to vector<32x128xf32>
    %93 = arith.addf %92, %91 : vector<32x128xf32>
    %94 = arith.divf %92, %93 : vector<32x128xf32>
    %95 = math.tanh %89 : vector<32x128xf32>
    %96 = vector.extract_strided_slice %94 {offsets = [0, 0], sizes = [32, 32], strides = [1, 1]} : vector<32x128xf32> to vector<32x32xf32>
    %97 = vector.extract_strided_slice %94 {offsets = [0, 32], sizes = [32, 32], strides = [1, 1]} : vector<32x128xf32> to vector<32x32xf32>
    %98 = vector.extract_strided_slice %95 {offsets = [0, 64], sizes = [32, 32], strides = [1, 1]} : vector<32x128xf32> to vector<32x32xf32>
    %99 = vector.extract_strided_slice %94 {offsets = [0, 96], sizes = [32, 32], strides = [1, 1]} : vector<32x128xf32> to vector<32x32xf32>
    %100 = arith.mulf %97, %65 : vector<32x32xf32>
    %101 = arith.mulf %96, %98 : vector<32x32xf32>
    %102 = arith.addf %100, %101 : vector<32x32xf32>
    %103 = math.tanh %102 : vector<32x32xf32>
    %104 = arith.mulf %99, %103 : vector<32x32xf32>
    %105 = arith.truncf %104 : vector<32x32xf32> to vector<32x32xbf16>
    %cst_33 = arith.constant dense<0.000000e+00> : vector<32x128xf32>
    %106 = tpu.matmul %105, %2, %cst_33 {dimension_numbers = #tpu.dot_dimension_numbers<[1], [0], [0], [1], [0, 0, 1, 1], [], []>} : vector<32x32xbf16>, vector<32x128xbf16>, vector<32x128xf32> -> vector<32x128xf32>
    %107 = arith.addf %106, %5 : vector<32x128xf32>
    %108 = vector.shape_cast %107 : vector<32x128xf32> to vector<1x32x128xf32>
    %109 = arith.index_cast %c2_i32 : i32 to index
    %c0_34 = arith.constant 0 : index
    %c0_35 = arith.constant 0 : index
    %110 = vector.load %arg8[%109, %c0_34, %c0_35] : memref<8x32x128xf32, #tpu.memory_space<vmem>>, vector<1x32x128xf32>
    tpu.vector_store %arg8[%109, %c0_34, %c0_35], %108 {strides = array<i32>} : memref<8x32x128xf32, #tpu.memory_space<vmem>>, vector<1x32x128xf32>,
    %cst_36 = arith.constant dense<0xFF800000> : vector<32xf32>
    %111 = vector.multi_reduction <maximumf>, %107, %cst_36 [1] : vector<32x128xf32> to vector<32xf32>
    %112 = vector.shape_cast %111 : vector<32xf32> to vector<32x1xf32>
    %113 = vector.broadcast %112 : vector<32x1xf32> to vector<32x128xf32>
    %114 = arith.cmpf oeq, %107, %113 : vector<32x128xf32>
    %cst_37 = arith.constant 1.280000e+02 : f32
    %115 = vector.broadcast %cst_37 : f32 to vector<32x128xf32>
    %116 = arith.select %114, %7, %115 : vector<32x128xi1>, vector<32x128xf32>
    %cst_38 = arith.constant dense<0x7F800000> : vector<32xf32>
    %117 = vector.multi_reduction <minimumf>, %116, %cst_38 [1] : vector<32x128xf32> to vector<32xf32>
    %118 = vector.shape_cast %117 : vector<32xf32> to vector<32x1xf32>
    %119 = vector.broadcast %118 : vector<32x1xf32> to vector<32x128xf32>
    %120 = arith.cmpf oeq, %7, %119 : vector<32x128xf32>
    %121 = arith.extui %120 : vector<32x128xi1> to vector<32x128xi32>
    %122 = arith.sitofp %121 : vector<32x128xi32> to vector<32x128xf32>
    %123 = arith.truncf %122 : vector<32x128xf32> to vector<32x128xbf16>
    %c3_i32 = arith.constant 3 : i32
    %cst_39 = arith.constant dense<0.000000e+00> : vector<32x128xf32>
    %124 = tpu.matmul %123, %0, %cst_39 {dimension_numbers = #tpu.dot_dimension_numbers<[1], [0], [0], [1], [0, 0, 1, 1], [], []>} : vector<32x128xbf16>, vector<128x128xbf16>, vector<32x128xf32> -> vector<32x128xf32>
    %cst_40 = arith.constant dense<0.000000e+00> : vector<32x128xf32>
    %125 = tpu.matmul %105, %1, %cst_40 {dimension_numbers = #tpu.dot_dimension_numbers<[1], [0], [0], [1], [0, 0, 1, 1], [], []>} : vector<32x32xbf16>, vector<32x128xbf16>, vector<32x128xf32> -> vector<32x128xf32>
    %126 = arith.addf %124, %125 : vector<32x128xf32>
    %127 = arith.negf %126 : vector<32x128xf32>
    %128 = math.exp %127 : vector<32x128xf32>
    %cst_41 = arith.constant 1.000000e+00 : f32
    %129 = vector.broadcast %cst_41 : f32 to vector<32x128xf32>
    %130 = arith.addf %129, %128 : vector<32x128xf32>
    %131 = arith.divf %129, %130 : vector<32x128xf32>
    %132 = math.tanh %126 : vector<32x128xf32>
    %133 = vector.extract_strided_slice %131 {offsets = [0, 0], sizes = [32, 32], strides = [1, 1]} : vector<32x128xf32> to vector<32x32xf32>
    %134 = vector.extract_strided_slice %131 {offsets = [0, 32], sizes = [32, 32], strides = [1, 1]} : vector<32x128xf32> to vector<32x32xf32>
    %135 = vector.extract_strided_slice %132 {offsets = [0, 64], sizes = [32, 32], strides = [1, 1]} : vector<32x128xf32> to vector<32x32xf32>
    %136 = vector.extract_strided_slice %131 {offsets = [0, 96], sizes = [32, 32], strides = [1, 1]} : vector<32x128xf32> to vector<32x32xf32>
    %137 = arith.mulf %134, %102 : vector<32x32xf32>
    %138 = arith.mulf %133, %135 : vector<32x32xf32>
    %139 = arith.addf %137, %138 : vector<32x32xf32>
    %140 = math.tanh %139 : vector<32x32xf32>
    %141 = arith.mulf %136, %140 : vector<32x32xf32>
    %142 = arith.truncf %141 : vector<32x32xf32> to vector<32x32xbf16>
    %cst_42 = arith.constant dense<0.000000e+00> : vector<32x128xf32>
    %143 = tpu.matmul %142, %2, %cst_42 {dimension_numbers = #tpu.dot_dimension_numbers<[1], [0], [0], [1], [0, 0, 1, 1], [], []>} : vector<32x32xbf16>, vector<32x128xbf16>, vector<32x128xf32> -> vector<32x128xf32>
    %144 = arith.addf %143, %5 : vector<32x128xf32>
    %145 = vector.shape_cast %144 : vector<32x128xf32> to vector<1x32x128xf32>
    %146 = arith.index_cast %c3_i32 : i32 to index
    %c0_43 = arith.constant 0 : index
    %c0_44 = arith.constant 0 : index
    %147 = vector.load %arg8[%146, %c0_43, %c0_44] : memref<8x32x128xf32, #tpu.memory_space<vmem>>, vector<1x32x128xf32>
    tpu.vector_store %arg8[%146, %c0_43, %c0_44], %145 {strides = array<i32>} : memref<8x32x128xf32, #tpu.memory_space<vmem>>, vector<1x32x128xf32>,
    %cst_45 = arith.constant dense<0xFF800000> : vector<32xf32>
    %148 = vector.multi_reduction <maximumf>, %144, %cst_45 [1] : vector<32x128xf32> to vector<32xf32>
    %149 = vector.shape_cast %148 : vector<32xf32> to vector<32x1xf32>
    %150 = vector.broadcast %149 : vector<32x1xf32> to vector<32x128xf32>
    %151 = arith.cmpf oeq, %144, %150 : vector<32x128xf32>
    %cst_46 = arith.constant 1.280000e+02 : f32
    %152 = vector.broadcast %cst_46 : f32 to vector<32x128xf32>
    %153 = arith.select %151, %7, %152 : vector<32x128xi1>, vector<32x128xf32>
    %cst_47 = arith.constant dense<0x7F800000> : vector<32xf32>
    %154 = vector.multi_reduction <minimumf>, %153, %cst_47 [1] : vector<32x128xf32> to vector<32xf32>
    %155 = vector.shape_cast %154 : vector<32xf32> to vector<32x1xf32>
    %156 = vector.broadcast %155 : vector<32x1xf32> to vector<32x128xf32>
    %157 = arith.cmpf oeq, %7, %156 : vector<32x128xf32>
    %158 = arith.extui %157 : vector<32x128xi1> to vector<32x128xi32>
    %159 = arith.sitofp %158 : vector<32x128xi32> to vector<32x128xf32>
    %160 = arith.truncf %159 : vector<32x128xf32> to vector<32x128xbf16>
    %c4_i32 = arith.constant 4 : i32
    %cst_48 = arith.constant dense<0.000000e+00> : vector<32x128xf32>
    %161 = tpu.matmul %160, %0, %cst_48 {dimension_numbers = #tpu.dot_dimension_numbers<[1], [0], [0], [1], [0, 0, 1, 1], [], []>} : vector<32x128xbf16>, vector<128x128xbf16>, vector<32x128xf32> -> vector<32x128xf32>
    %cst_49 = arith.constant dense<0.000000e+00> : vector<32x128xf32>
    %162 = tpu.matmul %142, %1, %cst_49 {dimension_numbers = #tpu.dot_dimension_numbers<[1], [0], [0], [1], [0, 0, 1, 1], [], []>} : vector<32x32xbf16>, vector<32x128xbf16>, vector<32x128xf32> -> vector<32x128xf32>
    %163 = arith.addf %161, %162 : vector<32x128xf32>
    %164 = arith.negf %163 : vector<32x128xf32>
    %165 = math.exp %164 : vector<32x128xf32>
    %cst_50 = arith.constant 1.000000e+00 : f32
    %166 = vector.broadcast %cst_50 : f32 to vector<32x128xf32>
    %167 = arith.addf %166, %165 : vector<32x128xf32>
    %168 = arith.divf %166, %167 : vector<32x128xf32>
    %169 = math.tanh %163 : vector<32x128xf32>
    %170 = vector.extract_strided_slice %168 {offsets = [0, 0], sizes = [32, 32], strides = [1, 1]} : vector<32x128xf32> to vector<32x32xf32>
    %171 = vector.extract_strided_slice %168 {offsets = [0, 32], sizes = [32, 32], strides = [1, 1]} : vector<32x128xf32> to vector<32x32xf32>
    %172 = vector.extract_strided_slice %169 {offsets = [0, 64], sizes = [32, 32], strides = [1, 1]} : vector<32x128xf32> to vector<32x32xf32>
    %173 = vector.extract_strided_slice %168 {offsets = [0, 96], sizes = [32, 32], strides = [1, 1]} : vector<32x128xf32> to vector<32x32xf32>
    %174 = arith.mulf %171, %139 : vector<32x32xf32>
    %175 = arith.mulf %170, %172 : vector<32x32xf32>
    %176 = arith.addf %174, %175 : vector<32x32xf32>
    %177 = math.tanh %176 : vector<32x32xf32>
    %178 = arith.mulf %173, %177 : vector<32x32xf32>
    %179 = arith.truncf %178 : vector<32x32xf32> to vector<32x32xbf16>
    %cst_51 = arith.constant dense<0.000000e+00> : vector<32x128xf32>
    %180 = tpu.matmul %179, %2, %cst_51 {dimension_numbers = #tpu.dot_dimension_numbers<[1], [0], [0], [1], [0, 0, 1, 1], [], []>} : vector<32x32xbf16>, vector<32x128xbf16>, vector<32x128xf32> -> vector<32x128xf32>
    %181 = arith.addf %180, %5 : vector<32x128xf32>
    %182 = vector.shape_cast %181 : vector<32x128xf32> to vector<1x32x128xf32>
    %183 = arith.index_cast %c4_i32 : i32 to index
    %c0_52 = arith.constant 0 : index
    %c0_53 = arith.constant 0 : index
    %184 = vector.load %arg8[%183, %c0_52, %c0_53] : memref<8x32x128xf32, #tpu.memory_space<vmem>>, vector<1x32x128xf32>
    tpu.vector_store %arg8[%183, %c0_52, %c0_53], %182 {strides = array<i32>} : memref<8x32x128xf32, #tpu.memory_space<vmem>>, vector<1x32x128xf32>,
    %cst_54 = arith.constant dense<0xFF800000> : vector<32xf32>
    %185 = vector.multi_reduction <maximumf>, %181, %cst_54 [1] : vector<32x128xf32> to vector<32xf32>
    %186 = vector.shape_cast %185 : vector<32xf32> to vector<32x1xf32>
    %187 = vector.broadcast %186 : vector<32x1xf32> to vector<32x128xf32>
    %188 = arith.cmpf oeq, %181, %187 : vector<32x128xf32>
    %cst_55 = arith.constant 1.280000e+02 : f32
    %189 = vector.broadcast %cst_55 : f32 to vector<32x128xf32>
    %190 = arith.select %188, %7, %189 : vector<32x128xi1>, vector<32x128xf32>
    %cst_56 = arith.constant dense<0x7F800000> : vector<32xf32>
    %191 = vector.multi_reduction <minimumf>, %190, %cst_56 [1] : vector<32x128xf32> to vector<32xf32>
    %192 = vector.shape_cast %191 : vector<32xf32> to vector<32x1xf32>
    %193 = vector.broadcast %192 : vector<32x1xf32> to vector<32x128xf32>
    %194 = arith.cmpf oeq, %7, %193 : vector<32x128xf32>
    %195 = arith.extui %194 : vector<32x128xi1> to vector<32x128xi32>
    %196 = arith.sitofp %195 : vector<32x128xi32> to vector<32x128xf32>
    %197 = arith.truncf %196 : vector<32x128xf32> to vector<32x128xbf16>
    %c5_i32 = arith.constant 5 : i32
    %cst_57 = arith.constant dense<0.000000e+00> : vector<32x128xf32>
    %198 = tpu.matmul %197, %0, %cst_57 {dimension_numbers = #tpu.dot_dimension_numbers<[1], [0], [0], [1], [0, 0, 1, 1], [], []>} : vector<32x128xbf16>, vector<128x128xbf16>, vector<32x128xf32> -> vector<32x128xf32>
    %cst_58 = arith.constant dense<0.000000e+00> : vector<32x128xf32>
    %199 = tpu.matmul %179, %1, %cst_58 {dimension_numbers = #tpu.dot_dimension_numbers<[1], [0], [0], [1], [0, 0, 1, 1], [], []>} : vector<32x32xbf16>, vector<32x128xbf16>, vector<32x128xf32> -> vector<32x128xf32>
    %200 = arith.addf %198, %199 : vector<32x128xf32>
    %201 = arith.negf %200 : vector<32x128xf32>
    %202 = math.exp %201 : vector<32x128xf32>
    %cst_59 = arith.constant 1.000000e+00 : f32
    %203 = vector.broadcast %cst_59 : f32 to vector<32x128xf32>
    %204 = arith.addf %203, %202 : vector<32x128xf32>
    %205 = arith.divf %203, %204 : vector<32x128xf32>
    %206 = math.tanh %200 : vector<32x128xf32>
    %207 = vector.extract_strided_slice %205 {offsets = [0, 0], sizes = [32, 32], strides = [1, 1]} : vector<32x128xf32> to vector<32x32xf32>
    %208 = vector.extract_strided_slice %205 {offsets = [0, 32], sizes = [32, 32], strides = [1, 1]} : vector<32x128xf32> to vector<32x32xf32>
    %209 = vector.extract_strided_slice %206 {offsets = [0, 64], sizes = [32, 32], strides = [1, 1]} : vector<32x128xf32> to vector<32x32xf32>
    %210 = vector.extract_strided_slice %205 {offsets = [0, 96], sizes = [32, 32], strides = [1, 1]} : vector<32x128xf32> to vector<32x32xf32>
    %211 = arith.mulf %208, %176 : vector<32x32xf32>
    %212 = arith.mulf %207, %209 : vector<32x32xf32>
    %213 = arith.addf %211, %212 : vector<32x32xf32>
    %214 = math.tanh %213 : vector<32x32xf32>
    %215 = arith.mulf %210, %214 : vector<32x32xf32>
    %216 = arith.truncf %215 : vector<32x32xf32> to vector<32x32xbf16>
    %cst_60 = arith.constant dense<0.000000e+00> : vector<32x128xf32>
    %217 = tpu.matmul %216, %2, %cst_60 {dimension_numbers = #tpu.dot_dimension_numbers<[1], [0], [0], [1], [0, 0, 1, 1], [], []>} : vector<32x32xbf16>, vector<32x128xbf16>, vector<32x128xf32> -> vector<32x128xf32>
    %218 = arith.addf %217, %5 : vector<32x128xf32>
    %219 = vector.shape_cast %218 : vector<32x128xf32> to vector<1x32x128xf32>
    %220 = arith.index_cast %c5_i32 : i32 to index
    %c0_61 = arith.constant 0 : index
    %c0_62 = arith.constant 0 : index
    %221 = vector.load %arg8[%220, %c0_61, %c0_62] : memref<8x32x128xf32, #tpu.memory_space<vmem>>, vector<1x32x128xf32>
    tpu.vector_store %arg8[%220, %c0_61, %c0_62], %219 {strides = array<i32>} : memref<8x32x128xf32, #tpu.memory_space<vmem>>, vector<1x32x128xf32>,
    %cst_63 = arith.constant dense<0xFF800000> : vector<32xf32>
    %222 = vector.multi_reduction <maximumf>, %218, %cst_63 [1] : vector<32x128xf32> to vector<32xf32>
    %223 = vector.shape_cast %222 : vector<32xf32> to vector<32x1xf32>
    %224 = vector.broadcast %223 : vector<32x1xf32> to vector<32x128xf32>
    %225 = arith.cmpf oeq, %218, %224 : vector<32x128xf32>
    %cst_64 = arith.constant 1.280000e+02 : f32
    %226 = vector.broadcast %cst_64 : f32 to vector<32x128xf32>
    %227 = arith.select %225, %7, %226 : vector<32x128xi1>, vector<32x128xf32>
    %cst_65 = arith.constant dense<0x7F800000> : vector<32xf32>
    %228 = vector.multi_reduction <minimumf>, %227, %cst_65 [1] : vector<32x128xf32> to vector<32xf32>
    %229 = vector.shape_cast %228 : vector<32xf32> to vector<32x1xf32>
    %230 = vector.broadcast %229 : vector<32x1xf32> to vector<32x128xf32>
    %231 = arith.cmpf oeq, %7, %230 : vector<32x128xf32>
    %232 = arith.extui %231 : vector<32x128xi1> to vector<32x128xi32>
    %233 = arith.sitofp %232 : vector<32x128xi32> to vector<32x128xf32>
    %234 = arith.truncf %233 : vector<32x128xf32> to vector<32x128xbf16>
    %c6_i32 = arith.constant 6 : i32
    %cst_66 = arith.constant dense<0.000000e+00> : vector<32x128xf32>
    %235 = tpu.matmul %234, %0, %cst_66 {dimension_numbers = #tpu.dot_dimension_numbers<[1], [0], [0], [1], [0, 0, 1, 1], [], []>} : vector<32x128xbf16>, vector<128x128xbf16>, vector<32x128xf32> -> vector<32x128xf32>
    %cst_67 = arith.constant dense<0.000000e+00> : vector<32x128xf32>
    %236 = tpu.matmul %216, %1, %cst_67 {dimension_numbers = #tpu.dot_dimension_numbers<[1], [0], [0], [1], [0, 0, 1, 1], [], []>} : vector<32x32xbf16>, vector<32x128xbf16>, vector<32x128xf32> -> vector<32x128xf32>
    %237 = arith.addf %235, %236 : vector<32x128xf32>
    %238 = arith.negf %237 : vector<32x128xf32>
    %239 = math.exp %238 : vector<32x128xf32>
    %cst_68 = arith.constant 1.000000e+00 : f32
    %240 = vector.broadcast %cst_68 : f32 to vector<32x128xf32>
    %241 = arith.addf %240, %239 : vector<32x128xf32>
    %242 = arith.divf %240, %241 : vector<32x128xf32>
    %243 = math.tanh %237 : vector<32x128xf32>
    %244 = vector.extract_strided_slice %242 {offsets = [0, 0], sizes = [32, 32], strides = [1, 1]} : vector<32x128xf32> to vector<32x32xf32>
    %245 = vector.extract_strided_slice %242 {offsets = [0, 32], sizes = [32, 32], strides = [1, 1]} : vector<32x128xf32> to vector<32x32xf32>
    %246 = vector.extract_strided_slice %243 {offsets = [0, 64], sizes = [32, 32], strides = [1, 1]} : vector<32x128xf32> to vector<32x32xf32>
    %247 = vector.extract_strided_slice %242 {offsets = [0, 96], sizes = [32, 32], strides = [1, 1]} : vector<32x128xf32> to vector<32x32xf32>
    %248 = arith.mulf %245, %213 : vector<32x32xf32>
    %249 = arith.mulf %244, %246 : vector<32x32xf32>
    %250 = arith.addf %248, %249 : vector<32x32xf32>
    %251 = math.tanh %250 : vector<32x32xf32>
    %252 = arith.mulf %247, %251 : vector<32x32xf32>
    %253 = arith.truncf %252 : vector<32x32xf32> to vector<32x32xbf16>
    %cst_69 = arith.constant dense<0.000000e+00> : vector<32x128xf32>
    %254 = tpu.matmul %253, %2, %cst_69 {dimension_numbers = #tpu.dot_dimension_numbers<[1], [0], [0], [1], [0, 0, 1, 1], [], []>} : vector<32x32xbf16>, vector<32x128xbf16>, vector<32x128xf32> -> vector<32x128xf32>
    %255 = arith.addf %254, %5 : vector<32x128xf32>
    %256 = vector.shape_cast %255 : vector<32x128xf32> to vector<1x32x128xf32>
    %257 = arith.index_cast %c6_i32 : i32 to index
    %c0_70 = arith.constant 0 : index
    %c0_71 = arith.constant 0 : index
    %258 = vector.load %arg8[%257, %c0_70, %c0_71] : memref<8x32x128xf32, #tpu.memory_space<vmem>>, vector<1x32x128xf32>
    tpu.vector_store %arg8[%257, %c0_70, %c0_71], %256 {strides = array<i32>} : memref<8x32x128xf32, #tpu.memory_space<vmem>>, vector<1x32x128xf32>,
    %cst_72 = arith.constant dense<0xFF800000> : vector<32xf32>
    %259 = vector.multi_reduction <maximumf>, %255, %cst_72 [1] : vector<32x128xf32> to vector<32xf32>
    %260 = vector.shape_cast %259 : vector<32xf32> to vector<32x1xf32>
    %261 = vector.broadcast %260 : vector<32x1xf32> to vector<32x128xf32>
    %262 = arith.cmpf oeq, %255, %261 : vector<32x128xf32>
    %cst_73 = arith.constant 1.280000e+02 : f32
    %263 = vector.broadcast %cst_73 : f32 to vector<32x128xf32>
    %264 = arith.select %262, %7, %263 : vector<32x128xi1>, vector<32x128xf32>
    %cst_74 = arith.constant dense<0x7F800000> : vector<32xf32>
    %265 = vector.multi_reduction <minimumf>, %264, %cst_74 [1] : vector<32x128xf32> to vector<32xf32>
    %266 = vector.shape_cast %265 : vector<32xf32> to vector<32x1xf32>
    %267 = vector.broadcast %266 : vector<32x1xf32> to vector<32x128xf32>
    %268 = arith.cmpf oeq, %7, %267 : vector<32x128xf32>
    %269 = arith.extui %268 : vector<32x128xi1> to vector<32x128xi32>
    %270 = arith.sitofp %269 : vector<32x128xi32> to vector<32x128xf32>
    %271 = arith.truncf %270 : vector<32x128xf32> to vector<32x128xbf16>
    %c7_i32 = arith.constant 7 : i32
    %cst_75 = arith.constant dense<0.000000e+00> : vector<32x128xf32>
    %272 = tpu.matmul %271, %0, %cst_75 {dimension_numbers = #tpu.dot_dimension_numbers<[1], [0], [0], [1], [0, 0, 1, 1], [], []>} : vector<32x128xbf16>, vector<128x128xbf16>, vector<32x128xf32> -> vector<32x128xf32>
    %cst_76 = arith.constant dense<0.000000e+00> : vector<32x128xf32>
    %273 = tpu.matmul %253, %1, %cst_76 {dimension_numbers = #tpu.dot_dimension_numbers<[1], [0], [0], [1], [0, 0, 1, 1], [], []>} : vector<32x32xbf16>, vector<32x128xbf16>, vector<32x128xf32> -> vector<32x128xf32>
    %274 = arith.addf %272, %273 : vector<32x128xf32>
    %275 = arith.negf %274 : vector<32x128xf32>
    %276 = math.exp %275 : vector<32x128xf32>
    %cst_77 = arith.constant 1.000000e+00 : f32
    %277 = vector.broadcast %cst_77 : f32 to vector<32x128xf32>
    %278 = arith.addf %277, %276 : vector<32x128xf32>
    %279 = arith.divf %277, %278 : vector<32x128xf32>
    %280 = math.tanh %274 : vector<32x128xf32>
    %281 = vector.extract_strided_slice %279 {offsets = [0, 0], sizes = [32, 32], strides = [1, 1]} : vector<32x128xf32> to vector<32x32xf32>
    %282 = vector.extract_strided_slice %279 {offsets = [0, 32], sizes = [32, 32], strides = [1, 1]} : vector<32x128xf32> to vector<32x32xf32>
    %283 = vector.extract_strided_slice %280 {offsets = [0, 64], sizes = [32, 32], strides = [1, 1]} : vector<32x128xf32> to vector<32x32xf32>
    %284 = vector.extract_strided_slice %279 {offsets = [0, 96], sizes = [32, 32], strides = [1, 1]} : vector<32x128xf32> to vector<32x32xf32>
    %285 = arith.mulf %282, %250 : vector<32x32xf32>
    %286 = arith.mulf %281, %283 : vector<32x32xf32>
    %287 = arith.addf %285, %286 : vector<32x32xf32>
    %288 = math.tanh %287 : vector<32x32xf32>
    %289 = arith.mulf %284, %288 : vector<32x32xf32>
    %290 = arith.truncf %289 : vector<32x32xf32> to vector<32x32xbf16>
    %cst_78 = arith.constant dense<0.000000e+00> : vector<32x128xf32>
    %291 = tpu.matmul %290, %2, %cst_78 {dimension_numbers = #tpu.dot_dimension_numbers<[1], [0], [0], [1], [0, 0, 1, 1], [], []>} : vector<32x32xbf16>, vector<32x128xbf16>, vector<32x128xf32> -> vector<32x128xf32>
    %292 = arith.addf %291, %5 : vector<32x128xf32>
    %293 = vector.shape_cast %292 : vector<32x128xf32> to vector<1x32x128xf32>
    %294 = arith.index_cast %c7_i32 : i32 to index
    %c0_79 = arith.constant 0 : index
    %c0_80 = arith.constant 0 : index
    %295 = vector.load %arg8[%294, %c0_79, %c0_80] : memref<8x32x128xf32, #tpu.memory_space<vmem>>, vector<1x32x128xf32>
    tpu.vector_store %arg8[%294, %c0_79, %c0_80], %293 {strides = array<i32>} : memref<8x32x128xf32, #tpu.memory_space<vmem>>, vector<1x32x128xf32>,
    %cst_81 = arith.constant dense<0xFF800000> : vector<32xf32>
    %296 = vector.multi_reduction <maximumf>, %292, %cst_81 [1] : vector<32x128xf32> to vector<32xf32>
    %297 = vector.shape_cast %296 : vector<32xf32> to vector<32x1xf32>
    %298 = vector.broadcast %297 : vector<32x1xf32> to vector<32x128xf32>
    %299 = arith.cmpf oeq, %292, %298 : vector<32x128xf32>
    %cst_82 = arith.constant 1.280000e+02 : f32
    %300 = vector.broadcast %cst_82 : f32 to vector<32x128xf32>
    %301 = arith.select %299, %7, %300 : vector<32x128xi1>, vector<32x128xf32>
    %cst_83 = arith.constant dense<0x7F800000> : vector<32xf32>
    %302 = vector.multi_reduction <minimumf>, %301, %cst_83 [1] : vector<32x128xf32> to vector<32xf32>
    %303 = vector.shape_cast %302 : vector<32xf32> to vector<32x1xf32>
    %304 = vector.broadcast %303 : vector<32x1xf32> to vector<32x128xf32>
    %305 = arith.cmpf oeq, %7, %304 : vector<32x128xf32>
    %306 = arith.extui %305 : vector<32x128xi1> to vector<32x128xi32>
    %307 = arith.sitofp %306 : vector<32x128xi32> to vector<32x128xf32>
    %308 = arith.truncf %307 : vector<32x128xf32> to vector<32x128xbf16>
    %c8_i32 = arith.constant 8 : i32
    %c0_84 = arith.constant 0 : index
    %c0_85 = arith.constant 0 : index
    %309 = vector.load %arg9[%c0_84, %c0_85] : memref<32x32xf32, #tpu.memory_space<vmem>>, vector<32x32xf32>
    tpu.vector_store %arg9[%c0_84, %c0_85], %289 {strides = array<i32>} : memref<32x32xf32, #tpu.memory_space<vmem>>, vector<32x32xf32>,
    %c0_86 = arith.constant 0 : index
    %c0_87 = arith.constant 0 : index
    %310 = vector.load %arg10[%c0_86, %c0_87] : memref<32x32xf32, #tpu.memory_space<vmem>>, vector<32x32xf32>
    tpu.vector_store %arg10[%c0_86, %c0_87], %287 {strides = array<i32>} : memref<32x32xf32, #tpu.memory_space<vmem>>, vector<32x32xf32>,
    return
  }
  func.func @transform_0(%arg0: i32) -> (i32, i32) {
    %c0_i32 = arith.constant 0 : i32
    %c0_i32_0 = arith.constant 0 : i32
    return %arg0, %c0_i32 : i32, i32
  }
  func.func @transform_1(%arg0: i32) -> (i32, i32) {
    %c0_i32 = arith.constant 0 : i32
    %c0_i32_0 = arith.constant 0 : i32
    return %arg0, %c0_i32 : i32, i32
  }
  func.func @transform_2(%arg0: i32) -> (i32, i32) {
    %c0_i32 = arith.constant 0 : i32
    %c0_i32_0 = arith.constant 0 : i32
    return %arg0, %c0_i32 : i32, i32
  }
  func.func @transform_3(%arg0: i32) -> (i32, i32) {
    %c0_i32 = arith.constant 0 : i32
    %c0_i32_0 = arith.constant 0 : i32
    %c0_i32_1 = arith.constant 0 : i32
    return %c0_i32, %c0_i32_0 : i32, i32
  }
  func.func @transform_4(%arg0: i32) -> (i32, i32) {
    %c0_i32 = arith.constant 0 : i32
    %c0_i32_0 = arith.constant 0 : i32
    %c0_i32_1 = arith.constant 0 : i32
    return %c0_i32, %c0_i32_0 : i32, i32
  }
  func.func @transform_5(%arg0: i32) -> (i32, i32) {
    %c0_i32 = arith.constant 0 : i32
    %c0_i32_0 = arith.constant 0 : i32
    %c0_i32_1 = arith.constant 0 : i32
    return %c0_i32, %c0_i32_0 : i32, i32
  }
  func.func @transform_6(%arg0: i32) -> (i32, i32) {
    %c0_i32 = arith.constant 0 : i32
    %c0_i32_0 = arith.constant 0 : i32
    %c0_i32_1 = arith.constant 0 : i32
    return %c0_i32, %c0_i32_0 : i32, i32
  }
  func.func @transform_7(%arg0: i32) -> (i32, i32, i32) {
    %c0_i32 = arith.constant 0 : i32
    %c0_i32_0 = arith.constant 0 : i32
    %c0_i32_1 = arith.constant 0 : i32
    return %c0_i32, %arg0, %c0_i32_0 : i32, i32, i32
  }
  func.func @transform_8(%arg0: i32) -> (i32, i32) {
    %c0_i32 = arith.constant 0 : i32
    %c0_i32_0 = arith.constant 0 : i32
    return %arg0, %c0_i32 : i32, i32
  }
  func.func @transform_9(%arg0: i32) -> (i32, i32) {
    %c0_i32 = arith.constant 0 : i32
    %c0_i32_0 = arith.constant 0 : i32
    return %arg0, %c0_i32 : i32, i32
  }
}

</mosaic_0001>

<llo_original>
// kernel: autocope_rollout.1
$region0: #{autocope_rollout.1}
  #allocation0 [shape = 'u32[]', space=smem, size = 0x4, offset = 0x4, fixed_abs, tag = 'smem constant byte address 0x4 - core index']
  #allocation1 [shape = 'u32[144,128]{1,0:T(1,128)}', space=vmem, size = 0x12000, scoped, tag = 'internal scratch']
  #allocation4 [shape = 's32[]', space=sflag, size = 0x4, offset = 0, fixed_abs, tag = 'sflag constant byte address 0x0 - dummy sync flag']
  %s0 = inlined_call_operand.vmem [shape: f32[64,128], index: 0, kind: input, shape index: {}]
  %s1 = inlined_call_operand.vmem [shape: f32[64,32], index: 1, kind: input, shape index: {}]
  %s2 = inlined_call_operand.vmem [shape: f32[64,32], index: 2, kind: input, shape index: {}]
  %s3 = inlined_call_operand.vmem [shape: bf16[128,128], index: 3, kind: input, shape index: {}]
  %s4 = inlined_call_operand.vmem [shape: bf16[32,128], index: 4, kind: input, shape index: {}]
  %s5 = inlined_call_operand.vmem [shape: bf16[32,128], index: 5, kind: input, shape index: {}]
  %s6 = inlined_call_operand.vmem [shape: f32[1,128], index: 6, kind: input, shape index: {}]
  %s7 = inlined_call_operand.hbm [shape: f32[8,64,128], index: 7, kind: output, shape index: {0}]
  %s8 = inlined_call_operand.vmem [shape: f32[64,32], index: 8, kind: output, shape index: {1}]
  %s9 = inlined_call_operand.vmem [shape: f32[64,32], index: 9, kind: output, shape index: {2}]
  %10 = xla_tuple %s7, %s8, %s9
  %s11 = sld [smem:[#allocation0]]
  $region77: #{autocope_rollout.1} parent=0
    _
  %s13 = ssub.s32 1, %s11
  %s14 = scalar_select 0, %s13, %s11
  $region1: #{autocope_rollout.1} parent=0
    #allocation2 [shape = 'u8[262144]{0}', space=vmem, size = 0x40000, scoped, tag = 'output window, operand 0']
    #allocation3 [shape = 's32[2]{0}', space=sflag, size = 0x8, scoped, tag = 'scoped memory for autocope_rollout.1']
    %15 = vsyncpa [#allocation3], 0
    %s16 = scalar_lea.sflag [#allocation3], 1
    %17 = vsyncpa %s16, 0
    loop: start=0, step=1, limit=4
    $region2: #{autocope_rollout.1} parent=1 // loop_pre_header
      _
    $region3: #{autocope_rollout.1} parent=1 // loop_header
      %s19 = sphi 0, %s23
      %p20 = scmp.ge.s32.totalorder %s19, 4
      %s29 = sphi 0, %s31
      %s32 = sphi 0, %s29
      %s33 = sphi 0, %s32
      %s49 = sphi 0, %s33
      %s55 = sphi 0, %s57
      %s58 = sphi 0, %s55
      %s59 = sphi 0, %s58
      %s75 = sphi 0, %s59
      %s81 = sphi 0, %s83
      %s84 = sphi 0, %s81
      %s85 = sphi 0, %s84
      %s101 = sphi 0, %s85
      %s105 = sphi 0, %s105
      %s107 = sphi 0, %s105
      %s108 = sphi 0, %s107
      %s122 = sphi 0, %s108
      %s126 = sphi 0, %s126
      %s128 = sphi 0, %s126
      %s129 = sphi 0, %s128
      %s143 = sphi 0, %s129
      %s147 = sphi 0, %s147
      %s149 = sphi 0, %s147
      %s150 = sphi 0, %s149
      %s164 = sphi 0, %s150
      %s168 = sphi 0, %s168
      %s170 = sphi 0, %s168
      %s171 = sphi 0, %s170
      %s185 = sphi 0, %s171
      %s191 = sphi 0, %s193
      %s194 = sphi 0, %s191
      %s195 = sphi 0, %s194
      %s211 = sphi 0, %s195
      %s217 = sphi 0, %s219
      %s220 = sphi 0, %s217
      %s221 = sphi 0, %s220
      %s237 = sphi 0, %s221
      %s243 = sphi 0, %s245
      %s246 = sphi 0, %s243
      %s247 = sphi 0, %s246
      %s263 = sphi 0, %s247
    $region4: #{autocope_rollout.1} parent=1 // loop_header_branch
      %22 = sbr.rel (%p20) target = $region8
    $region5: #{autocope_rollout.1} parent=1 // loop_body
      %s24 = ssub.s32 %s19, 1
      %s25 = ssub.s32 %s19, 2
      %s26 = sadd.s32 %s19, 1
      %s27 = ssub.s32 %s19, %s26
      %p28 = scmp.eq.s32.totalorder %s27, 0
      %s30 = sadd.s32 %s29, 1
      %s31 = scalar_select %p28, %s29, %s30
      %p34 = pneg %p28
      %p35 = scmp.eq.s32.totalorder %s19, 1
      %p36 = por %p34, %p35
      %p37 = scmp.ne.s32.totalorder %s29, %s32
      %p38 = scmp.eq.s32.totalorder %s19, 0
      %p39 = por %p37, %p38
      %p40 = scmp.ne.s32.totalorder %s29, %s32
      %p41 = scmp.eq.s32.totalorder %s24, 1
      %p42 = por %p40, %p41
      %p43 = scmp.ne.s32.totalorder %s32, %s33
      %p44 = scmp.eq.s32.totalorder %s24, 0
      %p45 = por %p43, %p44
      %p46 = scmp.ne.s32.totalorder %s32, %s33
      %p47 = scmp.eq.s32.totalorder %s25, 1
      %p48 = por %p46, %p47
      %p50 = scmp.ne.s32.totalorder %s33, %s49
      %p51 = scmp.eq.s32.totalorder %s25, 0
      %p52 = por %p50, %p51
      %s53 = ssub.s32 %s19, %s26
      %p54 = scmp.eq.s32.totalorder %s53, 0
      %s56 = sadd.s32 %s55, 1
      %s57 = scalar_select %p54, %s55, %s56
      %p60 = pneg %p54
      %p61 = scmp.eq.s32.totalorder %s19, 1
      %p62 = por %p60, %p61
      %p63 = scmp.ne.s32.totalorder %s55, %s58
      %p64 = scmp.eq.s32.totalorder %s19, 0
      %p65 = por %p63, %p64
      %p66 = scmp.ne.s32.totalorder %s55, %s58
      %p67 = scmp.eq.s32.totalorder %s24, 1
      %p68 = por %p66, %p67
      %p69 = scmp.ne.s32.totalorder %s58, %s59
      %p70 = scmp.eq.s32.totalorder %s24, 0
      %p71 = por %p69, %p70
      %p72 = scmp.ne.s32.totalorder %s58, %s59
      %p73 = scmp.eq.s32.totalorder %s25, 1
      %p74 = por %p72, %p73
      %p76 = scmp.ne.s32.totalorder %s59, %s75
      %p77 = scmp.eq.s32.totalorder %s25, 0
      %p78 = por %p76, %p77
      %s79 = ssub.s32 %s19, %s26
      %p80 = scmp.eq.s32.totalorder %s79, 0
      %s82 = sadd.s32 %s81, 1
      %s83 = scalar_select %p80, %s81, %s82
      %p86 = pneg %p80
      %p87 = scmp.eq.s32.totalorder %s19, 1
      %p88 = por %p86, %p87
      %p89 = scmp.ne.s32.totalorder %s81, %s84
      %p90 = scmp.eq.s32.totalorder %s19, 0
      %p91 = por %p89, %p90
      %p92 = scmp.ne.s32.totalorder %s81, %s84
      %p93 = scmp.eq.s32.totalorder %s24, 1
      %p94 = por %p92, %p93
      %p95 = scmp.ne.s32.totalorder %s84, %s85
      %p96 = scmp.eq.s32.totalorder %s24, 0
      %p97 = por %p95, %p96
      %p98 = scmp.ne.s32.totalorder %s84, %s85
      %p99 = scmp.eq.s32.totalorder %s25, 1
      %p100 = por %p98, %p99
      %p102 = scmp.ne.s32.totalorder %s85, %s101
      %p103 = scmp.eq.s32.totalorder %s25, 0
      %p104 = por %p102, %p103
      %s106 = sadd.s32 %s105, 1
      %p109 = scmp.eq.s32.totalorder %s19, 1
      %p110 = scmp.ne.s32.totalorder %s105, %s107
      %p111 = scmp.eq.s32.totalorder %s19, 0
      %p112 = por %p110, %p111
      %p113 = scmp.ne.s32.totalorder %s105, %s107
      %p114 = scmp.eq.s32.totalorder %s24, 1
      %p115 = por %p113, %p114
      %p116 = scmp.ne.s32.totalorder %s107, %s108
      %p117 = scmp.eq.s32.totalorder %s24, 0
      %p118 = por %p116, %p117
      %p119 = scmp.ne.s32.totalorder %s107, %s108
      %p120 = scmp.eq.s32.totalorder %s25, 1
      %p121 = por %p119, %p120
      %p123 = scmp.ne.s32.totalorder %s108, %s122
      %p124 = scmp.eq.s32.totalorder %s25, 0
      %p125 = por %p123, %p124
      %s127 = sadd.s32 %s126, 1
      %p130 = scmp.eq.s32.totalorder %s19, 1
      %p131 = scmp.ne.s32.totalorder %s126, %s128
      %p132 = scmp.eq.s32.totalorder %s19, 0
      %p133 = por %p131, %p132
      %p134 = scmp.ne.s32.totalorder %s126, %s128
      %p135 = scmp.eq.s32.totalorder %s24, 1
      %p136 = por %p134, %p135
      %p137 = scmp.ne.s32.totalorder %s128, %s129
      %p138 = scmp.eq.s32.totalorder %s24, 0
      %p139 = por %p137, %p138
      %p140 = scmp.ne.s32.totalorder %s128, %s129
      %p141 = scmp.eq.s32.totalorder %s25, 1
      %p142 = por %p140, %p141
      %p144 = scmp.ne.s32.totalorder %s129, %s143
      %p145 = scmp.eq.s32.totalorder %s25, 0
      %p146 = por %p144, %p145
      %s148 = sadd.s32 %s147, 1
      %p151 = scmp.eq.s32.totalorder %s19, 1
      %p152 = scmp.ne.s32.totalorder %s147, %s149
      %p153 = scmp.eq.s32.totalorder %s19, 0
      %p154 = por %p152, %p153
      %p155 = scmp.ne.s32.totalorder %s147, %s149
      %p156 = scmp.eq.s32.totalorder %s24, 1
      %p157 = por %p155, %p156
      %p158 = scmp.ne.s32.totalorder %s149, %s150
      %p159 = scmp.eq.s32.totalorder %s24, 0
      %p160 = por %p158, %p159
      %p161 = scmp.ne.s32.totalorder %s149, %s150
      %p162 = scmp.eq.s32.totalorder %s25, 1
      %p163 = por %p161, %p162
      %p165 = scmp.ne.s32.totalorder %s150, %s164
      %p166 = scmp.eq.s32.totalorder %s25, 0
      %p167 = por %p165, %p166
      %s169 = sadd.s32 %s168, 1
      %p172 = scmp.eq.s32.totalorder %s19, 1
      %p173 = scmp.ne.s32.totalorder %s168, %s170
      %p174 = scmp.eq.s32.totalorder %s19, 0
      %p175 = por %p173, %p174
      %p176 = scmp.ne.s32.totalorder %s168, %s170
      %p177 = scmp.eq.s32.totalorder %s24, 1
      %p178 = por %p176, %p177
      %p179 = scmp.ne.s32.totalorder %s170, %s171
      %p180 = scmp.eq.s32.totalorder %s24, 0
      %p181 = por %p179, %p180
      %p182 = scmp.ne.s32.totalorder %s170, %s171
      %p183 = scmp.eq.s32.totalorder %s25, 1
      %p184 = por %p182, %p183
      %p186 = scmp.ne.s32.totalorder %s171, %s185
      %p187 = scmp.eq.s32.totalorder %s25, 0
      %p188 = por %p186, %p187
      %s189 = ssub.s32 %s19, %s26
      %p190 = scmp.eq.s32.totalorder %s189, 0
      %s192 = sadd.s32 %s191, 1
      %s193 = scalar_select %p190, %s191, %s192
      %p196 = pneg %p190
      %p197 = scmp.eq.s32.totalorder %s19, 1
      %p198 = por %p196, %p197
      %p199 = scmp.ne.s32.totalorder %s191, %s194
      %p200 = scmp.eq.s32.totalorder %s19, 0
      %p201 = por %p199, %p200
      %p202 = scmp.ne.s32.totalorder %s191, %s194
      %p203 = scmp.eq.s32.totalorder %s24, 1
      %p204 = por %p202, %p203
      %p205 = scmp.ne.s32.totalorder %s194, %s195
      %p206 = scmp.eq.s32.totalorder %s24, 0
      %p207 = por %p205, %p206
      %p208 = scmp.ne.s32.totalorder %s194, %s195
      %p209 = scmp.eq.s32.totalorder %s25, 1
      %p210 = por %p208, %p209
      %p212 = scmp.ne.s32.totalorder %s195, %s211
      %p213 = scmp.eq.s32.totalorder %s25, 0
      %p214 = por %p212, %p213
      %s215 = ssub.s32 %s19, %s26
      %p216 = scmp.eq.s32.totalorder %s215, 0
      %s218 = sadd.s32 %s217, 1
      %s219 = scalar_select %p216, %s217, %s218
      %p222 = pneg %p216
      %p223 = scmp.eq.s32.totalorder %s19, 1
      %p224 = por %p222, %p223
      %p225 = scmp.ne.s32.totalorder %s217, %s220
      %p226 = scmp.eq.s32.totalorder %s19, 0
      %p227 = por %p225, %p226
      %p228 = scmp.ne.s32.totalorder %s217, %s220
      %p229 = scmp.eq.s32.totalorder %s24, 1
      %p230 = por %p228, %p229
      %p231 = scmp.ne.s32.totalorder %s220, %s221
      %p232 = scmp.eq.s32.totalorder %s24, 0
      %p233 = por %p231, %p232
      %p234 = scmp.ne.s32.totalorder %s220, %s221
      %p235 = scmp.eq.s32.totalorder %s25, 1
      %p236 = por %p234, %p235
      %p238 = scmp.ne.s32.totalorder %s221, %s237
      %p239 = scmp.eq.s32.totalorder %s25, 0
      %p240 = por %p238, %p239
      %s241 = ssub.s32 %s19, %s26
      %p242 = scmp.eq.s32.totalorder %s241, 0
      %s244 = sadd.s32 %s243, 1
      %s245 = scalar_select %p242, %s243, %s244
      %p248 = pneg %p242
      %p249 = scmp.eq.s32.totalorder %s19, 1
      %p250 = por %p248, %p249
      %p251 = scmp.ne.s32.totalorder %s243, %s246
      %p252 = scmp.eq.s32.totalorder %s19, 0
      %p253 = por %p251, %p252
      %p254 = scmp.ne.s32.totalorder %s243, %s246
      %p255 = scmp.eq.s32.totalorder %s24, 1
      %p256 = por %p254, %p255
      %p257 = scmp.ne.s32.totalorder %s246, %s247
      %p258 = scmp.eq.s32.totalorder %s24, 0
      %p259 = por %p257, %p258
      %p260 = scmp.ne.s32.totalorder %s246, %s247
      %p261 = scmp.eq.s32.totalorder %s25, 1
      %p262 = por %p260, %p261
      %p264 = scmp.ne.s32.totalorder %s247, %s263
      %p265 = scmp.eq.s32.totalorder %s25, 0
      %p266 = por %p264, %p265
      %p267 = scmp.le.s32.totalorder 1, %s19
      %p268 = scmp.lt.s32.totalorder %s19, 3
      %p269 = pnand %p267, %p268
      %p270 = pneg %p269
      // Predicated region
      $region9: #{autocope_rollout.1} parent=5 // pred_check
        _
      $region10: #{autocope_rollout.1} parent=5 // pred_check_branch
        %272 = sbr.rel (%p269) target = $region12
      $region11: #{autocope_rollout.1} parent=5 // pred_region
        %s273 = ssub.s32 %s19, 1
        // Predicated region
        $region13: #{autocope_rollout.1} parent=11 // pred_check
          %p274 = pneg %p118
        $region14: #{autocope_rollout.1} parent=11 // pred_check_branch
          %276 = sbr.rel (%p274) target = $region16
        $region15: #{autocope_rollout.1} parent=11 // pred_region
          _
        $region16: #{autocope_rollout.1} parent=11 // pred_fallthru
          _
        // Predicated region
        $region17: #{autocope_rollout.1} parent=11 // pred_check
          %p277 = pneg %p139
        $region18: #{autocope_rollout.1} parent=11 // pred_check_branch
          %279 = sbr.rel (%p277) target = $region20
        $region19: #{autocope_rollout.1} parent=11 // pred_region
          _
        $region20: #{autocope_rollout.1} parent=11 // pred_fallthru
          _
        // Predicated region
        $region21: #{autocope_rollout.1} parent=11 // pred_check
          %p280 = pneg %p160
        $region22: #{autocope_rollout.1} parent=11 // pred_check_branch
          %282 = sbr.rel (%p280) target = $region24
        $region23: #{autocope_rollout.1} parent=11 // pred_region
          _
        $region24: #{autocope_rollout.1} parent=11 // pred_fallthru
          _
        // Predicated region
        $region25: #{autocope_rollout.1} parent=11 // pred_check
          %p283 = pneg %p181
        $region26: #{autocope_rollout.1} parent=11 // pred_check_branch
          %285 = sbr.rel (%p283) target = $region28
        $region27: #{autocope_rollout.1} parent=11 // pred_region
          _
        $region28: #{autocope_rollout.1} parent=11 // pred_fallthru
          _
      $region12: #{autocope_rollout.1} parent=5 // pred_fallthru
        _
      %p286 = scmp.lt.s32.totalorder %s19, 2
      // Predicated region
      $region29: #{autocope_rollout.1} parent=5 // pred_check
        %p287 = pneg %p286
      $region30: #{autocope_rollout.1} parent=5 // pred_check_branch
        %289 = sbr.rel (%p287) target = $region32
      $region31: #{autocope_rollout.1} parent=5 // pred_region
        // Predicated region
        $region33: #{autocope_rollout.1} parent=31 // pred_check
          %p290 = pneg %p39
        $region34: #{autocope_rollout.1} parent=31 // pred_check_branch
          %292 = sbr.rel (%p290) target = $region36
        $region35: #{autocope_rollout.1} parent=31 // pred_region
          %s293 = smul.u32 4, %s19
          %p294 = scmp.lt.s32.totalorder %s293, 7
          %s295 = scalar_select %p294, %s293, 7
          %s296 = smul.addr %s295, 8
          %s297 = scalar_lea.vmem %s0, %s296
          %s298 = smul.u32 4, %s19
        $region36: #{autocope_rollout.1} parent=31 // pred_fallthru
          _
        // Predicated region
        $region37: #{autocope_rollout.1} parent=31 // pred_check
          %p299 = pneg %p65
        $region38: #{autocope_rollout.1} parent=31 // pred_check_branch
          %301 = sbr.rel (%p299) target = $region40
        $region39: #{autocope_rollout.1} parent=31 // pred_region
          %s302 = smul.u32 4, %s19
          %p303 = scmp.lt.s32.totalorder %s302, 7
          %s304 = scalar_select %p303, %s302, 7
          %s305 = smul.addr %s304, 8
          %s306 = scalar_lea.vmem %s1, %s305
          %s307 = smul.u32 4, %s19
        $region40: #{autocope_rollout.1} parent=31 // pred_fallthru
          _
        // Predicated region
        $region41: #{autocope_rollout.1} parent=31 // pred_check
          %p308 = pneg %p91
        $region42: #{autocope_rollout.1} parent=31 // pred_check_branch
          %310 = sbr.rel (%p308) target = $region44
        $region43: #{autocope_rollout.1} parent=31 // pred_region
          %s311 = smul.u32 4, %s19
          %p312 = scmp.lt.s32.totalorder %s311, 7
          %s313 = scalar_select %p312, %s311, 7
          %s314 = smul.addr %s313, 8
          %s315 = scalar_lea.vmem %s2, %s314
          %s316 = smul.u32 4, %s19
        $region44: #{autocope_rollout.1} parent=31 // pred_fallthru
          _
      $region32: #{autocope_rollout.1} parent=5 // pred_fallthru
        _
      %p317 = scmp.le.s32.totalorder 1, %s19
      %p318 = scmp.lt.s32.totalorder %s19, 3
      %p319 = pnand %p317, %p318
      %p320 = pneg %p319
      // Predicated region
      $region45: #{autocope_rollout.1} parent=5 // pred_check
        _
      $region46: #{autocope_rollout.1} parent=5 // pred_check_branch
        %322 = sbr.rel (%p319) target = $region48
      $region47: #{autocope_rollout.1} parent=5 // pred_region
        %s323 = ssub.s32 %s19, 1
        %s324 = smul.u32 4, %s24
        %p325 = scmp.lt.s32.totalorder %s324, 7
        %s326 = scalar_select %p325, %s324, 7
        %s327 = smul.addr %s326, 8
        %s328 = scalar_lea.vmem %s0, %s327
        %p329 = pneg %p45
        %p330 = pneg %p42
        %s331 = smul.u32 4, %s24
        %p332 = scmp.lt.s32.totalorder %s331, 7
        %s333 = scalar_select %p332, %s331, 7
        %s334 = smul.addr %s333, 8
        %s335 = scalar_lea.vmem %s1, %s334
        %p336 = pneg %p71
        %p337 = pneg %p68
        %s338 = smul.u32 4, %s24
        %p339 = scmp.lt.s32.totalorder %s338, 7
        %s340 = scalar_select %p339, %s338, 7
        %s341 = smul.addr %s340, 8
        %s342 = scalar_lea.vmem %s2, %s341
        %p343 = pneg %p97
        %p344 = pneg %p94
        %p345 = pneg %p118
        %p346 = pneg %p115
        %p347 = pneg %p139
        %p348 = pneg %p136
        %p349 = pneg %p160
        %p350 = pneg %p157
        %p351 = pneg %p181
        %p352 = pneg %p178
        %p353 = pneg %p207
        %p354 = pneg %p204
        %s355 = sand.u32 %s194, 1
        %s356 = scalar_lea.sflag [#allocation3], %s355
        %s357 = sand.u32 %s194, 1
        %s358 = smul.addr %s357, 256
        %s359 = scalar_lea.vmem [#allocation2], %s358
        %p360 = pneg %p233
        %p361 = pneg %p230
        %s362 = smul.u32 4, %s24
        %p363 = scmp.lt.s32.totalorder %s362, 7
        %s364 = scalar_select %p363, %s362, 7
        %s365 = smul.addr %s364, 8
        %s366 = scalar_lea.vmem %s8, %s365
        %p367 = pneg %p259
        %p368 = pneg %p256
        %s369 = smul.u32 4, %s24
        %p370 = scmp.lt.s32.totalorder %s369, 7
        %s371 = scalar_select %p370, %s369, 7
        %s372 = smul.addr %s371, 8
        %s373 = scalar_lea.vmem %s9, %s372
        %s374 = smul.u32 4, %s24
        %p375 = scmp.lt.s32.totalorder %s374, 7
        %s376 = scalar_select %p375, %s374, 7
        %s377 = smul.addr %s376, 8
        %s378 = scalar_lea.vmem %s0, %s377
        %s379 = smul.u32 4, %s24
        %s380 = smul.u32 4, %s24
        %p381 = scmp.lt.s32.totalorder %s380, 7
        %s382 = scalar_select %p381, %s380, 7
        %s383 = smul.addr %s382, 8
        %s384 = scalar_lea.vmem %s1, %s383
        %s385 = smul.u32 4, %s24
        %s386 = smul.u32 4, %s24
        %p387 = scmp.lt.s32.totalorder %s386, 7
        %s388 = scalar_select %p387, %s386, 7
        %s389 = smul.addr %s388, 8
        %s390 = scalar_lea.vmem %s2, %s389
        %s391 = smul.u32 4, %s24
        %s392 = smul.u32 4, %s24
        %s393 = smul.u32 4, %s24
        %p394 = scmp.lt.s32.totalorder %s393, 7
        %s395 = scalar_select %p394, %s393, 7
        %s396 = smul.addr %s395, 8
        %s397 = scalar_lea.vmem %s8, %s396
        %s398 = smul.u32 4, %s24
        %s399 = smul.u32 4, %s24
        %p400 = scmp.lt.s32.totalorder %s399, 7
        %s401 = scalar_select %p400, %s399, 7
        %s402 = smul.addr %s401, 8
        %s403 = scalar_lea.vmem %s9, %s402
        %s404 = smul.u32 4, %s24
        %v406 = vld [vmem:[%s3] sm:$0xf]
        %v407 = vld [vmem:[%s3 + $0x4] sm:$0xf]
        %v408 = vld [vmem:[%s3 + $0x8] sm:$0xf]
        %v409 = vld [vmem:[%s3 + $0xc] sm:$0xf]
        %v410 = vld [vmem:[%s3 + $0x10] sm:$0xf]
        %v411 = vld [vmem:[%s3 + $0x14] sm:$0xf]
        %v412 = vld [vmem:[%s3 + $0x18] sm:$0xf]
        %v413 = vld [vmem:[%s3 + $0x1c] sm:$0xf]
        %v414 = vld [vmem:[%s3 + $0x20] sm:$0xf]
        %v415 = vld [vmem:[%s3 + $0x24] sm:$0xf]
        %v416 = vld [vmem:[%s3 + $0x28] sm:$0xf]
        %v417 = vld [vmem:[%s3 + $0x2c] sm:$0xf]
        %v418 = vld [vmem:[%s3 + $0x30] sm:$0xf]
        %v419 = vld [vmem:[%s3 + $0x34] sm:$0xf]
        %v420 = vld [vmem:[%s3 + $0x38] sm:$0xf]
        %v421 = vld [vmem:[%s3 + $0x3c] sm:$0xf]
        %v422 = vld [vmem:[%s4] sm:$0xf]
        %v423 = vld [vmem:[%s4 + $0x4] sm:$0xf]
        %v424 = vld [vmem:[%s4 + $0x8] sm:$0xf]
        %v425 = vld [vmem:[%s4 + $0xc] sm:$0xf]
        %v426 = vld [vmem:[%s5] sm:$0xf]
        %v427 = vld [vmem:[%s5 + $0x4] sm:$0xf]
        %v428 = vld [vmem:[%s5 + $0x8] sm:$0xf]
        %v429 = vld [vmem:[%s5 + $0xc] sm:$0xf]
        %v430 = vld [vmem:[%s6] sm:$0x1]
        %v432 = vlaneseq
        %v433 = vshrl.u32 %v432, 7
        %v434 = vsub.s32 0, %v433
        %v435 = vrot.slane %v430, %v434
        %v437 = vlaneseq
        %v438 = vand.u32 %v437, 127
        %v439 = vcvt.s32.f32 %v438
        %v440 = vld [vmem:[%s378] sm:$0xff]
        %v441 = vld [vmem:[%s378 + $0x8] sm:$0xff]
        %v442 = vld [vmem:[%s378 + $0x10] sm:$0xff]
        %v443 = vld [vmem:[%s378 + $0x18] sm:$0xff]
        %v444 = vpack.c.bf16 %v441, %v440
        %v445 = vpack.c.bf16 %v443, %v442
        %v446 = vld [vmem:[%s384] sm:$0xff]
        %v447 = vld [vmem:[%s384 + $0x8] sm:$0xff]
        %v448 = vld [vmem:[%s384 + $0x10] sm:$0xff]
        %v449 = vld [vmem:[%s384 + $0x18] sm:$0xff]
        %v450 = vld [vmem:[%s390] sm:$0xff]
        %v451 = vld [vmem:[%s390 + $0x8] sm:$0xff]
        %v452 = vld [vmem:[%s390 + $0x10] sm:$0xff]
        %v453 = vld [vmem:[%s390 + $0x18] sm:$0xff]
        %v454 = vpack.c.bf16 %v447, %v446
        %v455 = vpack.c.bf16 %v449, %v448
        %v460 = vunpack.c.l.b16 %v422
        %v461 = vunpack.c.l.b16 %v423
        %v462 = vunpack.c.l.b16 %v424
        %v463 = vunpack.c.l.b16 %v425
        %v464 = vpack.c.b16 %v461, %v460
        %v465 = vpack.c.b16 %v463, %v462
        %vm468 = vcmask 261120
        %v470 = vsel %vm468, %v454, 0
        %v473 = vsel %vm468, %v455, 0
        %475 = vmatprep.subr.bf16.mxu0 0
        %476 = vmatpush1.bf16.msra.mxu0 %v464
        %477 = vmatprep.subr.bf16.mxu0 0
        %478 = vmatpush1.bf16.msra.mxu0 %v465
        %479 = vmatprep.subr.bf16.mxu0 0
        %480 = vmatpush1.bf16.msra.mxu0 0
        %481 = vmatprep.subr.bf16.mxu0 0
        %482 = vmatpush1.bf16.msra.mxu0 0
        %483 = vmatprep.subr.bf16.mxu0 0
        %484 = vmatpush1.bf16.msra.mxu0 0
        %485 = vmatprep.subr.bf16.mxu0 0
        %486 = vmatpush1.bf16.msra.mxu0 0
        %487 = vmatprep.subr.bf16.mxu0 0
        %488 = vmatpush1.bf16.msra.mxu0 0
        %489 = vmatprep.subr.bf16.mxu0 0
        %490 = vmatpush1.bf16.msra.mxu0 0
        %491 = vmatprep.subr.bf16.mxu0 0
        %492 = vmatpush1.bf16.msra.mxu0 0
        %493 = vmatprep.subr.bf16.mxu0 0
        %494 = vmatpush1.bf16.msra.mxu0 0
        %495 = vmatprep.subr.bf16.mxu0 0
        %496 = vmatpush1.bf16.msra.mxu0 0
        %497 = vmatprep.subr.bf16.mxu0 0
        %498 = vmatpush1.bf16.msra.mxu0 0
        %499 = vmatprep.subr.bf16.mxu0 0
        %500 = vmatpush1.bf16.msra.mxu0 0
        %501 = vmatprep.subr.bf16.mxu0 0
        %502 = vmatpush1.bf16.msra.mxu0 0
        %503 = vmatprep.subr.bf16.mxu0 0
        %504 = vmatpush1.bf16.msra.mxu0 0
        %505 = vmatprep.subr.bf16.mxu0 0
        %506 = vmatpush1.bf16.msra.mxu0 0
        %507 = vmatprep.mubr.bf16.mxu0 0
        %508 = vmatmul.mubr.bf16.gmra.mrb[0].mxu0 %v470
        %v509 = vpop.f32.mrb[0].mxu0
        %v510 = vadd.f32 0.0, %v509
        %v511 = vpop.f32.mrb[0].mxu0
        %v512 = vpop.f32.mrb[0].mxu0
        %v513 = vadd.f32 0.0, %v512
        %v514 = vpop.f32.mrb[0].mxu0
        %515 = vmatprep.mubr.bf16.mxu0 0
        %516 = vmatmul.mubr.bf16.gmra.mrb[0].mxu0 %v473
        %v517 = vpop.f32.mrb[0].mxu0
        %v518 = vadd.f32 0.0, %v517
        %v519 = vpop.f32.mrb[0].mxu0
        %v520 = vpop.f32.mrb[0].mxu0
        %v521 = vadd.f32 0.0, %v520
        %v522 = vpop.f32.mrb[0].mxu0
        %523 = vdwg.mxu0
        %v540 = vunpack.c.l.b16 %v406
        %v541 = vunpack.c.l.b16 %v407
        %v542 = vunpack.c.l.b16 %v408
        %v543 = vunpack.c.l.b16 %v409
        %v544 = vunpack.c.l.b16 %v410
        %v545 = vunpack.c.l.b16 %v411
        %v546 = vunpack.c.l.b16 %v412
        %v547 = vunpack.c.l.b16 %v413
        %v548 = vunpack.c.l.b16 %v414
        %v549 = vunpack.c.l.b16 %v415
        %v550 = vunpack.c.l.b16 %v416
        %v551 = vunpack.c.l.b16 %v417
        %v552 = vunpack.c.l.b16 %v418
        %v553 = vunpack.c.l.b16 %v419
        %v554 = vunpack.c.l.b16 %v420
        %v555 = vunpack.c.l.b16 %v421
        %v556 = vpack.c.b16 %v541, %v540
        %v557 = vpack.c.b16 %v543, %v542
        %v558 = vpack.c.b16 %v545, %v544
        %v559 = vpack.c.b16 %v547, %v546
        %v560 = vpack.c.b16 %v549, %v548
        %v561 = vpack.c.b16 %v551, %v550
        %v562 = vpack.c.b16 %v553, %v552
        %v563 = vpack.c.b16 %v555, %v554
        %572 = vmatprep.subr.bf16.mxu0 0
        %573 = vmatpush1.bf16.msra.mxu0 %v556
        %574 = vmatprep.subr.bf16.mxu0 0
        %575 = vmatpush1.bf16.msra.mxu0 %v557
        %576 = vmatprep.subr.bf16.mxu0 0
        %577 = vmatpush1.bf16.msra.mxu0 %v558
        %578 = vmatprep.subr.bf16.mxu0 0
        %579 = vmatpush1.bf16.msra.mxu0 %v559
        %580 = vmatprep.subr.bf16.mxu0 0
        %581 = vmatpush1.bf16.msra.mxu0 %v560
        %582 = vmatprep.subr.bf16.mxu0 0
        %583 = vmatpush1.bf16.msra.mxu0 %v561
        %584 = vmatprep.subr.bf16.mxu0 0
        %585 = vmatpush1.bf16.msra.mxu0 %v562
        %586 = vmatprep.subr.bf16.mxu0 0
        %587 = vmatpush1.bf16.msra.mxu0 %v563
        %588 = vmatprep.subr.bf16.mxu0 0
        %589 = vmatpush1.bf16.msra.mxu0 0
        %590 = vmatprep.subr.bf16.mxu0 0
        %591 = vmatpush1.bf16.msra.mxu0 0
        %592 = vmatprep.subr.bf16.mxu0 0
        %593 = vmatpush1.bf16.msra.mxu0 0
        %594 = vmatprep.subr.bf16.mxu0 0
        %595 = vmatpush1.bf16.msra.mxu0 0
        %596 = vmatprep.subr.bf16.mxu0 0
        %597 = vmatpush1.bf16.msra.mxu0 0
        %598 = vmatprep.subr.bf16.mxu0 0
        %599 = vmatpush1.bf16.msra.mxu0 0
        %600 = vmatprep.subr.bf16.mxu0 0
        %601 = vmatpush1.bf16.msra.mxu0 0
        %602 = vmatprep.subr.bf16.mxu0 0
        %603 = vmatpush1.bf16.msra.mxu0 0
        %604 = vmatprep.mubr.bf16.mxu0 0
        %605 = vmatmul.mubr.bf16.gmra.mrb[0].mxu0 %v444
        %v606 = vpop.f32.mrb[0].mxu0
        %v607 = vadd.f32 %v510, %v606
        %v608 = vpop.f32.mrb[0].mxu0
        %v609 = vpop.f32.mrb[0].mxu0
        %v610 = vadd.f32 %v513, %v609
        %v611 = vpop.f32.mrb[0].mxu0
        %612 = vmatprep.mubr.bf16.mxu0 0
        %613 = vmatmul.mubr.bf16.gmra.mrb[0].mxu0 %v445
        %v614 = vpop.f32.mrb[0].mxu0
        %v615 = vadd.f32 %v518, %v614
        %v616 = vpop.f32.mrb[0].mxu0
        %v617 = vpop.f32.mrb[0].mxu0
        %v618 = vadd.f32 %v521, %v617
        %v619 = vpop.f32.mrb[0].mxu0
        %620 = vdwg.mxu0
        %v621 = vxor.u32 %v607, 2147483648
        %v622 = vxor.u32 %v610, 2147483648
        %v623 = vxor.u32 %v615, 2147483648
        %v624 = vxor.u32 %v618, 2147483648
        %v625 = vmul.f32 %v621, 1.442695
        %v626 = vpow.pop %v625
        %v627 = vmul.f32 %v622, 1.442695
        %v628 = vpow.pop %v627
        %v629 = vmul.f32 %v623, 1.442695
        %v630 = vpow.pop %v629
        %v631 = vmul.f32 %v624, 1.442695
        %v632 = vpow.pop %v631
        %v633 = vadd.f32 %v626, 1.0
        %v634 = vadd.f32 %v628, 1.0
        %v635 = vadd.f32 %v630, 1.0
        %v636 = vadd.f32 %v632, 1.0
        %v637 = vrcp.pop %v633
        %v638 = vmul.f32 1.0, %v637
        %v639 = vrcp.pop %v634
        %v640 = vmul.f32 1.0, %v639
        %v641 = vrcp.pop %v635
        %v642 = vmul.f32 1.0, %v641
        %v643 = vrcp.pop %v636
        %v644 = vmul.f32 1.0, %v643
        %v645 = vtanh.pop %v607
        %v646 = vtanh.pop %v610
        %v647 = vtanh.pop %v615
        %v648 = vtanh.pop %v618
        %653 = vrot.lane.b32.xlu0 %v450, 32
        %v654 = vpop.permute.xlu0 %653
        %655 = vrot.lane.b32.xlu0 %v451, 32
        %v656 = vpop.permute.xlu0 %655
        %657 = vrot.lane.b32.xlu0 %v452, 32
        %v658 = vpop.permute.xlu0 %657
        %659 = vrot.lane.b32.xlu0 %v453, 32
        %v660 = vpop.permute.xlu0 %659
        %v665 = vmul.f32 %v638, %v654
        %v666 = vmul.f32 %v640, %v656
        %v667 = vmul.f32 %v642, %v658
        %v668 = vmul.f32 %v644, %v660
        %673 = vrot.lane.b32.xlu0 %v645, 64
        %v674 = vpop.permute.xlu0 %673
        %675 = vrot.lane.b32.xlu0 %v646, 64
        %v676 = vpop.permute.xlu0 %675
        %677 = vrot.lane.b32.xlu0 %v647, 64
        %v678 = vpop.permute.xlu0 %677
        %679 = vrot.lane.b32.xlu0 %v648, 64
        %v680 = vpop.permute.xlu0 %679
        %v685 = vmul.f32 %v638, %v674
        %v686 = vmul.f32 %v640, %v676
        %v687 = vmul.f32 %v642, %v678
        %v688 = vmul.f32 %v644, %v680
        %693 = vrot.lane.b32.xlu0 %v685, 32
        %v694 = vpop.permute.xlu0 %693
        %695 = vrot.lane.b32.xlu0 %v686, 32
        %v696 = vpop.permute.xlu0 %695
        %697 = vrot.lane.b32.xlu0 %v687, 32
        %v698 = vpop.permute.xlu0 %697
        %699 = vrot.lane.b32.xlu0 %v688, 32
        %v700 = vpop.permute.xlu0 %699
        %v705 = vadd.f32 %v665, %v694
        %v706 = vadd.f32 %v666, %v696
        %v707 = vadd.f32 %v667, %v698
        %v708 = vadd.f32 %v668, %v700
        %v709 = vtanh.pop %v705
        %v710 = vtanh.pop %v706
        %v711 = vtanh.pop %v707
        %v712 = vtanh.pop %v708
        %717 = vrot.lane.b32.xlu0 %v709, 64
        %v718 = vpop.permute.xlu0 %717
        %719 = vrot.lane.b32.xlu0 %v710, 64
        %v720 = vpop.permute.xlu0 %719
        %721 = vrot.lane.b32.xlu0 %v711, 64
        %v722 = vpop.permute.xlu0 %721
        %723 = vrot.lane.b32.xlu0 %v712, 64
        %v724 = vpop.permute.xlu0 %723
        %v729 = vmul.f32 %v638, %v718
        %v730 = vmul.f32 %v640, %v720
        %v731 = vmul.f32 %v642, %v722
        %v732 = vmul.f32 %v644, %v724
        %v733 = vpack.c.bf16 %v730, %v729
        %v734 = vpack.c.bf16 %v732, %v731
        %737 = vrot.lane.b32.xlu0 %v733, 32
        %v738 = vpop.permute.xlu0 %737
        %739 = vrot.lane.b32.xlu0 %v734, 32
        %v740 = vpop.permute.xlu0 %739
        %v745 = vunpack.c.l.b16 %v426
        %v746 = vunpack.c.l.b16 %v427
        %v747 = vunpack.c.l.b16 %v428
        %v748 = vunpack.c.l.b16 %v429
        %v749 = vpack.c.b16 %v746, %v745
        %v750 = vpack.c.b16 %v748, %v747
        %v754 = vsel %vm468, %v738, 0
        %v757 = vsel %vm468, %v740, 0
        %759 = vmatprep.subr.bf16.mxu0 0
        %760 = vmatpush1.bf16.msra.mxu0 %v749
        %761 = vmatprep.subr.bf16.mxu0 0
        %762 = vmatpush1.bf16.msra.mxu0 %v750
        %763 = vmatprep.subr.bf16.mxu0 0
        %764 = vmatpush1.bf16.msra.mxu0 0
        %765 = vmatprep.subr.bf16.mxu0 0
        %766 = vmatpush1.bf16.msra.mxu0 0
        %767 = vmatprep.subr.bf16.mxu0 0
        %768 = vmatpush1.bf16.msra.mxu0 0
        %769 = vmatprep.subr.bf16.mxu0 0
        %770 = vmatpush1.bf16.msra.mxu0 0
        %771 = vmatprep.subr.bf16.mxu0 0
        %772 = vmatpush1.bf16.msra.mxu0 0
        %773 = vmatprep.subr.bf16.mxu0 0
        %774 = vmatpush1.bf16.msra.mxu0 0
        %775 = vmatprep.subr.bf16.mxu0 0
        %776 = vmatpush1.bf16.msra.mxu0 0
        %777 = vmatprep.subr.bf16.mxu0 0
        %778 = vmatpush1.bf16.msra.mxu0 0
        %779 = vmatprep.subr.bf16.mxu0 0
        %780 = vmatpush1.bf16.msra.mxu0 0
        %781 = vmatprep.subr.bf16.mxu0 0
        %782 = vmatpush1.bf16.msra.mxu0 0
        %783 = vmatprep.subr.bf16.mxu0 0
        %784 = vmatpush1.bf16.msra.mxu0 0
        %785 = vmatprep.subr.bf16.mxu0 0
        %786 = vmatpush1.bf16.msra.mxu0 0
        %787 = vmatprep.subr.bf16.mxu0 0
        %788 = vmatpush1.bf16.msra.mxu0 0
        %789 = vmatprep.subr.bf16.mxu0 0
        %790 = vmatpush1.bf16.msra.mxu0 0
        %791 = vmatprep.mubr.bf16.mxu0 0
        %792 = vmatmul.mubr.bf16.gmra.mrb[0].mxu0 %v754
        %v793 = vpop.f32.mrb[0].mxu0
        %v794 = vadd.f32 %v435, %v793
        %v795 = vpop.f32.mrb[0].mxu0
        %v796 = vpop.f32.mrb[0].mxu0
        %v797 = vadd.f32 %v435, %v796
        %v798 = vpop.f32.mrb[0].mxu0
        %799 = vmatprep.mubr.bf16.mxu0 0
        %800 = vmatmul.mubr.bf16.gmra.mrb[0].mxu0 %v757
        %v801 = vpop.f32.mrb[0].mxu0
        %v802 = vadd.f32 %v435, %v801
        %v803 = vpop.f32.mrb[0].mxu0
        %v804 = vpop.f32.mrb[0].mxu0
        %v805 = vadd.f32 %v435, %v804
        %v806 = vpop.f32.mrb[0].mxu0
        %807 = vdwg.mxu0
        %808 = vst [vmem:[%s359] sm:$0xff] %v794
        %809 = vst [vmem:[%s359 + $0x8] sm:$0xff] %v797
        %810 = vst [vmem:[%s359 + $0x10] sm:$0xff] %v802
        %811 = vst [vmem:[%s359 + $0x18] sm:$0xff] %v805
        %812 = vmax.xlane.f32.xlu0 %v794
        %v813 = vpop.xlane.xlu0 %812
        %814 = vmax.xlane.f32.xlu0 %v797
        %v815 = vpop.xlane.xlu0 %814
        %816 = vmax.xlane.f32.xlu0 %v802
        %v817 = vpop.xlane.xlu0 %816
        %818 = vmax.xlane.f32.xlu0 %v805
        %v819 = vpop.xlane.xlu0 %818
        %vm820 = vcmp.eq.f32.partialorder %v794, %v813
        %vm821 = vcmp.eq.f32.partialorder %v797, %v815
        %vm822 = vcmp.eq.f32.partialorder %v802, %v817
        %vm823 = vcmp.eq.f32.partialorder %v805, %v819
        %v824 = vsel %vm820, %v439, 128.0
        %v825 = vsel %vm821, %v439, 128.0
        %v826 = vsel %vm822, %v439, 128.0
        %v827 = vsel %vm823, %v439, 128.0
        %828 = vmin.xlane.f32.xlu0 %v824
        %v829 = vpop.xlane.xlu0 %828
        %830 = vmin.xlane.f32.xlu0 %v825
        %v831 = vpop.xlane.xlu0 %830
        %832 = vmin.xlane.f32.xlu0 %v826
        %v833 = vpop.xlane.xlu0 %832
        %834 = vmin.xlane.f32.xlu0 %v827
        %v835 = vpop.xlane.xlu0 %834
        %vm836 = vcmp.eq.f32.partialorder %v439, %v829
        %vm837 = vcmp.eq.f32.partialorder %v439, %v831
        %vm838 = vcmp.eq.f32.partialorder %v439, %v833
        %vm839 = vcmp.eq.f32.partialorder %v439, %v835
        %v840 = vsel %vm836, 1, 0
        %v841 = vsel %vm837, 1, 0
        %v842 = vsel %vm838, 1, 0
        %v843 = vsel %vm839, 1, 0
        %v844 = vcvt.s32.f32 %v840
        %v845 = vcvt.s32.f32 %v841
        %v846 = vcvt.s32.f32 %v842
        %v847 = vcvt.s32.f32 %v843
        %v848 = vpack.c.bf16 %v845, %v844
        %v849 = vpack.c.bf16 %v847, %v846
        %850 = vmatprep.subr.bf16.mxu0 0
        %851 = vmatpush1.bf16.msra.mxu0 %v464
        %852 = vmatprep.subr.bf16.mxu0 0
        %853 = vmatpush1.bf16.msra.mxu0 %v465
        %854 = vmatprep.subr.bf16.mxu0 0
        %855 = vmatpush1.bf16.msra.mxu0 0
        %856 = vmatprep.subr.bf16.mxu0 0
        %857 = vmatpush1.bf16.msra.mxu0 0
        %858 = vmatprep.subr.bf16.mxu0 0
        %859 = vmatpush1.bf16.msra.mxu0 0
        %860 = vmatprep.subr.bf16.mxu0 0
        %861 = vmatpush1.bf16.msra.mxu0 0
        %862 = vmatprep.subr.bf16.mxu0 0
        %863 = vmatpush1.bf16.msra.mxu0 0
        %864 = vmatprep.subr.bf16.mxu0 0
        %865 = vmatpush1.bf16.msra.mxu0 0
        %866 = vmatprep.subr.bf16.mxu0 0
        %867 = vmatpush1.bf16.msra.mxu0 0
        %868 = vmatprep.subr.bf16.mxu0 0
        %869 = vmatpush1.bf16.msra.mxu0 0
        %870 = vmatprep.subr.bf16.mxu0 0
        %871 = vmatpush1.bf16.msra.mxu0 0
        %872 = vmatprep.subr.bf16.mxu0 0
        %873 = vmatpush1.bf16.msra.mxu0 0
        %874 = vmatprep.subr.bf16.mxu0 0
        %875 = vmatpush1.bf16.msra.mxu0 0
        %876 = vmatprep.subr.bf16.mxu0 0
        %877 = vmatpush1.bf16.msra.mxu0 0
        %878 = vmatprep.subr.bf16.mxu0 0
        %879 = vmatpush1.bf16.msra.mxu0 0
        %880 = vmatprep.subr.bf16.mxu0 0
        %881 = vmatpush1.bf16.msra.mxu0 0
        %882 = vmatprep.mubr.bf16.mxu0 0
        %883 = vmatmul.mubr.bf16.gmra.mrb[0].mxu0 %v754
        %v884 = vpop.f32.mrb[0].mxu0
        %v885 = vadd.f32 0.0, %v884
        %v886 = vpop.f32.mrb[0].mxu0
        %v887 = vpop.f32.mrb[0].mxu0
        %v888 = vadd.f32 0.0, %v887
        %v889 = vpop.f32.mrb[0].mxu0
        %890 = vmatprep.mubr.bf16.mxu0 0
        %891 = vmatmul.mubr.bf16.gmra.mrb[0].mxu0 %v757
        %v892 = vpop.f32.mrb[0].mxu0
        %v893 = vadd.f32 0.0, %v892
        %v894 = vpop.f32.mrb[0].mxu0
        %v895 = vpop.f32.mrb[0].mxu0
        %v896 = vadd.f32 0.0, %v895
        %v897 = vpop.f32.mrb[0].mxu0
        %898 = vdwg.mxu0
        %899 = vmatprep.subr.bf16.mxu0 0
        %900 = vmatpush1.bf16.msra.mxu0 %v556
        %901 = vmatprep.subr.bf16.mxu0 0
        %902 = vmatpush1.bf16.msra.mxu0 %v557
        %903 = vmatprep.subr.bf16.mxu0 0
        %904 = vmatpush1.bf16.msra.mxu0 %v558
        %905 = vmatprep.subr.bf16.mxu0 0
        %906 = vmatpush1.bf16.msra.mxu0 %v559
        %907 = vmatprep.subr.bf16.mxu0 0
        %908 = vmatpush1.bf16.msra.mxu0 %v560
        %909 = vmatprep.subr.bf16.mxu0 0
        %910 = vmatpush1.bf16.msra.mxu0 %v561
        %911 = vmatprep.subr.bf16.mxu0 0
        %912 = vmatpush1.bf16.msra.mxu0 %v562
        %913 = vmatprep.subr.bf16.mxu0 0
        %914 = vmatpush1.bf16.msra.mxu0 %v563
        %915 = vmatprep.subr.bf16.mxu0 0
        %916 = vmatpush1.bf16.msra.mxu0 0
        %917 = vmatprep.subr.bf16.mxu0 0
        %918 = vmatpush1.bf16.msra.mxu0 0
        %919 = vmatprep.subr.bf16.mxu0 0
        %920 = vmatpush1.bf16.msra.mxu0 0
        %921 = vmatprep.subr.bf16.mxu0 0
        %922 = vmatpush1.bf16.msra.mxu0 0
        %923 = vmatprep.subr.bf16.mxu0 0
        %924 = vmatpush1.bf16.msra.mxu0 0
        %925 = vmatprep.subr.bf16.mxu0 0
        %926 = vmatpush1.bf16.msra.mxu0 0
        %927 = vmatprep.subr.bf16.mxu0 0
        %928 = vmatpush1.bf16.msra.mxu0 0
        %929 = vmatprep.subr.bf16.mxu0 0
        %930 = vmatpush1.bf16.msra.mxu0 0
        %931 = vmatprep.mubr.bf16.mxu0 0
        %932 = vmatmul.mubr.bf16.gmra.mrb[0].mxu0 %v848
        %v933 = vpop.f32.mrb[0].mxu0
        %v934 = vadd.f32 %v885, %v933
        %v935 = vpop.f32.mrb[0].mxu0
        %v936 = vpop.f32.mrb[0].mxu0
        %v937 = vadd.f32 %v888, %v936
        %v938 = vpop.f32.mrb[0].mxu0
        %939 = vmatprep.mubr.bf16.mxu0 0
        %940 = vmatmul.mubr.bf16.gmra.mrb[0].mxu0 %v849
        %v941 = vpop.f32.mrb[0].mxu0
        %v942 = vadd.f32 %v893, %v941
        %v943 = vpop.f32.mrb[0].mxu0
        %v944 = vpop.f32.mrb[0].mxu0
        %v945 = vadd.f32 %v896, %v944
        %v946 = vpop.f32.mrb[0].mxu0
        %947 = vdwg.mxu0
        %v948 = vxor.u32 %v934, 2147483648
        %v949 = vxor.u32 %v937, 2147483648
        %v950 = vxor.u32 %v942, 2147483648
        %v951 = vxor.u32 %v945, 2147483648
        %v952 = vmul.f32 %v948, 1.442695
        %v953 = vpow.pop %v952
        %v954 = vmul.f32 %v949, 1.442695
        %v955 = vpow.pop %v954
        %v956 = vmul.f32 %v950, 1.442695
        %v957 = vpow.pop %v956
        %v958 = vmul.f32 %v951, 1.442695
        %v959 = vpow.pop %v958
        %v960 = vadd.f32 %v953, 1.0
        %v961 = vadd.f32 %v955, 1.0
        %v962 = vadd.f32 %v957, 1.0
        %v963 = vadd.f32 %v959, 1.0
        %v964 = vrcp.pop %v960
        %v965 = vmul.f32 1.0, %v964
        %v966 = vrcp.pop %v961
        %v967 = vmul.f32 1.0, %v966
        %v968 = vrcp.pop %v962
        %v969 = vmul.f32 1.0, %v968
        %v970 = vrcp.pop %v963
        %v971 = vmul.f32 1.0, %v970
        %v972 = vtanh.pop %v934
        %v973 = vtanh.pop %v937
        %v974 = vtanh.pop %v942
        %v975 = vtanh.pop %v945
        %v976 = vmul.f32 %v965, %v705
        %v977 = vmul.f32 %v967, %v706
        %v978 = vmul.f32 %v969, %v707
        %v979 = vmul.f32 %v971, %v708
        %984 = vrot.lane.b32.xlu0 %v972, 64
        %v985 = vpop.permute.xlu0 %984
        %986 = vrot.lane.b32.xlu0 %v973, 64
        %v987 = vpop.permute.xlu0 %986
        %988 = vrot.lane.b32.xlu0 %v974, 64
        %v989 = vpop.permute.xlu0 %988
        %990 = vrot.lane.b32.xlu0 %v975, 64
        %v991 = vpop.permute.xlu0 %990
        %v996 = vmul.f32 %v965, %v985
        %v997 = vmul.f32 %v967, %v987
        %v998 = vmul.f32 %v969, %v989
        %v999 = vmul.f32 %v971, %v991
        %1004 = vrot.lane.b32.xlu0 %v996, 32
        %v1005 = vpop.permute.xlu0 %1004
        %1006 = vrot.lane.b32.xlu0 %v997, 32
        %v1007 = vpop.permute.xlu0 %1006
        %1008 = vrot.lane.b32.xlu0 %v998, 32
        %v1009 = vpop.permute.xlu0 %1008
        %1010 = vrot.lane.b32.xlu0 %v999, 32
        %v1011 = vpop.permute.xlu0 %1010
        %v1016 = vadd.f32 %v976, %v1005
        %v1017 = vadd.f32 %v977, %v1007
        %v1018 = vadd.f32 %v978, %v1009
        %v1019 = vadd.f32 %v979, %v1011
        %v1020 = vtanh.pop %v1016
        %v1021 = vtanh.pop %v1017
        %v1022 = vtanh.pop %v1018
        %v1023 = vtanh.pop %v1019
        %1028 = vrot.lane.b32.xlu0 %v1020, 64
        %v1029 = vpop.permute.xlu0 %1028
        %1030 = vrot.lane.b32.xlu0 %v1021, 64
        %v1031 = vpop.permute.xlu0 %1030
        %1032 = vrot.lane.b32.xlu0 %v1022, 64
        %v1033 = vpop.permute.xlu0 %1032
        %1034 = vrot.lane.b32.xlu0 %v1023, 64
        %v1035 = vpop.permute.xlu0 %1034
        %v1040 = vmul.f32 %v965, %v1029
        %v1041 = vmul.f32 %v967, %v1031
        %v1042 = vmul.f32 %v969, %v1033
        %v1043 = vmul.f32 %v971, %v1035
        %v1044 = vpack.c.bf16 %v1041, %v1040
        %v1045 = vpack.c.bf16 %v1043, %v1042
        %1048 = vrot.lane.b32.xlu0 %v1044, 32
        %v1049 = vpop.permute.xlu0 %1048
        %1050 = vrot.lane.b32.xlu0 %v1045, 32
        %v1051 = vpop.permute.xlu0 %1050
        %v1053 = vsel %vm468, %v1049, 0
        %v1056 = vsel %vm468, %v1051, 0
        %1058 = vmatprep.subr.bf16.mxu0 0
        %1059 = vmatpush1.bf16.msra.mxu0 %v749
        %1060 = vmatprep.subr.bf16.mxu0 0
        %1061 = vmatpush1.bf16.msra.mxu0 %v750
        %1062 = vmatprep.subr.bf16.mxu0 0
        %1063 = vmatpush1.bf16.msra.mxu0 0
        %1064 = vmatprep.subr.bf16.mxu0 0
        %1065 = vmatpush1.bf16.msra.mxu0 0
        %1066 = vmatprep.subr.bf16.mxu0 0
        %1067 = vmatpush1.bf16.msra.mxu0 0
        %1068 = vmatprep.subr.bf16.mxu0 0
        %1069 = vmatpush1.bf16.msra.mxu0 0
        %1070 = vmatprep.subr.bf16.mxu0 0
        %1071 = vmatpush1.bf16.msra.mxu0 0
        %1072 = vmatprep.subr.bf16.mxu0 0
        %1073 = vmatpush1.bf16.msra.mxu0 0
        %1074 = vmatprep.subr.bf16.mxu0 0
        %1075 = vmatpush1.bf16.msra.mxu0 0
        %1076 = vmatprep.subr.bf16.mxu0 0
        %1077 = vmatpush1.bf16.msra.mxu0 0
        %1078 = vmatprep.subr.bf16.mxu0 0
        %1079 = vmatpush1.bf16.msra.mxu0 0
        %1080 = vmatprep.subr.bf16.mxu0 0
        %1081 = vmatpush1.bf16.msra.mxu0 0
        %1082 = vmatprep.subr.bf16.mxu0 0
        %1083 = vmatpush1.bf16.msra.mxu0 0
        %1084 = vmatprep.subr.bf16.mxu0 0
        %1085 = vmatpush1.bf16.msra.mxu0 0
        %1086 = vmatprep.subr.bf16.mxu0 0
        %1087 = vmatpush1.bf16.msra.mxu0 0
        %1088 = vmatprep.subr.bf16.mxu0 0
        %1089 = vmatpush1.bf16.msra.mxu0 0
        %1090 = vmatprep.mubr.bf16.mxu0 0
        %1091 = vmatmul.mubr.bf16.gmra.mrb[0].mxu0 %v1053
        %v1092 = vpop.f32.mrb[0].mxu0
        %v1093 = vadd.f32 %v435, %v1092
        %v1094 = vpop.f32.mrb[0].mxu0
        %v1095 = vpop.f32.mrb[0].mxu0
        %v1096 = vadd.f32 %v435, %v1095
        %v1097 = vpop.f32.mrb[0].mxu0
        %1098 = vmatprep.mubr.bf16.mxu0 0
        %1099 = vmatmul.mubr.bf16.gmra.mrb[0].mxu0 %v1056
        %v1100 = vpop.f32.mrb[0].mxu0
        %v1101 = vadd.f32 %v435, %v1100
        %v1102 = vpop.f32.mrb[0].mxu0
        %v1103 = vpop.f32.mrb[0].mxu0
        %v1104 = vadd.f32 %v435, %v1103
        %v1105 = vpop.f32.mrb[0].mxu0
        %1106 = vdwg.mxu0
        %s1107 = scalar_lea.vmem %s359, 32 [#allocation2]
        %1108 = vst [vmem:[%s1107] sm:$0xff] %v1093
        %1109 = vst [vmem:[%s1107 + $0x8] sm:$0xff] %v1096
        %1110 = vst [vmem:[%s1107 + $0x10] sm:$0xff] %v1101
        %1111 = vst [vmem:[%s1107 + $0x18] sm:$0xff] %v1104
        %1112 = vmax.xlane.f32.xlu0 %v1093
        %v1113 = vpop.xlane.xlu0 %1112
        %1114 = vmax.xlane.f32.xlu0 %v1096
        %v1115 = vpop.xlane.xlu0 %1114
        %1116 = vmax.xlane.f32.xlu0 %v1101
        %v1117 = vpop.xlane.xlu0 %1116
        %1118 = vmax.xlane.f32.xlu0 %v1104
        %v1119 = vpop.xlane.xlu0 %1118
        %vm1120 = vcmp.eq.f32.partialorder %v1093, %v1113
        %vm1121 = vcmp.eq.f32.partialorder %v1096, %v1115
        %vm1122 = vcmp.eq.f32.partialorder %v1101, %v1117
        %vm1123 = vcmp.eq.f32.partialorder %v1104, %v1119
        %v1124 = vsel %vm1120, %v439, 128.0
        %v1125 = vsel %vm1121, %v439, 128.0
        %v1126 = vsel %vm1122, %v439, 128.0
        %v1127 = vsel %vm1123, %v439, 128.0
        %1128 = vmin.xlane.f32.xlu0 %v1124
        %v1129 = vpop.xlane.xlu0 %1128
        %1130 = vmin.xlane.f32.xlu0 %v1125
        %v1131 = vpop.xlane.xlu0 %1130
        %1132 = vmin.xlane.f32.xlu0 %v1126
        %v1133 = vpop.xlane.xlu0 %1132
        %1134 = vmin.xlane.f32.xlu0 %v1127
        %v1135 = vpop.xlane.xlu0 %1134
        %vm1136 = vcmp.eq.f32.partialorder %v439, %v1129
        %vm1137 = vcmp.eq.f32.partialorder %v439, %v1131
        %vm1138 = vcmp.eq.f32.partialorder %v439, %v1133
        %vm1139 = vcmp.eq.f32.partialorder %v439, %v1135
        %v1140 = vsel %vm1136, 1, 0
        %v1141 = vsel %vm1137, 1, 0
        %v1142 = vsel %vm1138, 1, 0
        %v1143 = vsel %vm1139, 1, 0
        %v1144 = vcvt.s32.f32 %v1140
        %v1145 = vcvt.s32.f32 %v1141
        %v1146 = vcvt.s32.f32 %v1142
        %v1147 = vcvt.s32.f32 %v1143
        %v1148 = vpack.c.bf16 %v1145, %v1144
        %v1149 = vpack.c.bf16 %v1147, %v1146
        %1150 = vmatprep.subr.bf16.mxu0 0
        %1151 = vmatpush1.bf16.msra.mxu0 %v464
        %1152 = vmatprep.subr.bf16.mxu0 0
        %1153 = vmatpush1.bf16.msra.mxu0 %v465
        %1154 = vmatprep.subr.bf16.mxu0 0
        %1155 = vmatpush1.bf16.msra.mxu0 0
        %1156 = vmatprep.subr.bf16.mxu0 0
        %1157 = vmatpush1.bf16.msra.mxu0 0
        %1158 = vmatprep.subr.bf16.mxu0 0
        %1159 = vmatpush1.bf16.msra.mxu0 0
        %1160 = vmatprep.subr.bf16.mxu0 0
        %1161 = vmatpush1.bf16.msra.mxu0 0
        %1162 = vmatprep.subr.bf16.mxu0 0
        %1163 = vmatpush1.bf16.msra.mxu0 0
        %1164 = vmatprep.subr.bf16.mxu0 0
        %1165 = vmatpush1.bf16.msra.mxu0 0
        %1166 = vmatprep.subr.bf16.mxu0 0
        %1167 = vmatpush1.bf16.msra.mxu0 0
        %1168 = vmatprep.subr.bf16.mxu0 0
        %1169 = vmatpush1.bf16.msra.mxu0 0
        %1170 = vmatprep.subr.bf16.mxu0 0
        %1171 = vmatpush1.bf16.msra.mxu0 0
        %1172 = vmatprep.subr.bf16.mxu0 0
        %1173 = vmatpush1.bf16.msra.mxu0 0
        %1174 = vmatprep.subr.bf16.mxu0 0
        %1175 = vmatpush1.bf16.msra.mxu0 0
        %1176 = vmatprep.subr.bf16.mxu0 0
        %1177 = vmatpush1.bf16.msra.mxu0 0
        %1178 = vmatprep.subr.bf16.mxu0 0
        %1179 = vmatpush1.bf16.msra.mxu0 0
        %1180 = vmatprep.subr.bf16.mxu0 0
        %1181 = vmatpush1.bf16.msra.mxu0 0
        %1182 = vmatprep.mubr.bf16.mxu0 0
        %1183 = vmatmul.mubr.bf16.gmra.mrb[0].mxu0 %v1053
        %v1184 = vpop.f32.mrb[0].mxu0
        %v1185 = vadd.f32 0.0, %v1184
        %v1186 = vpop.f32.mrb[0].mxu0
        %v1187 = vpop.f32.mrb[0].mxu0
        %v1188 = vadd.f32 0.0, %v1187
        %v1189 = vpop.f32.mrb[0].mxu0
        %1190 = vmatprep.mubr.bf16.mxu0 0
        %1191 = vmatmul.mubr.bf16.gmra.mrb[0].mxu0 %v1056
        %v1192 = vpop.f32.mrb[0].mxu0
        %v1193 = vadd.f32 0.0, %v1192
        %v1194 = vpop.f32.mrb[0].mxu0
        %v1195 = vpop.f32.mrb[0].mxu0
        %v1196 = vadd.f32 0.0, %v1195
        %v1197 = vpop.f32.mrb[0].mxu0
        %1198 = vdwg.mxu0
        %1199 = vmatprep.subr.bf16.mxu0 0
        %1200 = vmatpush1.bf16.msra.mxu0 %v556
        %1201 = vmatprep.subr.bf16.mxu0 0
        %1202 = vmatpush1.bf16.msra.mxu0 %v557
        %1203 = vmatprep.subr.bf16.mxu0 0
        %1204 = vmatpush1.bf16.msra.mxu0 %v558
        %1205 = vmatprep.subr.bf16.mxu0 0
        %1206 = vmatpush1.bf16.msra.mxu0 %v559
        %1207 = vmatprep.subr.bf16.mxu0 0
        %1208 = vmatpush1.bf16.msra.mxu0 %v560
        %1209 = vmatprep.subr.bf16.mxu0 0
        %1210 = vmatpush1.bf16.msra.mxu0 %v561
        %1211 = vmatprep.subr.bf16.mxu0 0
        %1212 = vmatpush1.bf16.msra.mxu0 %v562
        %1213 = vmatprep.subr.bf16.mxu0 0
        %1214 = vmatpush1.bf16.msra.mxu0 %v563
        %1215 = vmatprep.subr.bf16.mxu0 0
        %1216 = vmatpush1.bf16.msra.mxu0 0
        %1217 = vmatprep.subr.bf16.mxu0 0
        %1218 = vmatpush1.bf16.msra.mxu0 0
        %1219 = vmatprep.subr.bf16.mxu0 0
        %1220 = vmatpush1.bf16.msra.mxu0 0
        %1221 = vmatprep.subr.bf16.mxu0 0
        %1222 = vmatpush1.bf16.msra.mxu0 0
        %1223 = vmatprep.subr.bf16.mxu0 0
        %1224 = vmatpush1.bf16.msra.mxu0 0
        %1225 = vmatprep.subr.bf16.mxu0 0
        %1226 = vmatpush1.bf16.msra.mxu0 0
        %1227 = vmatprep.subr.bf16.mxu0 0
        %1228 = vmatpush1.bf16.msra.mxu0 0
        %1229 = vmatprep.subr.bf16.mxu0 0
        %1230 = vmatpush1.bf16.msra.mxu0 0
        %1231 = vmatprep.mubr.bf16.mxu0 0
        %1232 = vmatmul.mubr.bf16.gmra.mrb[0].mxu0 %v1148
        %v1233 = vpop.f32.mrb[0].mxu0
        %v1234 = vadd.f32 %v1185, %v1233
        %v1235 = vpop.f32.mrb[0].mxu0
        %v1236 = vpop.f32.mrb[0].mxu0
        %v1237 = vadd.f32 %v1188, %v1236
        %v1238 = vpop.f32.mrb[0].mxu0
        %1239 = vmatprep.mubr.bf16.mxu0 0
        %1240 = vmatmul.mubr.bf16.gmra.mrb[0].mxu0 %v1149
        %v1241 = vpop.f32.mrb[0].mxu0
        %v1242 = vadd.f32 %v1193, %v1241
        %v1243 = vpop.f32.mrb[0].mxu0
        %v1244 = vpop.f32.mrb[0].mxu0
        %v1245 = vadd.f32 %v1196, %v1244
        %v1246 = vpop.f32.mrb[0].mxu0
        %1247 = vdwg.mxu0
        %v1248 = vxor.u32 %v1234, 2147483648
        %v1249 = vxor.u32 %v1237, 2147483648
        %v1250 = vxor.u32 %v1242, 2147483648
        %v1251 = vxor.u32 %v1245, 2147483648
        %v1252 = vmul.f32 %v1248, 1.442695
        %v1253 = vpow.pop %v1252
        %v1254 = vmul.f32 %v1249, 1.442695
        %v1255 = vpow.pop %v1254
        %v1256 = vmul.f32 %v1250, 1.442695
        %v1257 = vpow.pop %v1256
        %v1258 = vmul.f32 %v1251, 1.442695
        %v1259 = vpow.pop %v1258
        %v1260 = vadd.f32 %v1253, 1.0
        %v1261 = vadd.f32 %v1255, 1.0
        %v1262 = vadd.f32 %v1257, 1.0
        %v1263 = vadd.f32 %v1259, 1.0
        %v1264 = vrcp.pop %v1260
        %v1265 = vmul.f32 1.0, %v1264
        %v1266 = vrcp.pop %v1261
        %v1267 = vmul.f32 1.0, %v1266
        %v1268 = vrcp.pop %v1262
        %v1269 = vmul.f32 1.0, %v1268
        %v1270 = vrcp.pop %v1263
        %v1271 = vmul.f32 1.0, %v1270
        %v1272 = vtanh.pop %v1234
        %v1273 = vtanh.pop %v1237
        %v1274 = vtanh.pop %v1242
        %v1275 = vtanh.pop %v1245
        %v1276 = vmul.f32 %v1265, %v1016
        %v1277 = vmul.f32 %v1267, %v1017
        %v1278 = vmul.f32 %v1269, %v1018
        %v1279 = vmul.f32 %v1271, %v1019
        %1284 = vrot.lane.b32.xlu0 %v1272, 64
        %v1285 = vpop.permute.xlu0 %1284
        %1286 = vrot.lane.b32.xlu0 %v1273, 64
        %v1287 = vpop.permute.xlu0 %1286
        %1288 = vrot.lane.b32.xlu0 %v1274, 64
        %v1289 = vpop.permute.xlu0 %1288
        %1290 = vrot.lane.b32.xlu0 %v1275, 64
        %v1291 = vpop.permute.xlu0 %1290
        %v1296 = vmul.f32 %v1265, %v1285
        %v1297 = vmul.f32 %v1267, %v1287
        %v1298 = vmul.f32 %v1269, %v1289
        %v1299 = vmul.f32 %v1271, %v1291
        %1304 = vrot.lane.b32.xlu0 %v1296, 32
        %v1305 = vpop.permute.xlu0 %1304
        %1306 = vrot.lane.b32.xlu0 %v1297, 32
        %v1307 = vpop.permute.xlu0 %1306
        %1308 = vrot.lane.b32.xlu0 %v1298, 32
        %v1309 = vpop.permute.xlu0 %1308
        %1310 = vrot.lane.b32.xlu0 %v1299, 32
        %v1311 = vpop.permute.xlu0 %1310
        %v1316 = vadd.f32 %v1276, %v1305
        %v1317 = vadd.f32 %v1277, %v1307
        %v1318 = vadd.f32 %v1278, %v1309
        %v1319 = vadd.f32 %v1279, %v1311
        %v1320 = vtanh.pop %v1316
        %v1321 = vtanh.pop %v1317
        %v1322 = vtanh.pop %v1318
        %v1323 = vtanh.pop %v1319
        %1328 = vrot.lane.b32.xlu0 %v1320, 64
        %v1329 = vpop.permute.xlu0 %1328
        %1330 = vrot.lane.b32.xlu0 %v1321, 64
        %v1331 = vpop.permute.xlu0 %1330
        %1332 = vrot.lane.b32.xlu0 %v1322, 64
        %v1333 = vpop.permute.xlu0 %1332
        %1334 = vrot.lane.b32.xlu0 %v1323, 64
        %v1335 = vpop.permute.xlu0 %1334
        %v1340 = vmul.f32 %v1265, %v1329
        %v1341 = vmul.f32 %v1267, %v1331
        %v1342 = vmul.f32 %v1269, %v1333
        %v1343 = vmul.f32 %v1271, %v1335
        %v1344 = vpack.c.bf16 %v1341, %v1340
        %v1345 = vpack.c.bf16 %v1343, %v1342
        %1348 = vrot.lane.b32.xlu0 %v1344, 32
        %v1349 = vpop.permute.xlu0 %1348
        %1350 = vrot.lane.b32.xlu0 %v1345, 32
        %v1351 = vpop.permute.xlu0 %1350
        %v1353 = vsel %vm468, %v1349, 0
        %v1356 = vsel %vm468, %v1351, 0
        %1358 = vmatprep.subr.bf16.mxu0 0
        %1359 = vmatpush1.bf16.msra.mxu0 %v749
        %1360 = vmatprep.subr.bf16.mxu0 0
        %1361 = vmatpush1.bf16.msra.mxu0 %v750
        %1362 = vmatprep.subr.bf16.mxu0 0
        %1363 = vmatpush1.bf16.msra.mxu0 0
        %1364 = vmatprep.subr.bf16.mxu0 0
        %1365 = vmatpush1.bf16.msra.mxu0 0
        %1366 = vmatprep.subr.bf16.mxu0 0
        %1367 = vmatpush1.bf16.msra.mxu0 0
        %1368 = vmatprep.subr.bf16.mxu0 0
        %1369 = vmatpush1.bf16.msra.mxu0 0
        %1370 = vmatprep.subr.bf16.mxu0 0
        %1371 = vmatpush1.bf16.msra.mxu0 0
        %1372 = vmatprep.subr.bf16.mxu0 0
        %1373 = vmatpush1.bf16.msra.mxu0 0
        %1374 = vmatprep.subr.bf16.mxu0 0
        %1375 = vmatpush1.bf16.msra.mxu0 0
        %1376 = vmatprep.subr.bf16.mxu0 0
        %1377 = vmatpush1.bf16.msra.mxu0 0
        %1378 = vmatprep.subr.bf16.mxu0 0
        %1379 = vmatpush1.bf16.msra.mxu0 0
        %1380 = vmatprep.subr.bf16.mxu0 0
        %1381 = vmatpush1.bf16.msra.mxu0 0
        %1382 = vmatprep.subr.bf16.mxu0 0
        %1383 = vmatpush1.bf16.msra.mxu0 0
        %1384 = vmatprep.subr.bf16.mxu0 0
        %1385 = vmatpush1.bf16.msra.mxu0 0
        %1386 = vmatprep.subr.bf16.mxu0 0
        %1387 = vmatpush1.bf16.msra.mxu0 0
        %1388 = vmatprep.subr.bf16.mxu0 0
        %1389 = vmatpush1.bf16.msra.mxu0 0
        %1390 = vmatprep.mubr.bf16.mxu0 0
        %1391 = vmatmul.mubr.bf16.gmra.mrb[0].mxu0 %v1353
        %v1392 = vpop.f32.mrb[0].mxu0
        %v1393 = vadd.f32 %v435, %v1392
        %v1394 = vpop.f32.mrb[0].mxu0
        %v1395 = vpop.f32.mrb[0].mxu0
        %v1396 = vadd.f32 %v435, %v1395
        %v1397 = vpop.f32.mrb[0].mxu0
        %1398 = vmatprep.mubr.bf16.mxu0 0
        %1399 = vmatmul.mubr.bf16.gmra.mrb[0].mxu0 %v1356
        %v1400 = vpop.f32.mrb[0].mxu0
        %v1401 = vadd.f32 %v435, %v1400
        %v1402 = vpop.f32.mrb[0].mxu0
        %v1403 = vpop.f32.mrb[0].mxu0
        %v1404 = vadd.f32 %v435, %v1403
        %v1405 = vpop.f32.mrb[0].mxu0
        %1406 = vdwg.mxu0
        %s1407 = scalar_lea.vmem %s359, 64 [#allocation2]
        %1408 = vst [vmem:[%s1407] sm:$0xff] %v1393
        %1409 = vst [vmem:[%s1407 + $0x8] sm:$0xff] %v1396
        %1410 = vst [vmem:[%s1407 + $0x10] sm:$0xff] %v1401
        %1411 = vst [vmem:[%s1407 + $0x18] sm:$0xff] %v1404
        %1412 = vmax.xlane.f32.xlu0 %v1393
        %v1413 = vpop.xlane.xlu0 %1412
        %1414 = vmax.xlane.f32.xlu0 %v1396
        %v1415 = vpop.xlane.xlu0 %1414
        %1416 = vmax.xlane.f32.xlu0 %v1401
        %v1417 = vpop.xlane.xlu0 %1416
        %1418 = vmax.xlane.f32.xlu0 %v1404
        %v1419 = vpop.xlane.xlu0 %1418
        %vm1420 = vcmp.eq.f32.partialorder %v1393, %v1413
        %vm1421 = vcmp.eq.f32.partialorder %v1396, %v1415
        %vm1422 = vcmp.eq.f32.partialorder %v1401, %v1417
        %vm1423 = vcmp.eq.f32.partialorder %v1404, %v1419
        %v1424 = vsel %vm1420, %v439, 128.0
        %v1425 = vsel %vm1421, %v439, 128.0
        %v1426 = vsel %vm1422, %v439, 128.0
        %v1427 = vsel %vm1423, %v439, 128.0
        %1428 = vmin.xlane.f32.xlu0 %v1424
        %v1429 = vpop.xlane.xlu0 %1428
        %1430 = vmin.xlane.f32.xlu0 %v1425
        %v1431 = vpop.xlane.xlu0 %1430
        %1432 = vmin.xlane.f32.xlu0 %v1426
        %v1433 = vpop.xlane.xlu0 %1432
        %1434 = vmin.xlane.f32.xlu0 %v1427
        %v1435 = vpop.xlane.xlu0 %1434
        %vm1436 = vcmp.eq.f32.partialorder %v439, %v1429
        %vm1437 = vcmp.eq.f32.partialorder %v439, %v1431
        %vm1438 = vcmp.eq.f32.partialorder %v439, %v1433
        %vm1439 = vcmp.eq.f32.partialorder %v439, %v1435
        %v1440 = vsel %vm1436, 1, 0
        %v1441 = vsel %vm1437, 1, 0
        %v1442 = vsel %vm1438, 1, 0
        %v1443 = vsel %vm1439, 1, 0
        %v1444 = vcvt.s32.f32 %v1440
        %v1445 = vcvt.s32.f32 %v1441
        %v1446 = vcvt.s32.f32 %v1442
        %v1447 = vcvt.s32.f32 %v1443
        %v1448 = vpack.c.bf16 %v1445, %v1444
        %v1449 = vpack.c.bf16 %v1447, %v1446
        %1450 = vmatprep.subr.bf16.mxu0 0
        %1451 = vmatpush1.bf16.msra.mxu0 %v464
        %1452 = vmatprep.subr.bf16.mxu0 0
        %1453 = vmatpush1.bf16.msra.mxu0 %v465
        %1454 = vmatprep.subr.bf16.mxu0 0
        %1455 = vmatpush1.bf16.msra.mxu0 0
        %1456 = vmatprep.subr.bf16.mxu0 0
        %1457 = vmatpush1.bf16.msra.mxu0 0
        %1458 = vmatprep.subr.bf16.mxu0 0
        %1459 = vmatpush1.bf16.msra.mxu0 0
        %1460 = vmatprep.subr.bf16.mxu0 0
        %1461 = vmatpush1.bf16.msra.mxu0 0
        %1462 = vmatprep.subr.bf16.mxu0 0
        %1463 = vmatpush1.bf16.msra.mxu0 0
        %1464 = vmatprep.subr.bf16.mxu0 0
        %1465 = vmatpush1.bf16.msra.mxu0 0
        %1466 = vmatprep.subr.bf16.mxu0 0
        %1467 = vmatpush1.bf16.msra.mxu0 0
        %1468 = vmatprep.subr.bf16.mxu0 0
        %1469 = vmatpush1.bf16.msra.mxu0 0
        %1470 = vmatprep.subr.bf16.mxu0 0
        %1471 = vmatpush1.bf16.msra.mxu0 0
        %1472 = vmatprep.subr.bf16.mxu0 0
        %1473 = vmatpush1.bf16.msra.mxu0 0
        %1474 = vmatprep.subr.bf16.mxu0 0
        %1475 = vmatpush1.bf16.msra.mxu0 0
        %1476 = vmatprep.subr.bf16.mxu0 0
        %1477 = vmatpush1.bf16.msra.mxu0 0
        %1478 = vmatprep.subr.bf16.mxu0 0
        %1479 = vmatpush1.bf16.msra.mxu0 0
        %1480 = vmatprep.subr.bf16.mxu0 0
        %1481 = vmatpush1.bf16.msra.mxu0 0
        %1482 = vmatprep.mubr.bf16.mxu0 0
        %1483 = vmatmul.mubr.bf16.gmra.mrb[0].mxu0 %v1353
        %v1484 = vpop.f32.mrb[0].mxu0
        %v1485 = vadd.f32 0.0, %v1484
        %v1486 = vpop.f32.mrb[0].mxu0
        %v1487 = vpop.f32.mrb[0].mxu0
        %v1488 = vadd.f32 0.0, %v1487
        %v1489 = vpop.f32.mrb[0].mxu0
        %1490 = vmatprep.mubr.bf16.mxu0 0
        %1491 = vmatmul.mubr.bf16.gmra.mrb[0].mxu0 %v1356
        %v1492 = vpop.f32.mrb[0].mxu0
        %v1493 = vadd.f32 0.0, %v1492
        %v1494 = vpop.f32.mrb[0].mxu0
        %v1495 = vpop.f32.mrb[0].mxu0
        %v1496 = vadd.f32 0.0, %v1495
        %v1497 = vpop.f32.mrb[0].mxu0
        %1498 = vdwg.mxu0
        %1499 = vmatprep.subr.bf16.mxu0 0
        %1500 = vmatpush1.bf16.msra.mxu0 %v556
        %1501 = vmatprep.subr.bf16.mxu0 0
        %1502 = vmatpush1.bf16.msra.mxu0 %v557
        %1503 = vmatprep.subr.bf16.mxu0 0
        %1504 = vmatpush1.bf16.msra.mxu0 %v558
        %1505 = vmatprep.subr.bf16.mxu0 0
        %1506 = vmatpush1.bf16.msra.mxu0 %v559
        %1507 = vmatprep.subr.bf16.mxu0 0
        %1508 = vmatpush1.bf16.msra.mxu0 %v560
        %1509 = vmatprep.subr.bf16.mxu0 0
        %1510 = vmatpush1.bf16.msra.mxu0 %v561
        %1511 = vmatprep.subr.bf16.mxu0 0
        %1512 = vmatpush1.bf16.msra.mxu0 %v562
        %1513 = vmatprep.subr.bf16.mxu0 0
        %1514 = vmatpush1.bf16.msra.mxu0 %v563
        %1515 = vmatprep.subr.bf16.mxu0 0
        %1516 = vmatpush1.bf16.msra.mxu0 0
        %1517 = vmatprep.subr.bf16.mxu0 0
        %1518 = vmatpush1.bf16.msra.mxu0 0
        %1519 = vmatprep.subr.bf16.mxu0 0
        %1520 = vmatpush1.bf16.msra.mxu0 0
        %1521 = vmatprep.subr.bf16.mxu0 0
        %1522 = vmatpush1.bf16.msra.mxu0 0
        %1523 = vmatprep.subr.bf16.mxu0 0
        %1524 = vmatpush1.bf16.msra.mxu0 0
        %1525 = vmatprep.subr.bf16.mxu0 0
        %1526 = vmatpush1.bf16.msra.mxu0 0
        %1527 = vmatprep.subr.bf16.mxu0 0
        %1528 = vmatpush1.bf16.msra.mxu0 0
        %1529 = vmatprep.subr.bf16.mxu0 0
        %1530 = vmatpush1.bf16.msra.mxu0 0
        %1531 = vmatprep.mubr.bf16.mxu0 0
        %1532 = vmatmul.mubr.bf16.gmra.mrb[0].mxu0 %v1448
        %v1533 = vpop.f32.mrb[0].mxu0
        %v1534 = vadd.f32 %v1485, %v1533
        %v1535 = vpop.f32.mrb[0].mxu0
        %v1536 = vpop.f32.mrb[0].mxu0
        %v1537 = vadd.f32 %v1488, %v1536
        %v1538 = vpop.f32.mrb[0].mxu0
        %1539 = vmatprep.mubr.bf16.mxu0 0
        %1540 = vmatmul.mubr.bf16.gmra.mrb[0].mxu0 %v1449
        %v1541 = vpop.f32.mrb[0].mxu0
        %v1542 = vadd.f32 %v1493, %v1541
        %v1543 = vpop.f32.mrb[0].mxu0
        %v1544 = vpop.f32.mrb[0].mxu0
        %v1545 = vadd.f32 %v1496, %v1544
        %v1546 = vpop.f32.mrb[0].mxu0
        %1547 = vdwg.mxu0
        %v1548 = vxor.u32 %v1534, 2147483648
        %v1549 = vxor.u32 %v1537, 2147483648
        %v1550 = vxor.u32 %v1542, 2147483648
        %v1551 = vxor.u32 %v1545, 2147483648
        %v1552 = vmul.f32 %v1548, 1.442695
        %v1553 = vpow.pop %v1552
        %v1554 = vmul.f32 %v1549, 1.442695
        %v1555 = vpow.pop %v1554
        %v1556 = vmul.f32 %v1550, 1.442695
        %v1557 = vpow.pop %v1556
        %v1558 = vmul.f32 %v1551, 1.442695
        %v1559 = vpow.pop %v1558
        %v1560 = vadd.f32 %v1553, 1.0
        %v1561 = vadd.f32 %v1555, 1.0
        %v1562 = vadd.f32 %v1557, 1.0
        %v1563 = vadd.f32 %v1559, 1.0
        %v1564 = vrcp.pop %v1560
        %v1565 = vmul.f32 1.0, %v1564
        %v1566 = vrcp.pop %v1561
        %v1567 = vmul.f32 1.0, %v1566
        %v1568 = vrcp.pop %v1562
        %v1569 = vmul.f32 1.0, %v1568
        %v1570 = vrcp.pop %v1563
        %v1571 = vmul.f32 1.0, %v1570
        %v1572 = vtanh.pop %v1534
        %v1573 = vtanh.pop %v1537
        %v1574 = vtanh.pop %v1542
        %v1575 = vtanh.pop %v1545
        %v1576 = vmul.f32 %v1565, %v1316
        %v1577 = vmul.f32 %v1567, %v1317
        %v1578 = vmul.f32 %v1569, %v1318
        %v1579 = vmul.f32 %v1571, %v1319
        %1584 = vrot.lane.b32.xlu0 %v1572, 64
        %v1585 = vpop.permute.xlu0 %1584
        %1586 = vrot.lane.b32.xlu0 %v1573, 64
        %v1587 = vpop.permute.xlu0 %1586
        %1588 = vrot.lane.b32.xlu0 %v1574, 64
        %v1589 = vpop.permute.xlu0 %1588
        %1590 = vrot.lane.b32.xlu0 %v1575, 64
        %v1591 = vpop.permute.xlu0 %1590
        %v1596 = vmul.f32 %v1565, %v1585
        %v1597 = vmul.f32 %v1567, %v1587
        %v1598 = vmul.f32 %v1569, %v1589
        %v1599 = vmul.f32 %v1571, %v1591
        %1604 = vrot.lane.b32.xlu0 %v1596, 32
        %v1605 = vpop.permute.xlu0 %1604
        %1606 = vrot.lane.b32.xlu0 %v1597, 32
        %v1607 = vpop.permute.xlu0 %1606
        %1608 = vrot.lane.b32.xlu0 %v1598, 32
        %v1609 = vpop.permute.xlu0 %1608
        %1610 = vrot.lane.b32.xlu0 %v1599, 32
        %v1611 = vpop.permute.xlu0 %1610
        %v1616 = vadd.f32 %v1576, %v1605
        %v1617 = vadd.f32 %v1577, %v1607
        %v1618 = vadd.f32 %v1578, %v1609
        %v1619 = vadd.f32 %v1579, %v1611
        %v1620 = vtanh.pop %v1616
        %v1621 = vtanh.pop %v1617
        %v1622 = vtanh.pop %v1618
        %v1623 = vtanh.pop %v1619
        %1628 = vrot.lane.b32.xlu0 %v1620, 64
        %v1629 = vpop.permute.xlu0 %1628
        %1630 = vrot.lane.b32.xlu0 %v1621, 64
        %v1631 = vpop.permute.xlu0 %1630
        %1632 = vrot.lane.b32.xlu0 %v1622, 64
        %v1633 = vpop.permute.xlu0 %1632
        %1634 = vrot.lane.b32.xlu0 %v1623, 64
        %v1635 = vpop.permute.xlu0 %1634
        %v1640 = vmul.f32 %v1565, %v1629
        %v1641 = vmul.f32 %v1567, %v1631
        %v1642 = vmul.f32 %v1569, %v1633
        %v1643 = vmul.f32 %v1571, %v1635
        %v1644 = vpack.c.bf16 %v1641, %v1640
        %v1645 = vpack.c.bf16 %v1643, %v1642
        %1648 = vrot.lane.b32.xlu0 %v1644, 32
        %v1649 = vpop.permute.xlu0 %1648
        %1650 = vrot.lane.b32.xlu0 %v1645, 32
        %v1651 = vpop.permute.xlu0 %1650
        %v1653 = vsel %vm468, %v1649, 0
        %v1656 = vsel %vm468, %v1651, 0
        %1658 = vmatprep.subr.bf16.mxu0 0
        %1659 = vmatpush1.bf16.msra.mxu0 %v749
        %1660 = vmatprep.subr.bf16.mxu0 0
        %1661 = vmatpush1.bf16.msra.mxu0 %v750
        %1662 = vmatprep.subr.bf16.mxu0 0
        %1663 = vmatpush1.bf16.msra.mxu0 0
        %1664 = vmatprep.subr.bf16.mxu0 0
        %1665 = vmatpush1.bf16.msra.mxu0 0
        %1666 = vmatprep.subr.bf16.mxu0 0
        %1667 = vmatpush1.bf16.msra.mxu0 0
        %1668 = vmatprep.subr.bf16.mxu0 0
        %1669 = vmatpush1.bf16.msra.mxu0 0
        %1670 = vmatprep.subr.bf16.mxu0 0
        %1671 = vmatpush1.bf16.msra.mxu0 0
        %1672 = vmatprep.subr.bf16.mxu0 0
        %1673 = vmatpush1.bf16.msra.mxu0 0
        %1674 = vmatprep.subr.bf16.mxu0 0
        %1675 = vmatpush1.bf16.msra.mxu0 0
        %1676 = vmatprep.subr.bf16.mxu0 0
        %1677 = vmatpush1.bf16.msra.mxu0 0
        %1678 = vmatprep.subr.bf16.mxu0 0
        %1679 = vmatpush1.bf16.msra.mxu0 0
        %1680 = vmatprep.subr.bf16.mxu0 0
        %1681 = vmatpush1.bf16.msra.mxu0 0
        %1682 = vmatprep.subr.bf16.mxu0 0
        %1683 = vmatpush1.bf16.msra.mxu0 0
        %1684 = vmatprep.subr.bf16.mxu0 0
        %1685 = vmatpush1.bf16.msra.mxu0 0
        %1686 = vmatprep.subr.bf16.mxu0 0
        %1687 = vmatpush1.bf16.msra.mxu0 0
        %1688 = vmatprep.subr.bf16.mxu0 0
        %1689 = vmatpush1.bf16.msra.mxu0 0
        %1690 = vmatprep.mubr.bf16.mxu0 0
        %1691 = vmatmul.mubr.bf16.gmra.mrb[0].mxu0 %v1653
        %v1692 = vpop.f32.mrb[0].mxu0
        %v1693 = vadd.f32 %v435, %v1692
        %v1694 = vpop.f32.mrb[0].mxu0
        %v1695 = vpop.f32.mrb[0].mxu0
        %v1696 = vadd.f32 %v435, %v1695
        %v1697 = vpop.f32.mrb[0].mxu0
        %1698 = vmatprep.mubr.bf16.mxu0 0
        %1699 = vmatmul.mubr.bf16.gmra.mrb[0].mxu0 %v1656
        %v1700 = vpop.f32.mrb[0].mxu0
        %v1701 = vadd.f32 %v435, %v1700
        %v1702 = vpop.f32.mrb[0].mxu0
        %v1703 = vpop.f32.mrb[0].mxu0
        %v1704 = vadd.f32 %v435, %v1703
        %v1705 = vpop.f32.mrb[0].mxu0
        %1706 = vdwg.mxu0
        %s1707 = scalar_lea.vmem %s359, 96 [#allocation2]
        %1708 = vst [vmem:[%s1707] sm:$0xff] %v1693
        %1709 = vst [vmem:[%s1707 + $0x8] sm:$0xff] %v1696
        %1710 = vst [vmem:[%s1707 + $0x10] sm:$0xff] %v1701
        %1711 = vst [vmem:[%s1707 + $0x18] sm:$0xff] %v1704
        %1712 = vmax.xlane.f32.xlu0 %v1693
        %v1713 = vpop.xlane.xlu0 %1712
        %1714 = vmax.xlane.f32.xlu0 %v1696
        %v1715 = vpop.xlane.xlu0 %1714
        %1716 = vmax.xlane.f32.xlu0 %v1701
        %v1717 = vpop.xlane.xlu0 %1716
        %1718 = vmax.xlane.f32.xlu0 %v1704
        %v1719 = vpop.xlane.xlu0 %1718
        %vm1720 = vcmp.eq.f32.partialorder %v1693, %v1713
        %vm1721 = vcmp.eq.f32.partialorder %v1696, %v1715
        %vm1722 = vcmp.eq.f32.partialorder %v1701, %v1717
        %vm1723 = vcmp.eq.f32.partialorder %v1704, %v1719
        %v1724 = vsel %vm1720, %v439, 128.0
        %v1725 = vsel %vm1721, %v439, 128.0
        %v1726 = vsel %vm1722, %v439, 128.0
        %v1727 = vsel %vm1723, %v439, 128.0
        %1728 = vmin.xlane.f32.xlu0 %v1724
        %v1729 = vpop.xlane.xlu0 %1728
        %1730 = vmin.xlane.f32.xlu0 %v1725
        %v1731 = vpop.xlane.xlu0 %1730
        %1732 = vmin.xlane.f32.xlu0 %v1726
        %v1733 = vpop.xlane.xlu0 %1732
        %1734 = vmin.xlane.f32.xlu0 %v1727
        %v1735 = vpop.xlane.xlu0 %1734
        %vm1736 = vcmp.eq.f32.partialorder %v439, %v1729
        %vm1737 = vcmp.eq.f32.partialorder %v439, %v1731
        %vm1738 = vcmp.eq.f32.partialorder %v439, %v1733
        %vm1739 = vcmp.eq.f32.partialorder %v439, %v1735
        %v1740 = vsel %vm1736, 1, 0
        %v1741 = vsel %vm1737, 1, 0
        %v1742 = vsel %vm1738, 1, 0
        %v1743 = vsel %vm1739, 1, 0
        %v1744 = vcvt.s32.f32 %v1740
        %v1745 = vcvt.s32.f32 %v1741
        %v1746 = vcvt.s32.f32 %v1742
        %v1747 = vcvt.s32.f32 %v1743
        %v1748 = vpack.c.bf16 %v1745, %v1744
        %v1749 = vpack.c.bf16 %v1747, %v1746
        %1750 = vmatprep.subr.bf16.mxu0 0
        %1751 = vmatpush1.bf16.msra.mxu0 %v464
        %1752 = vmatprep.subr.bf16.mxu0 0
        %1753 = vmatpush1.bf16.msra.mxu0 %v465
        %1754 = vmatprep.subr.bf16.mxu0 0
        %1755 = vmatpush1.bf16.msra.mxu0 0
        %1756 = vmatprep.subr.bf16.mxu0 0
        %1757 = vmatpush1.bf16.msra.mxu0 0
        %1758 = vmatprep.subr.bf16.mxu0 0
        %1759 = vmatpush1.bf16.msra.mxu0 0
        %1760 = vmatprep.subr.bf16.mxu0 0
        %1761 = vmatpush1.bf16.msra.mxu0 0
        %1762 = vmatprep.subr.bf16.mxu0 0
        %1763 = vmatpush1.bf16.msra.mxu0 0
        %1764 = vmatprep.subr.bf16.mxu0 0
        %1765 = vmatpush1.bf16.msra.mxu0 0
        %1766 = vmatprep.subr.bf16.mxu0 0
        %1767 = vmatpush1.bf16.msra.mxu0 0
        %1768 = vmatprep.subr.bf16.mxu0 0
        %1769 = vmatpush1.bf16.msra.mxu0 0
        %1770 = vmatprep.subr.bf16.mxu0 0
        %1771 = vmatpush1.bf16.msra.mxu0 0
        %1772 = vmatprep.subr.bf16.mxu0 0
        %1773 = vmatpush1.bf16.msra.mxu0 0
        %1774 = vmatprep.subr.bf16.mxu0 0
        %1775 = vmatpush1.bf16.msra.mxu0 0
        %1776 = vmatprep.subr.bf16.mxu0 0
        %1777 = vmatpush1.bf16.msra.mxu0 0
        %1778 = vmatprep.subr.bf16.mxu0 0
        %1779 = vmatpush1.bf16.msra.mxu0 0
        %1780 = vmatprep.subr.bf16.mxu0 0
        %1781 = vmatpush1.bf16.msra.mxu0 0
        %1782 = vmatprep.mubr.bf16.mxu0 0
        %1783 = vmatmul.mubr.bf16.gmra.mrb[0].mxu0 %v1653
        %v1784 = vpop.f32.mrb[0].mxu0
        %v1785 = vadd.f32 0.0, %v1784
        %v1786 = vpop.f32.mrb[0].mxu0
        %v1787 = vpop.f32.mrb[0].mxu0
        %v1788 = vadd.f32 0.0, %v1787
        %v1789 = vpop.f32.mrb[0].mxu0
        %1790 = vmatprep.mubr.bf16.mxu0 0
        %1791 = vmatmul.mubr.bf16.gmra.mrb[0].mxu0 %v1656
        %v1792 = vpop.f32.mrb[0].mxu0
        %v1793 = vadd.f32 0.0, %v1792
        %v1794 = vpop.f32.mrb[0].mxu0
        %v1795 = vpop.f32.mrb[0].mxu0
        %v1796 = vadd.f32 0.0, %v1795
        %v1797 = vpop.f32.mrb[0].mxu0
        %1798 = vdwg.mxu0
        %1799 = vmatprep.subr.bf16.mxu0 0
        %1800 = vmatpush1.bf16.msra.mxu0 %v556
        %1801 = vmatprep.subr.bf16.mxu0 0
        %1802 = vmatpush1.bf16.msra.mxu0 %v557
        %1803 = vmatprep.subr.bf16.mxu0 0
        %1804 = vmatpush1.bf16.msra.mxu0 %v558
        %1805 = vmatprep.subr.bf16.mxu0 0
        %1806 = vmatpush1.bf16.msra.mxu0 %v559
        %1807 = vmatprep.subr.bf16.mxu0 0
        %1808 = vmatpush1.bf16.msra.mxu0 %v560
        %1809 = vmatprep.subr.bf16.mxu0 0
        %1810 = vmatpush1.bf16.msra.mxu0 %v561
        %1811 = vmatprep.subr.bf16.mxu0 0
        %1812 = vmatpush1.bf16.msra.mxu0 %v562
        %1813 = vmatprep.subr.bf16.mxu0 0
        %1814 = vmatpush1.bf16.msra.mxu0 %v563
        %1815 = vmatprep.subr.bf16.mxu0 0
        %1816 = vmatpush1.bf16.msra.mxu0 0
        %1817 = vmatprep.subr.bf16.mxu0 0
        %1818 = vmatpush1.bf16.msra.mxu0 0
        %1819 = vmatprep.subr.bf16.mxu0 0
        %1820 = vmatpush1.bf16.msra.mxu0 0
        %1821 = vmatprep.subr.bf16.mxu0 0
        %1822 = vmatpush1.bf16.msra.mxu0 0
        %1823 = vmatprep.subr.bf16.mxu0 0
        %1824 = vmatpush1.bf16.msra.mxu0 0
        %1825 = vmatprep.subr.bf16.mxu0 0
        %1826 = vmatpush1.bf16.msra.mxu0 0
        %1827 = vmatprep.subr.bf16.mxu0 0
        %1828 = vmatpush1.bf16.msra.mxu0 0
        %1829 = vmatprep.subr.bf16.mxu0 0
        %1830 = vmatpush1.bf16.msra.mxu0 0
        %1831 = vmatprep.mubr.bf16.mxu0 0
        %1832 = vmatmul.mubr.bf16.gmra.mrb[0].mxu0 %v1748
        %v1833 = vpop.f32.mrb[0].mxu0
        %v1834 = vadd.f32 %v1785, %v1833
        %v1835 = vpop.f32.mrb[0].mxu0
        %v1836 = vpop.f32.mrb[0].mxu0
        %v1837 = vadd.f32 %v1788, %v1836
        %v1838 = vpop.f32.mrb[0].mxu0
        %1839 = vmatprep.mubr.bf16.mxu0 0
        %1840 = vmatmul.mubr.bf16.gmra.mrb[0].mxu0 %v1749
        %v1841 = vpop.f32.mrb[0].mxu0
        %v1842 = vadd.f32 %v1793, %v1841
        %v1843 = vpop.f32.mrb[0].mxu0
        %v1844 = vpop.f32.mrb[0].mxu0
        %v1845 = vadd.f32 %v1796, %v1844
        %v1846 = vpop.f32.mrb[0].mxu0
        %1847 = vdwg.mxu0
        %v1848 = vxor.u32 %v1834, 2147483648
        %v1849 = vxor.u32 %v1837, 2147483648
        %v1850 = vxor.u32 %v1842, 2147483648
        %v1851 = vxor.u32 %v1845, 2147483648
        %v1852 = vmul.f32 %v1848, 1.442695
        %v1853 = vpow.pop %v1852
        %v1854 = vmul.f32 %v1849, 1.442695
        %v1855 = vpow.pop %v1854
        %v1856 = vmul.f32 %v1850, 1.442695
        %v1857 = vpow.pop %v1856
        %v1858 = vmul.f32 %v1851, 1.442695
        %v1859 = vpow.pop %v1858
        %v1860 = vadd.f32 %v1853, 1.0
        %v1861 = vadd.f32 %v1855, 1.0
        %v1862 = vadd.f32 %v1857, 1.0
        %v1863 = vadd.f32 %v1859, 1.0
        %v1864 = vrcp.pop %v1860
        %v1865 = vmul.f32 1.0, %v1864
        %v1866 = vrcp.pop %v1861
        %v1867 = vmul.f32 1.0, %v1866
        %v1868 = vrcp.pop %v1862
        %v1869 = vmul.f32 1.0, %v1868
        %v1870 = vrcp.pop %v1863
        %v1871 = vmul.f32 1.0, %v1870
        %v1872 = vtanh.pop %v1834
        %v1873 = vtanh.pop %v1837
        %v1874 = vtanh.pop %v1842
        %v1875 = vtanh.pop %v1845
        %v1876 = vmul.f32 %v1865, %v1616
        %v1877 = vmul.f32 %v1867, %v1617
        %v1878 = vmul.f32 %v1869, %v1618
        %v1879 = vmul.f32 %v1871, %v1619
        %1884 = vrot.lane.b32.xlu0 %v1872, 64
        %v1885 = vpop.permute.xlu0 %1884
        %1886 = vrot.lane.b32.xlu0 %v1873, 64
        %v1887 = vpop.permute.xlu0 %1886
        %1888 = vrot.lane.b32.xlu0 %v1874, 64
        %v1889 = vpop.permute.xlu0 %1888
        %1890 = vrot.lane.b32.xlu0 %v1875, 64
        %v1891 = vpop.permute.xlu0 %1890
        %v1896 = vmul.f32 %v1865, %v1885
        %v1897 = vmul.f32 %v1867, %v1887
        %v1898 = vmul.f32 %v1869, %v1889
        %v1899 = vmul.f32 %v1871, %v1891
        %1904 = vrot.lane.b32.xlu0 %v1896, 32
        %v1905 = vpop.permute.xlu0 %1904
        %1906 = vrot.lane.b32.xlu0 %v1897, 32
        %v1907 = vpop.permute.xlu0 %1906
        %1908 = vrot.lane.b32.xlu0 %v1898, 32
        %v1909 = vpop.permute.xlu0 %1908
        %1910 = vrot.lane.b32.xlu0 %v1899, 32
        %v1911 = vpop.permute.xlu0 %1910
        %v1916 = vadd.f32 %v1876, %v1905
        %v1917 = vadd.f32 %v1877, %v1907
        %v1918 = vadd.f32 %v1878, %v1909
        %v1919 = vadd.f32 %v1879, %v1911
        %v1920 = vtanh.pop %v1916
        %v1921 = vtanh.pop %v1917
        %v1922 = vtanh.pop %v1918
        %v1923 = vtanh.pop %v1919
        %1928 = vrot.lane.b32.xlu0 %v1920, 64
        %v1929 = vpop.permute.xlu0 %1928
        %1930 = vrot.lane.b32.xlu0 %v1921, 64
        %v1931 = vpop.permute.xlu0 %1930
        %1932 = vrot.lane.b32.xlu0 %v1922, 64
        %v1933 = vpop.permute.xlu0 %1932
        %1934 = vrot.lane.b32.xlu0 %v1923, 64
        %v1935 = vpop.permute.xlu0 %1934
        %v1940 = vmul.f32 %v1865, %v1929
        %v1941 = vmul.f32 %v1867, %v1931
        %v1942 = vmul.f32 %v1869, %v1933
        %v1943 = vmul.f32 %v1871, %v1935
        %v1944 = vpack.c.bf16 %v1941, %v1940
        %v1945 = vpack.c.bf16 %v1943, %v1942
        %1948 = vrot.lane.b32.xlu0 %v1944, 32
        %v1949 = vpop.permute.xlu0 %1948
        %1950 = vrot.lane.b32.xlu0 %v1945, 32
        %v1951 = vpop.permute.xlu0 %1950
        %v1953 = vsel %vm468, %v1949, 0
        %v1956 = vsel %vm468, %v1951, 0
        %1958 = vmatprep.subr.bf16.mxu0 0
        %1959 = vmatpush1.bf16.msra.mxu0 %v749
        %1960 = vmatprep.subr.bf16.mxu0 0
        %1961 = vmatpush1.bf16.msra.mxu0 %v750
        %1962 = vmatprep.subr.bf16.mxu0 0
        %1963 = vmatpush1.bf16.msra.mxu0 0
        %1964 = vmatprep.subr.bf16.mxu0 0
        %1965 = vmatpush1.bf16.msra.mxu0 0
        %1966 = vmatprep.subr.bf16.mxu0 0
        %1967 = vmatpush1.bf16.msra.mxu0 0
        %1968 = vmatprep.subr.bf16.mxu0 0
        %1969 = vmatpush1.bf16.msra.mxu0 0
        %1970 = vmatprep.subr.bf16.mxu0 0
        %1971 = vmatpush1.bf16.msra.mxu0 0
        %1972 = vmatprep.subr.bf16.mxu0 0
        %1973 = vmatpush1.bf16.msra.mxu0 0
        %1974 = vmatprep.subr.bf16.mxu0 0
        %1975 = vmatpush1.bf16.msra.mxu0 0
        %1976 = vmatprep.subr.bf16.mxu0 0
        %1977 = vmatpush1.bf16.msra.mxu0 0
        %1978 = vmatprep.subr.bf16.mxu0 0
        %1979 = vmatpush1.bf16.msra.mxu0 0
        %1980 = vmatprep.subr.bf16.mxu0 0
        %1981 = vmatpush1.bf16.msra.mxu0 0
        %1982 = vmatprep.subr.bf16.mxu0 0
        %1983 = vmatpush1.bf16.msra.mxu0 0
        %1984 = vmatprep.subr.bf16.mxu0 0
        %1985 = vmatpush1.bf16.msra.mxu0 0
        %1986 = vmatprep.subr.bf16.mxu0 0
        %1987 = vmatpush1.bf16.msra.mxu0 0
        %1988 = vmatprep.subr.bf16.mxu0 0
        %1989 = vmatpush1.bf16.msra.mxu0 0
        %1990 = vmatprep.mubr.bf16.mxu0 0
        %1991 = vmatmul.mubr.bf16.gmra.mrb[0].mxu0 %v1953
        %v1992 = vpop.f32.mrb[0].mxu0
        %v1993 = vadd.f32 %v435, %v1992
        %v1994 = vpop.f32.mrb[0].mxu0
        %v1995 = vpop.f32.mrb[0].mxu0
        %v1996 = vadd.f32 %v435, %v1995
        %v1997 = vpop.f32.mrb[0].mxu0
        %1998 = vmatprep.mubr.bf16.mxu0 0
        %1999 = vmatmul.mubr.bf16.gmra.mrb[0].mxu0 %v1956
        %v2000 = vpop.f32.mrb[0].mxu0
        %v2001 = vadd.f32 %v435, %v2000
        %v2002 = vpop.f32.mrb[0].mxu0
        %v2003 = vpop.f32.mrb[0].mxu0
        %v2004 = vadd.f32 %v435, %v2003
        %v2005 = vpop.f32.mrb[0].mxu0
        %2006 = vdwg.mxu0
        %s2007 = scalar_lea.vmem %s359, 128 [#allocation2]
        %2008 = vst [vmem:[%s2007] sm:$0xff] %v1993
        %2009 = vst [vmem:[%s2007 + $0x8] sm:$0xff] %v1996
        %2010 = vst [vmem:[%s2007 + $0x10] sm:$0xff] %v2001
        %2011 = vst [vmem:[%s2007 + $0x18] sm:$0xff] %v2004
        %2012 = vmax.xlane.f32.xlu0 %v1993
        %v2013 = vpop.xlane.xlu0 %2012
        %2014 = vmax.xlane.f32.xlu0 %v1996
        %v2015 = vpop.xlane.xlu0 %2014
        %2016 = vmax.xlane.f32.xlu0 %v2001
        %v2017 = vpop.xlane.xlu0 %2016
        %2018 = vmax.xlane.f32.xlu0 %v2004
        %v2019 = vpop.xlane.xlu0 %2018
        %vm2020 = vcmp.eq.f32.partialorder %v1993, %v2013
        %vm2021 = vcmp.eq.f32.partialorder %v1996, %v2015
        %vm2022 = vcmp.eq.f32.partialorder %v2001, %v2017
        %vm2023 = vcmp.eq.f32.partialorder %v2004, %v2019
        %v2024 = vsel %vm2020, %v439, 128.0
        %v2025 = vsel %vm2021, %v439, 128.0
        %v2026 = vsel %vm2022, %v439, 128.0
        %v2027 = vsel %vm2023, %v439, 128.0
        %2028 = vmin.xlane.f32.xlu0 %v2024
        %v2029 = vpop.xlane.xlu0 %2028
        %2030 = vmin.xlane.f32.xlu0 %v2025
        %v2031 = vpop.xlane.xlu0 %2030
        %2032 = vmin.xlane.f32.xlu0 %v2026
        %v2033 = vpop.xlane.xlu0 %2032
        %2034 = vmin.xlane.f32.xlu0 %v2027
        %v2035 = vpop.xlane.xlu0 %2034
        %vm2036 = vcmp.eq.f32.partialorder %v439, %v2029
        %vm2037 = vcmp.eq.f32.partialorder %v439, %v2031
        %vm2038 = vcmp.eq.f32.partialorder %v439, %v2033
        %vm2039 = vcmp.eq.f32.partialorder %v439, %v2035
        %v2040 = vsel %vm2036, 1, 0
        %v2041 = vsel %vm2037, 1, 0
        %v2042 = vsel %vm2038, 1, 0
        %v2043 = vsel %vm2039, 1, 0
        %v2044 = vcvt.s32.f32 %v2040
        %v2045 = vcvt.s32.f32 %v2041
        %v2046 = vcvt.s32.f32 %v2042
        %v2047 = vcvt.s32.f32 %v2043
        %v2048 = vpack.c.bf16 %v2045, %v2044
        %v2049 = vpack.c.bf16 %v2047, %v2046
        %2050 = vmatprep.subr.bf16.mxu0 0
        %2051 = vmatpush1.bf16.msra.mxu0 %v464
        %2052 = vmatprep.subr.bf16.mxu0 0
        %2053 = vmatpush1.bf16.msra.mxu0 %v465
        %2054 = vmatprep.subr.bf16.mxu0 0
        %2055 = vmatpush1.bf16.msra.mxu0 0
        %2056 = vmatprep.subr.bf16.mxu0 0
        %2057 = vmatpush1.bf16.msra.mxu0 0
        %2058 = vmatprep.subr.bf16.mxu0 0
        %2059 = vmatpush1.bf16.msra.mxu0 0
        %2060 = vmatprep.subr.bf16.mxu0 0
        %2061 = vmatpush1.bf16.msra.mxu0 0
        %2062 = vmatprep.subr.bf16.mxu0 0
        %2063 = vmatpush1.bf16.msra.mxu0 0
        %2064 = vmatprep.subr.bf16.mxu0 0
        %2065 = vmatpush1.bf16.msra.mxu0 0
        %2066 = vmatprep.subr.bf16.mxu0 0
        %2067 = vmatpush1.bf16.msra.mxu0 0
        %2068 = vmatprep.subr.bf16.mxu0 0
        %2069 = vmatpush1.bf16.msra.mxu0 0
        %2070 = vmatprep.subr.bf16.mxu0 0
        %2071 = vmatpush1.bf16.msra.mxu0 0
        %2072 = vmatprep.subr.bf16.mxu0 0
        %2073 = vmatpush1.bf16.msra.mxu0 0
        %2074 = vmatprep.subr.bf16.mxu0 0
        %2075 = vmatpush1.bf16.msra.mxu0 0
        %2076 = vmatprep.subr.bf16.mxu0 0
        %2077 = vmatpush1.bf16.msra.mxu0 0
        %2078 = vmatprep.subr.bf16.mxu0 0
        %2079 = vmatpush1.bf16.msra.mxu0 0
        %2080 = vmatprep.subr.bf16.mxu0 0
        %2081 = vmatpush1.bf16.msra.mxu0 0
        %2082 = vmatprep.mubr.bf16.mxu0 0
        %2083 = vmatmul.mubr.bf16.gmra.mrb[0].mxu0 %v1953
        %v2084 = vpop.f32.mrb[0].mxu0
        %v2085 = vadd.f32 0.0, %v2084
        %v2086 = vpop.f32.mrb[0].mxu0
        %v2087 = vpop.f32.mrb[0].mxu0
        %v2088 = vadd.f32 0.0, %v2087
        %v2089 = vpop.f32.mrb[0].mxu0
        %2090 = vmatprep.mubr.bf16.mxu0 0
        %2091 = vmatmul.mubr.bf16.gmra.mrb[0].mxu0 %v1956
        %v2092 = vpop.f32.mrb[0].mxu0
        %v2093 = vadd.f32 0.0, %v2092
        %v2094 = vpop.f32.mrb[0].mxu0
        %v2095 = vpop.f32.mrb[0].mxu0
        %v2096 = vadd.f32 0.0, %v2095
        %v2097 = vpop.f32.mrb[0].mxu0
        %2098 = vdwg.mxu0
        %2099 = vmatprep.subr.bf16.mxu0 0
        %2100 = vmatpush1.bf16.msra.mxu0 %v556
        %2101 = vmatprep.subr.bf16.mxu0 0
        %2102 = vmatpush1.bf16.msra.mxu0 %v557
        %2103 = vmatprep.subr.bf16.mxu0 0
        %2104 = vmatpush1.bf16.msra.mxu0 %v558
        %2105 = vmatprep.subr.bf16.mxu0 0
        %2106 = vmatpush1.bf16.msra.mxu0 %v559
        %2107 = vmatprep.subr.bf16.mxu0 0
        %2108 = vmatpush1.bf16.msra.mxu0 %v560
        %2109 = vmatprep.subr.bf16.mxu0 0
        %2110 = vmatpush1.bf16.msra.mxu0 %v561
        %2111 = vmatprep.subr.bf16.mxu0 0
        %2112 = vmatpush1.bf16.msra.mxu0 %v562
        %2113 = vmatprep.subr.bf16.mxu0 0
        %2114 = vmatpush1.bf16.msra.mxu0 %v563
        %2115 = vmatprep.subr.bf16.mxu0 0
        %2116 = vmatpush1.bf16.msra.mxu0 0
        %2117 = vmatprep.subr.bf16.mxu0 0
        %2118 = vmatpush1.bf16.msra.mxu0 0
        %2119 = vmatprep.subr.bf16.mxu0 0
        %2120 = vmatpush1.bf16.msra.mxu0 0
        %2121 = vmatprep.subr.bf16.mxu0 0
        %2122 = vmatpush1.bf16.msra.mxu0 0
        %2123 = vmatprep.subr.bf16.mxu0 0
        %2124 = vmatpush1.bf16.msra.mxu0 0
        %2125 = vmatprep.subr.bf16.mxu0 0
        %2126 = vmatpush1.bf16.msra.mxu0 0
        %2127 = vmatprep.subr.bf16.mxu0 0
        %2128 = vmatpush1.bf16.msra.mxu0 0
        %2129 = vmatprep.subr.bf16.mxu0 0
        %2130 = vmatpush1.bf16.msra.mxu0 0
        %2131 = vmatprep.mubr.bf16.mxu0 0
        %2132 = vmatmul.mubr.bf16.gmra.mrb[0].mxu0 %v2048
        %v2133 = vpop.f32.mrb[0].mxu0
        %v2134 = vadd.f32 %v2085, %v2133
        %v2135 = vpop.f32.mrb[0].mxu0
        %v2136 = vpop.f32.mrb[0].mxu0
        %v2137 = vadd.f32 %v2088, %v2136
        %v2138 = vpop.f32.mrb[0].mxu0
        %2139 = vmatprep.mubr.bf16.mxu0 0
        %2140 = vmatmul.mubr.bf16.gmra.mrb[0].mxu0 %v2049
        %v2141 = vpop.f32.mrb[0].mxu0
        %v2142 = vadd.f32 %v2093, %v2141
        %v2143 = vpop.f32.mrb[0].mxu0
        %v2144 = vpop.f32.mrb[0].mxu0
        %v2145 = vadd.f32 %v2096, %v2144
        %v2146 = vpop.f32.mrb[0].mxu0
        %2147 = vdwg.mxu0
        %v2148 = vxor.u32 %v2134, 2147483648
        %v2149 = vxor.u32 %v2137, 2147483648
        %v2150 = vxor.u32 %v2142, 2147483648
        %v2151 = vxor.u32 %v2145, 2147483648
        %v2152 = vmul.f32 %v2148, 1.442695
        %v2153 = vpow.pop %v2152
        %v2154 = vmul.f32 %v2149, 1.442695
        %v2155 = vpow.pop %v2154
        %v2156 = vmul.f32 %v2150, 1.442695
        %v2157 = vpow.pop %v2156
        %v2158 = vmul.f32 %v2151, 1.442695
        %v2159 = vpow.pop %v2158
        %v2160 = vadd.f32 %v2153, 1.0
        %v2161 = vadd.f32 %v2155, 1.0
        %v2162 = vadd.f32 %v2157, 1.0
        %v2163 = vadd.f32 %v2159, 1.0
        %v2164 = vrcp.pop %v2160
        %v2165 = vmul.f32 1.0, %v2164
        %v2166 = vrcp.pop %v2161
        %v2167 = vmul.f32 1.0, %v2166
        %v2168 = vrcp.pop %v2162
        %v2169 = vmul.f32 1.0, %v2168
        %v2170 = vrcp.pop %v2163
        %v2171 = vmul.f32 1.0, %v2170
        %v2172 = vtanh.pop %v2134
        %v2173 = vtanh.pop %v2137
        %v2174 = vtanh.pop %v2142
        %v2175 = vtanh.pop %v2145
        %v2176 = vmul.f32 %v2165, %v1916
        %v2177 = vmul.f32 %v2167, %v1917
        %v2178 = vmul.f32 %v2169, %v1918
        %v2179 = vmul.f32 %v2171, %v1919
        %2184 = vrot.lane.b32.xlu0 %v2172, 64
        %v2185 = vpop.permute.xlu0 %2184
        %2186 = vrot.lane.b32.xlu0 %v2173, 64
        %v2187 = vpop.permute.xlu0 %2186
        %2188 = vrot.lane.b32.xlu0 %v2174, 64
        %v2189 = vpop.permute.xlu0 %2188
        %2190 = vrot.lane.b32.xlu0 %v2175, 64
        %v2191 = vpop.permute.xlu0 %2190
        %v2196 = vmul.f32 %v2165, %v2185
        %v2197 = vmul.f32 %v2167, %v2187
        %v2198 = vmul.f32 %v2169, %v2189
        %v2199 = vmul.f32 %v2171, %v2191
        %2204 = vrot.lane.b32.xlu0 %v2196, 32
        %v2205 = vpop.permute.xlu0 %2204
        %2206 = vrot.lane.b32.xlu0 %v2197, 32
        %v2207 = vpop.permute.xlu0 %2206
        %2208 = vrot.lane.b32.xlu0 %v2198, 32
        %v2209 = vpop.permute.xlu0 %2208
        %2210 = vrot.lane.b32.xlu0 %v2199, 32
        %v2211 = vpop.permute.xlu0 %2210
        %v2216 = vadd.f32 %v2176, %v2205
        %v2217 = vadd.f32 %v2177, %v2207
        %v2218 = vadd.f32 %v2178, %v2209
        %v2219 = vadd.f32 %v2179, %v2211
        %v2220 = vtanh.pop %v2216
        %v2221 = vtanh.pop %v2217
        %v2222 = vtanh.pop %v2218
        %v2223 = vtanh.pop %v2219
        %2228 = vrot.lane.b32.xlu0 %v2220, 64
        %v2229 = vpop.permute.xlu0 %2228
        %2230 = vrot.lane.b32.xlu0 %v2221, 64
        %v2231 = vpop.permute.xlu0 %2230
        %2232 = vrot.lane.b32.xlu0 %v2222, 64
        %v2233 = vpop.permute.xlu0 %2232
        %2234 = vrot.lane.b32.xlu0 %v2223, 64
        %v2235 = vpop.permute.xlu0 %2234
        %v2240 = vmul.f32 %v2165, %v2229
        %v2241 = vmul.f32 %v2167, %v2231
        %v2242 = vmul.f32 %v2169, %v2233
        %v2243 = vmul.f32 %v2171, %v2235
        %v2244 = vpack.c.bf16 %v2241, %v2240
        %v2245 = vpack.c.bf16 %v2243, %v2242
        %2248 = vrot.lane.b32.xlu0 %v2244, 32
        %v2249 = vpop.permute.xlu0 %2248
        %2250 = vrot.lane.b32.xlu0 %v2245, 32
        %v2251 = vpop.permute.xlu0 %2250
        %v2253 = vsel %vm468, %v2249, 0
        %v2256 = vsel %vm468, %v2251, 0
        %2258 = vmatprep.subr.bf16.mxu0 0
        %2259 = vmatpush1.bf16.msra.mxu0 %v749
        %2260 = vmatprep.subr.bf16.mxu0 0
        %2261 = vmatpush1.bf16.msra.mxu0 %v750
        %2262 = vmatprep.subr.bf16.mxu0 0
        %2263 = vmatpush1.bf16.msra.mxu0 0
        %2264 = vmatprep.subr.bf16.mxu0 0
        %2265 = vmatpush1.bf16.msra.mxu0 0
        %2266 = vmatprep.subr.bf16.mxu0 0
        %2267 = vmatpush1.bf16.msra.mxu0 0
        %2268 = vmatprep.subr.bf16.mxu0 0
        %2269 = vmatpush1.bf16.msra.mxu0 0
        %2270 = vmatprep.subr.bf16.mxu0 0
        %2271 = vmatpush1.bf16.msra.mxu0 0
        %2272 = vmatprep.subr.bf16.mxu0 0
        %2273 = vmatpush1.bf16.msra.mxu0 0
        %2274 = vmatprep.subr.bf16.mxu0 0
        %2275 = vmatpush1.bf16.msra.mxu0 0
        %2276 = vmatprep.subr.bf16.mxu0 0
        %2277 = vmatpush1.bf16.msra.mxu0 0
        %2278 = vmatprep.subr.bf16.mxu0 0
        %2279 = vmatpush1.bf16.msra.mxu0 0
        %2280 = vmatprep.subr.bf16.mxu0 0
        %2281 = vmatpush1.bf16.msra.mxu0 0
        %2282 = vmatprep.subr.bf16.mxu0 0
        %2283 = vmatpush1.bf16.msra.mxu0 0
        %2284 = vmatprep.subr.bf16.mxu0 0
        %2285 = vmatpush1.bf16.msra.mxu0 0
        %2286 = vmatprep.subr.bf16.mxu0 0
        %2287 = vmatpush1.bf16.msra.mxu0 0
        %2288 = vmatprep.subr.bf16.mxu0 0
        %2289 = vmatpush1.bf16.msra.mxu0 0
        %2290 = vmatprep.mubr.bf16.mxu0 0
        %2291 = vmatmul.mubr.bf16.gmra.mrb[0].mxu0 %v2253
        %v2292 = vpop.f32.mrb[0].mxu0
        %v2293 = vadd.f32 %v435, %v2292
        %v2294 = vpop.f32.mrb[0].mxu0
        %v2295 = vpop.f32.mrb[0].mxu0
        %v2296 = vadd.f32 %v435, %v2295
        %v2297 = vpop.f32.mrb[0].mxu0
        %2298 = vmatprep.mubr.bf16.mxu0 0
        %2299 = vmatmul.mubr.bf16.gmra.mrb[0].mxu0 %v2256
        %v2300 = vpop.f32.mrb[0].mxu0
        %v2301 = vadd.f32 %v435, %v2300
        %v2302 = vpop.f32.mrb[0].mxu0
        %v2303 = vpop.f32.mrb[0].mxu0
        %v2304 = vadd.f32 %v435, %v2303
        %v2305 = vpop.f32.mrb[0].mxu0
        %2306 = vdwg.mxu0
        %s2307 = scalar_lea.vmem %s359, 160 [#allocation2]
        %2308 = vst [vmem:[%s2307] sm:$0xff] %v2293
        %2309 = vst [vmem:[%s2307 + $0x8] sm:$0xff] %v2296
        %2310 = vst [vmem:[%s2307 + $0x10] sm:$0xff] %v2301
        %2311 = vst [vmem:[%s2307 + $0x18] sm:$0xff] %v2304
        %2312 = vmax.xlane.f32.xlu0 %v2293
        %v2313 = vpop.xlane.xlu0 %2312
        %2314 = vmax.xlane.f32.xlu0 %v2296
        %v2315 = vpop.xlane.xlu0 %2314
        %2316 = vmax.xlane.f32.xlu0 %v2301
        %v2317 = vpop.xlane.xlu0 %2316
        %2318 = vmax.xlane.f32.xlu0 %v2304
        %v2319 = vpop.xlane.xlu0 %2318
        %vm2320 = vcmp.eq.f32.partialorder %v2293, %v2313
        %vm2321 = vcmp.eq.f32.partialorder %v2296, %v2315
        %vm2322 = vcmp.eq.f32.partialorder %v2301, %v2317
        %vm2323 = vcmp.eq.f32.partialorder %v2304, %v2319
        %v2324 = vsel %vm2320, %v439, 128.0
        %v2325 = vsel %vm2321, %v439, 128.0
        %v2326 = vsel %vm2322, %v439, 128.0
        %v2327 = vsel %vm2323, %v439, 128.0
        %2328 = vmin.xlane.f32.xlu0 %v2324
        %v2329 = vpop.xlane.xlu0 %2328
        %2330 = vmin.xlane.f32.xlu0 %v2325
        %v2331 = vpop.xlane.xlu0 %2330
        %2332 = vmin.xlane.f32.xlu0 %v2326
        %v2333 = vpop.xlane.xlu0 %2332
        %2334 = vmin.xlane.f32.xlu0 %v2327
        %v2335 = vpop.xlane.xlu0 %2334
        %vm2336 = vcmp.eq.f32.partialorder %v439, %v2329
        %vm2337 = vcmp.eq.f32.partialorder %v439, %v2331
        %vm2338 = vcmp.eq.f32.partialorder %v439, %v2333
        %vm2339 = vcmp.eq.f32.partialorder %v439, %v2335
        %v2340 = vsel %vm2336, 1, 0
        %v2341 = vsel %vm2337, 1, 0
        %v2342 = vsel %vm2338, 1, 0
        %v2343 = vsel %vm2339, 1, 0
        %v2344 = vcvt.s32.f32 %v2340
        %v2345 = vcvt.s32.f32 %v2341
        %v2346 = vcvt.s32.f32 %v2342
        %v2347 = vcvt.s32.f32 %v2343
        %v2348 = vpack.c.bf16 %v2345, %v2344
        %v2349 = vpack.c.bf16 %v2347, %v2346
        %2350 = vmatprep.subr.bf16.mxu0 0
        %2351 = vmatpush1.bf16.msra.mxu0 %v464
        %2352 = vmatprep.subr.bf16.mxu0 0
        %2353 = vmatpush1.bf16.msra.mxu0 %v465
        %2354 = vmatprep.subr.bf16.mxu0 0
        %2355 = vmatpush1.bf16.msra.mxu0 0
        %2356 = vmatprep.subr.bf16.mxu0 0
        %2357 = vmatpush1.bf16.msra.mxu0 0
        %2358 = vmatprep.subr.bf16.mxu0 0
        %2359 = vmatpush1.bf16.msra.mxu0 0
        %2360 = vmatprep.subr.bf16.mxu0 0
        %2361 = vmatpush1.bf16.msra.mxu0 0
        %2362 = vmatprep.subr.bf16.mxu0 0
        %2363 = vmatpush1.bf16.msra.mxu0 0
        %2364 = vmatprep.subr.bf16.mxu0 0
        %2365 = vmatpush1.bf16.msra.mxu0 0
        %2366 = vmatprep.subr.bf16.mxu0 0
        %2367 = vmatpush1.bf16.msra.mxu0 0
        %2368 = vmatprep.subr.bf16.mxu0 0
        %2369 = vmatpush1.bf16.msra.mxu0 0
        %2370 = vmatprep.subr.bf16.mxu0 0
        %2371 = vmatpush1.bf16.msra.mxu0 0
        %2372 = vmatprep.subr.bf16.mxu0 0
        %2373 = vmatpush1.bf16.msra.mxu0 0
        %2374 = vmatprep.subr.bf16.mxu0 0
        %2375 = vmatpush1.bf16.msra.mxu0 0
        %2376 = vmatprep.subr.bf16.mxu0 0
        %2377 = vmatpush1.bf16.msra.mxu0 0
        %2378 = vmatprep.subr.bf16.mxu0 0
        %2379 = vmatpush1.bf16.msra.mxu0 0
        %2380 = vmatprep.subr.bf16.mxu0 0
        %2381 = vmatpush1.bf16.msra.mxu0 0
        %2382 = vmatprep.mubr.bf16.mxu0 0
        %2383 = vmatmul.mubr.bf16.gmra.mrb[0].mxu0 %v2253
        %v2384 = vpop.f32.mrb[0].mxu0
        %v2385 = vadd.f32 0.0, %v2384
        %v2386 = vpop.f32.mrb[0].mxu0
        %v2387 = vpop.f32.mrb[0].mxu0
        %v2388 = vadd.f32 0.0, %v2387
        %v2389 = vpop.f32.mrb[0].mxu0
        %2390 = vmatprep.mubr.bf16.mxu0 0
        %2391 = vmatmul.mubr.bf16.gmra.mrb[0].mxu0 %v2256
        %v2392 = vpop.f32.mrb[0].mxu0
        %v2393 = vadd.f32 0.0, %v2392
        %v2394 = vpop.f32.mrb[0].mxu0
        %v2395 = vpop.f32.mrb[0].mxu0
        %v2396 = vadd.f32 0.0, %v2395
        %v2397 = vpop.f32.mrb[0].mxu0
        %2398 = vdwg.mxu0
        %2399 = vmatprep.subr.bf16.mxu0 0
        %2400 = vmatpush1.bf16.msra.mxu0 %v556
        %2401 = vmatprep.subr.bf16.mxu0 0
        %2402 = vmatpush1.bf16.msra.mxu0 %v557
        %2403 = vmatprep.subr.bf16.mxu0 0
        %2404 = vmatpush1.bf16.msra.mxu0 %v558
        %2405 = vmatprep.subr.bf16.mxu0 0
        %2406 = vmatpush1.bf16.msra.mxu0 %v559
        %2407 = vmatprep.subr.bf16.mxu0 0
        %2408 = vmatpush1.bf16.msra.mxu0 %v560
        %2409 = vmatprep.subr.bf16.mxu0 0
        %2410 = vmatpush1.bf16.msra.mxu0 %v561
        %2411 = vmatprep.subr.bf16.mxu0 0
        %2412 = vmatpush1.bf16.msra.mxu0 %v562
        %2413 = vmatprep.subr.bf16.mxu0 0
        %2414 = vmatpush1.bf16.msra.mxu0 %v563
        %2415 = vmatprep.subr.bf16.mxu0 0
        %2416 = vmatpush1.bf16.msra.mxu0 0
        %2417 = vmatprep.subr.bf16.mxu0 0
        %2418 = vmatpush1.bf16.msra.mxu0 0
        %2419 = vmatprep.subr.bf16.mxu0 0
        %2420 = vmatpush1.bf16.msra.mxu0 0
        %2421 = vmatprep.subr.bf16.mxu0 0
        %2422 = vmatpush1.bf16.msra.mxu0 0
        %2423 = vmatprep.subr.bf16.mxu0 0
        %2424 = vmatpush1.bf16.msra.mxu0 0
        %2425 = vmatprep.subr.bf16.mxu0 0
        %2426 = vmatpush1.bf16.msra.mxu0 0
        %2427 = vmatprep.subr.bf16.mxu0 0
        %2428 = vmatpush1.bf16.msra.mxu0 0
        %2429 = vmatprep.subr.bf16.mxu0 0
        %2430 = vmatpush1.bf16.msra.mxu0 0
        %2431 = vmatprep.mubr.bf16.mxu0 0
        %2432 = vmatmul.mubr.bf16.gmra.mrb[0].mxu0 %v2348
        %v2433 = vpop.f32.mrb[0].mxu0
        %v2434 = vadd.f32 %v2385, %v2433
        %v2435 = vpop.f32.mrb[0].mxu0
        %v2436 = vpop.f32.mrb[0].mxu0
        %v2437 = vadd.f32 %v2388, %v2436
        %v2438 = vpop.f32.mrb[0].mxu0
        %2439 = vmatprep.mubr.bf16.mxu0 0
        %2440 = vmatmul.mubr.bf16.gmra.mrb[0].mxu0 %v2349
        %v2441 = vpop.f32.mrb[0].mxu0
        %v2442 = vadd.f32 %v2393, %v2441
        %v2443 = vpop.f32.mrb[0].mxu0
        %v2444 = vpop.f32.mrb[0].mxu0
        %v2445 = vadd.f32 %v2396, %v2444
        %v2446 = vpop.f32.mrb[0].mxu0
        %2447 = vdwg.mxu0
        %v2448 = vxor.u32 %v2434, 2147483648
        %v2449 = vxor.u32 %v2437, 2147483648
        %v2450 = vxor.u32 %v2442, 2147483648
        %v2451 = vxor.u32 %v2445, 2147483648
        %v2452 = vmul.f32 %v2448, 1.442695
        %v2453 = vpow.pop %v2452
        %v2454 = vmul.f32 %v2449, 1.442695
        %v2455 = vpow.pop %v2454
        %v2456 = vmul.f32 %v2450, 1.442695
        %v2457 = vpow.pop %v2456
        %v2458 = vmul.f32 %v2451, 1.442695
        %v2459 = vpow.pop %v2458
        %v2460 = vadd.f32 %v2453, 1.0
        %v2461 = vadd.f32 %v2455, 1.0
        %v2462 = vadd.f32 %v2457, 1.0
        %v2463 = vadd.f32 %v2459, 1.0
        %v2464 = vrcp.pop %v2460
        %v2465 = vmul.f32 1.0, %v2464
        %v2466 = vrcp.pop %v2461
        %v2467 = vmul.f32 1.0, %v2466
        %v2468 = vrcp.pop %v2462
        %v2469 = vmul.f32 1.0, %v2468
        %v2470 = vrcp.pop %v2463
        %v2471 = vmul.f32 1.0, %v2470
        %v2472 = vtanh.pop %v2434
        %v2473 = vtanh.pop %v2437
        %v2474 = vtanh.pop %v2442
        %v2475 = vtanh.pop %v2445
        %v2476 = vmul.f32 %v2465, %v2216
        %v2477 = vmul.f32 %v2467, %v2217
        %v2478 = vmul.f32 %v2469, %v2218
        %v2479 = vmul.f32 %v2471, %v2219
        %2484 = vrot.lane.b32.xlu0 %v2472, 64
        %v2485 = vpop.permute.xlu0 %2484
        %2486 = vrot.lane.b32.xlu0 %v2473, 64
        %v2487 = vpop.permute.xlu0 %2486
        %2488 = vrot.lane.b32.xlu0 %v2474, 64
        %v2489 = vpop.permute.xlu0 %2488
        %2490 = vrot.lane.b32.xlu0 %v2475, 64
        %v2491 = vpop.permute.xlu0 %2490
        %v2496 = vmul.f32 %v2465, %v2485
        %v2497 = vmul.f32 %v2467, %v2487
        %v2498 = vmul.f32 %v2469, %v2489
        %v2499 = vmul.f32 %v2471, %v2491
        %2504 = vrot.lane.b32.xlu0 %v2496, 32
        %v2505 = vpop.permute.xlu0 %2504
        %2506 = vrot.lane.b32.xlu0 %v2497, 32
        %v2507 = vpop.permute.xlu0 %2506
        %2508 = vrot.lane.b32.xlu0 %v2498, 32
        %v2509 = vpop.permute.xlu0 %2508
        %2510 = vrot.lane.b32.xlu0 %v2499, 32
        %v2511 = vpop.permute.xlu0 %2510
        %v2516 = vadd.f32 %v2476, %v2505
        %v2517 = vadd.f32 %v2477, %v2507
        %v2518 = vadd.f32 %v2478, %v2509
        %v2519 = vadd.f32 %v2479, %v2511
        %v2520 = vtanh.pop %v2516
        %v2521 = vtanh.pop %v2517
        %v2522 = vtanh.pop %v2518
        %v2523 = vtanh.pop %v2519
        %2528 = vrot.lane.b32.xlu0 %v2520, 64
        %v2529 = vpop.permute.xlu0 %2528
        %2530 = vrot.lane.b32.xlu0 %v2521, 64
        %v2531 = vpop.permute.xlu0 %2530
        %2532 = vrot.lane.b32.xlu0 %v2522, 64
        %v2533 = vpop.permute.xlu0 %2532
        %2534 = vrot.lane.b32.xlu0 %v2523, 64
        %v2535 = vpop.permute.xlu0 %2534
        %v2540 = vmul.f32 %v2465, %v2529
        %v2541 = vmul.f32 %v2467, %v2531
        %v2542 = vmul.f32 %v2469, %v2533
        %v2543 = vmul.f32 %v2471, %v2535
        %v2544 = vpack.c.bf16 %v2541, %v2540
        %v2545 = vpack.c.bf16 %v2543, %v2542
        %2548 = vrot.lane.b32.xlu0 %v2544, 32
        %v2549 = vpop.permute.xlu0 %2548
        %2550 = vrot.lane.b32.xlu0 %v2545, 32
        %v2551 = vpop.permute.xlu0 %2550
        %v2553 = vsel %vm468, %v2549, 0
        %v2556 = vsel %vm468, %v2551, 0
        %2558 = vmatprep.subr.bf16.mxu0 0
        %2559 = vmatpush1.bf16.msra.mxu0 %v749
        %2560 = vmatprep.subr.bf16.mxu0 0
        %2561 = vmatpush1.bf16.msra.mxu0 %v750
        %2562 = vmatprep.subr.bf16.mxu0 0
        %2563 = vmatpush1.bf16.msra.mxu0 0
        %2564 = vmatprep.subr.bf16.mxu0 0
        %2565 = vmatpush1.bf16.msra.mxu0 0
        %2566 = vmatprep.subr.bf16.mxu0 0
        %2567 = vmatpush1.bf16.msra.mxu0 0
        %2568 = vmatprep.subr.bf16.mxu0 0
        %2569 = vmatpush1.bf16.msra.mxu0 0
        %2570 = vmatprep.subr.bf16.mxu0 0
        %2571 = vmatpush1.bf16.msra.mxu0 0
        %2572 = vmatprep.subr.bf16.mxu0 0
        %2573 = vmatpush1.bf16.msra.mxu0 0
        %2574 = vmatprep.subr.bf16.mxu0 0
        %2575 = vmatpush1.bf16.msra.mxu0 0
        %2576 = vmatprep.subr.bf16.mxu0 0
        %2577 = vmatpush1.bf16.msra.mxu0 0
        %2578 = vmatprep.subr.bf16.mxu0 0
        %2579 = vmatpush1.bf16.msra.mxu0 0
        %2580 = vmatprep.subr.bf16.mxu0 0
        %2581 = vmatpush1.bf16.msra.mxu0 0
        %2582 = vmatprep.subr.bf16.mxu0 0
        %2583 = vmatpush1.bf16.msra.mxu0 0
        %2584 = vmatprep.subr.bf16.mxu0 0
        %2585 = vmatpush1.bf16.msra.mxu0 0
        %2586 = vmatprep.subr.bf16.mxu0 0
        %2587 = vmatpush1.bf16.msra.mxu0 0
        %2588 = vmatprep.subr.bf16.mxu0 0
        %2589 = vmatpush1.bf16.msra.mxu0 0
        %2590 = vmatprep.mubr.bf16.mxu0 0
        %2591 = vmatmul.mubr.bf16.gmra.mrb[0].mxu0 %v2553
        %v2592 = vpop.f32.mrb[0].mxu0
        %v2593 = vadd.f32 %v435, %v2592
        %v2594 = vpop.f32.mrb[0].mxu0
        %v2595 = vpop.f32.mrb[0].mxu0
        %v2596 = vadd.f32 %v435, %v2595
        %v2597 = vpop.f32.mrb[0].mxu0
        %2598 = vmatprep.mubr.bf16.mxu0 0
        %2599 = vmatmul.mubr.bf16.gmra.mrb[0].mxu0 %v2556
        %v2600 = vpop.f32.mrb[0].mxu0
        %v2601 = vadd.f32 %v435, %v2600
        %v2602 = vpop.f32.mrb[0].mxu0
        %v2603 = vpop.f32.mrb[0].mxu0
        %v2604 = vadd.f32 %v435, %v2603
        %v2605 = vpop.f32.mrb[0].mxu0
        %2606 = vdwg.mxu0
        %s2607 = scalar_lea.vmem %s359, 192 [#allocation2]
        %2608 = vst [vmem:[%s2607] sm:$0xff] %v2593
        %2609 = vst [vmem:[%s2607 + $0x8] sm:$0xff] %v2596
        %2610 = vst [vmem:[%s2607 + $0x10] sm:$0xff] %v2601
        %2611 = vst [vmem:[%s2607 + $0x18] sm:$0xff] %v2604
        %2612 = vmax.xlane.f32.xlu0 %v2593
        %v2613 = vpop.xlane.xlu0 %2612
        %2614 = vmax.xlane.f32.xlu0 %v2596
        %v2615 = vpop.xlane.xlu0 %2614
        %2616 = vmax.xlane.f32.xlu0 %v2601
        %v2617 = vpop.xlane.xlu0 %2616
        %2618 = vmax.xlane.f32.xlu0 %v2604
        %v2619 = vpop.xlane.xlu0 %2618
        %vm2620 = vcmp.eq.f32.partialorder %v2593, %v2613
        %vm2621 = vcmp.eq.f32.partialorder %v2596, %v2615
        %vm2622 = vcmp.eq.f32.partialorder %v2601, %v2617
        %vm2623 = vcmp.eq.f32.partialorder %v2604, %v2619
        %v2624 = vsel %vm2620, %v439, 128.0
        %v2625 = vsel %vm2621, %v439, 128.0
        %v2626 = vsel %vm2622, %v439, 128.0
        %v2627 = vsel %vm2623, %v439, 128.0
        %2628 = vmin.xlane.f32.xlu0 %v2624
        %v2629 = vpop.xlane.xlu0 %2628
        %2630 = vmin.xlane.f32.xlu0 %v2625
        %v2631 = vpop.xlane.xlu0 %2630
        %2632 = vmin.xlane.f32.xlu0 %v2626
        %v2633 = vpop.xlane.xlu0 %2632
        %2634 = vmin.xlane.f32.xlu0 %v2627
        %v2635 = vpop.xlane.xlu0 %2634
        %vm2636 = vcmp.eq.f32.partialorder %v439, %v2629
        %vm2637 = vcmp.eq.f32.partialorder %v439, %v2631
        %vm2638 = vcmp.eq.f32.partialorder %v439, %v2633
        %vm2639 = vcmp.eq.f32.partialorder %v439, %v2635
        %v2640 = vsel %vm2636, 1, 0
        %v2641 = vsel %vm2637, 1, 0
        %v2642 = vsel %vm2638, 1, 0
        %v2643 = vsel %vm2639, 1, 0
        %v2644 = vcvt.s32.f32 %v2640
        %v2645 = vcvt.s32.f32 %v2641
        %v2646 = vcvt.s32.f32 %v2642
        %v2647 = vcvt.s32.f32 %v2643
        %v2648 = vpack.c.bf16 %v2645, %v2644
        %v2649 = vpack.c.bf16 %v2647, %v2646
        %2650 = vmatprep.subr.bf16.mxu0 0
        %2651 = vmatpush1.bf16.msra.mxu0 %v464
        %2652 = vmatprep.subr.bf16.mxu0 0
        %2653 = vmatpush1.bf16.msra.mxu0 %v465
        %2654 = vmatprep.subr.bf16.mxu0 0
        %2655 = vmatpush1.bf16.msra.mxu0 0
        %2656 = vmatprep.subr.bf16.mxu0 0
        %2657 = vmatpush1.bf16.msra.mxu0 0
        %2658 = vmatprep.subr.bf16.mxu0 0
        %2659 = vmatpush1.bf16.msra.mxu0 0
        %2660 = vmatprep.subr.bf16.mxu0 0
        %2661 = vmatpush1.bf16.msra.mxu0 0
        %2662 = vmatprep.subr.bf16.mxu0 0
        %2663 = vmatpush1.bf16.msra.mxu0 0
        %2664 = vmatprep.subr.bf16.mxu0 0
        %2665 = vmatpush1.bf16.msra.mxu0 0
        %2666 = vmatprep.subr.bf16.mxu0 0
        %2667 = vmatpush1.bf16.msra.mxu0 0
        %2668 = vmatprep.subr.bf16.mxu0 0
        %2669 = vmatpush1.bf16.msra.mxu0 0
        %2670 = vmatprep.subr.bf16.mxu0 0
        %2671 = vmatpush1.bf16.msra.mxu0 0
        %2672 = vmatprep.subr.bf16.mxu0 0
        %2673 = vmatpush1.bf16.msra.mxu0 0
        %2674 = vmatprep.subr.bf16.mxu0 0
        %2675 = vmatpush1.bf16.msra.mxu0 0
        %2676 = vmatprep.subr.bf16.mxu0 0
        %2677 = vmatpush1.bf16.msra.mxu0 0
        %2678 = vmatprep.subr.bf16.mxu0 0
        %2679 = vmatpush1.bf16.msra.mxu0 0
        %2680 = vmatprep.subr.bf16.mxu0 0
        %2681 = vmatpush1.bf16.msra.mxu0 0
        %2682 = vmatprep.mubr.bf16.mxu0 0
        %2683 = vmatmul.mubr.bf16.gmra.mrb[0].mxu0 %v2553
        %v2684 = vpop.f32.mrb[0].mxu0
        %v2685 = vadd.f32 0.0, %v2684
        %v2686 = vpop.f32.mrb[0].mxu0
        %v2687 = vpop.f32.mrb[0].mxu0
        %v2688 = vadd.f32 0.0, %v2687
        %v2689 = vpop.f32.mrb[0].mxu0
        %2690 = vmatprep.mubr.bf16.mxu0 0
        %2691 = vmatmul.mubr.bf16.gmra.mrb[0].mxu0 %v2556
        %v2692 = vpop.f32.mrb[0].mxu0
        %v2693 = vadd.f32 0.0, %v2692
        %v2694 = vpop.f32.mrb[0].mxu0
        %v2695 = vpop.f32.mrb[0].mxu0
        %v2696 = vadd.f32 0.0, %v2695
        %v2697 = vpop.f32.mrb[0].mxu0
        %2698 = vdwg.mxu0
        %2699 = vmatprep.subr.bf16.mxu0 0
        %2700 = vmatpush1.bf16.msra.mxu0 %v556
        %2701 = vmatprep.subr.bf16.mxu0 0
        %2702 = vmatpush1.bf16.msra.mxu0 %v557
        %2703 = vmatprep.subr.bf16.mxu0 0
        %2704 = vmatpush1.bf16.msra.mxu0 %v558
        %2705 = vmatprep.subr.bf16.mxu0 0
        %2706 = vmatpush1.bf16.msra.mxu0 %v559
        %2707 = vmatprep.subr.bf16.mxu0 0
        %2708 = vmatpush1.bf16.msra.mxu0 %v560
        %2709 = vmatprep.subr.bf16.mxu0 0
        %2710 = vmatpush1.bf16.msra.mxu0 %v561
        %2711 = vmatprep.subr.bf16.mxu0 0
        %2712 = vmatpush1.bf16.msra.mxu0 %v562
        %2713 = vmatprep.subr.bf16.mxu0 0
        %2714 = vmatpush1.bf16.msra.mxu0 %v563
        %2715 = vmatprep.subr.bf16.mxu0 0
        %2716 = vmatpush1.bf16.msra.mxu0 0
        %2717 = vmatprep.subr.bf16.mxu0 0
        %2718 = vmatpush1.bf16.msra.mxu0 0
        %2719 = vmatprep.subr.bf16.mxu0 0
        %2720 = vmatpush1.bf16.msra.mxu0 0
        %2721 = vmatprep.subr.bf16.mxu0 0
        %2722 = vmatpush1.bf16.msra.mxu0 0
        %2723 = vmatprep.subr.bf16.mxu0 0
        %2724 = vmatpush1.bf16.msra.mxu0 0
        %2725 = vmatprep.subr.bf16.mxu0 0
        %2726 = vmatpush1.bf16.msra.mxu0 0
        %2727 = vmatprep.subr.bf16.mxu0 0
        %2728 = vmatpush1.bf16.msra.mxu0 0
        %2729 = vmatprep.subr.bf16.mxu0 0
        %2730 = vmatpush1.bf16.msra.mxu0 0
        %2731 = vmatprep.mubr.bf16.mxu0 0
        %2732 = vmatmul.mubr.bf16.gmra.mrb[0].mxu0 %v2648
        %v2733 = vpop.f32.mrb[0].mxu0
        %v2734 = vadd.f32 %v2685, %v2733
        %v2735 = vpop.f32.mrb[0].mxu0
        %v2736 = vpop.f32.mrb[0].mxu0
        %v2737 = vadd.f32 %v2688, %v2736
        %v2738 = vpop.f32.mrb[0].mxu0
        %2739 = vmatprep.mubr.bf16.mxu0 0
        %2740 = vmatmul.mubr.bf16.gmra.mrb[0].mxu0 %v2649
        %v2741 = vpop.f32.mrb[0].mxu0
        %v2742 = vadd.f32 %v2693, %v2741
        %v2743 = vpop.f32.mrb[0].mxu0
        %v2744 = vpop.f32.mrb[0].mxu0
        %v2745 = vadd.f32 %v2696, %v2744
        %v2746 = vpop.f32.mrb[0].mxu0
        %2747 = vdwg.mxu0
        %v2748 = vxor.u32 %v2734, 2147483648
        %v2749 = vxor.u32 %v2737, 2147483648
        %v2750 = vxor.u32 %v2742, 2147483648
        %v2751 = vxor.u32 %v2745, 2147483648
        %v2752 = vmul.f32 %v2748, 1.442695
        %v2753 = vpow.pop %v2752
        %v2754 = vmul.f32 %v2749, 1.442695
        %v2755 = vpow.pop %v2754
        %v2756 = vmul.f32 %v2750, 1.442695
        %v2757 = vpow.pop %v2756
        %v2758 = vmul.f32 %v2751, 1.442695
        %v2759 = vpow.pop %v2758
        %v2760 = vadd.f32 %v2753, 1.0
        %v2761 = vadd.f32 %v2755, 1.0
        %v2762 = vadd.f32 %v2757, 1.0
        %v2763 = vadd.f32 %v2759, 1.0
        %v2764 = vrcp.pop %v2760
        %v2765 = vmul.f32 1.0, %v2764
        %v2766 = vrcp.pop %v2761
        %v2767 = vmul.f32 1.0, %v2766
        %v2768 = vrcp.pop %v2762
        %v2769 = vmul.f32 1.0, %v2768
        %v2770 = vrcp.pop %v2763
        %v2771 = vmul.f32 1.0, %v2770
        %v2772 = vtanh.pop %v2734
        %v2773 = vtanh.pop %v2737
        %v2774 = vtanh.pop %v2742
        %v2775 = vtanh.pop %v2745
        %v2776 = vmul.f32 %v2765, %v2516
        %v2777 = vmul.f32 %v2767, %v2517
        %v2778 = vmul.f32 %v2769, %v2518
        %v2779 = vmul.f32 %v2771, %v2519
        %2784 = vrot.lane.b32.xlu0 %v2772, 64
        %v2785 = vpop.permute.xlu0 %2784
        %2786 = vrot.lane.b32.xlu0 %v2773, 64
        %v2787 = vpop.permute.xlu0 %2786
        %2788 = vrot.lane.b32.xlu0 %v2774, 64
        %v2789 = vpop.permute.xlu0 %2788
        %2790 = vrot.lane.b32.xlu0 %v2775, 64
        %v2791 = vpop.permute.xlu0 %2790
        %v2796 = vmul.f32 %v2765, %v2785
        %v2797 = vmul.f32 %v2767, %v2787
        %v2798 = vmul.f32 %v2769, %v2789
        %v2799 = vmul.f32 %v2771, %v2791
        %2804 = vrot.lane.b32.xlu0 %v2796, 32
        %v2805 = vpop.permute.xlu0 %2804
        %2806 = vrot.lane.b32.xlu0 %v2797, 32
        %v2807 = vpop.permute.xlu0 %2806
        %2808 = vrot.lane.b32.xlu0 %v2798, 32
        %v2809 = vpop.permute.xlu0 %2808
        %2810 = vrot.lane.b32.xlu0 %v2799, 32
        %v2811 = vpop.permute.xlu0 %2810
        %v2816 = vadd.f32 %v2776, %v2805
        %v2817 = vadd.f32 %v2777, %v2807
        %v2818 = vadd.f32 %v2778, %v2809
        %v2819 = vadd.f32 %v2779, %v2811
        %v2820 = vtanh.pop %v2816
        %v2821 = vtanh.pop %v2817
        %v2822 = vtanh.pop %v2818
        %v2823 = vtanh.pop %v2819
        %2828 = vrot.lane.b32.xlu0 %v2820, 64
        %v2829 = vpop.permute.xlu0 %2828
        %2830 = vrot.lane.b32.xlu0 %v2821, 64
        %v2831 = vpop.permute.xlu0 %2830
        %2832 = vrot.lane.b32.xlu0 %v2822, 64
        %v2833 = vpop.permute.xlu0 %2832
        %2834 = vrot.lane.b32.xlu0 %v2823, 64
        %v2835 = vpop.permute.xlu0 %2834
        %v2840 = vmul.f32 %v2765, %v2829
        %v2841 = vmul.f32 %v2767, %v2831
        %v2842 = vmul.f32 %v2769, %v2833
        %v2843 = vmul.f32 %v2771, %v2835
        %v2844 = vpack.c.bf16 %v2841, %v2840
        %v2845 = vpack.c.bf16 %v2843, %v2842
        %2848 = vrot.lane.b32.xlu0 %v2844, 32
        %v2849 = vpop.permute.xlu0 %2848
        %2850 = vrot.lane.b32.xlu0 %v2845, 32
        %v2851 = vpop.permute.xlu0 %2850
        %v2853 = vsel %vm468, %v2849, 0
        %v2856 = vsel %vm468, %v2851, 0
        %2858 = vmatprep.subr.bf16.mxu0 0
        %2859 = vmatpush1.bf16.msra.mxu0 %v749
        %2860 = vmatprep.subr.bf16.mxu0 0
        %2861 = vmatpush1.bf16.msra.mxu0 %v750
        %2862 = vmatprep.subr.bf16.mxu0 0
        %2863 = vmatpush1.bf16.msra.mxu0 0
        %2864 = vmatprep.subr.bf16.mxu0 0
        %2865 = vmatpush1.bf16.msra.mxu0 0
        %2866 = vmatprep.subr.bf16.mxu0 0
        %2867 = vmatpush1.bf16.msra.mxu0 0
        %2868 = vmatprep.subr.bf16.mxu0 0
        %2869 = vmatpush1.bf16.msra.mxu0 0
        %2870 = vmatprep.subr.bf16.mxu0 0
        %2871 = vmatpush1.bf16.msra.mxu0 0
        %2872 = vmatprep.subr.bf16.mxu0 0
        %2873 = vmatpush1.bf16.msra.mxu0 0
        %2874 = vmatprep.subr.bf16.mxu0 0
        %2875 = vmatpush1.bf16.msra.mxu0 0
        %2876 = vmatprep.subr.bf16.mxu0 0
        %2877 = vmatpush1.bf16.msra.mxu0 0
        %2878 = vmatprep.subr.bf16.mxu0 0
        %2879 = vmatpush1.bf16.msra.mxu0 0
        %2880 = vmatprep.subr.bf16.mxu0 0
        %2881 = vmatpush1.bf16.msra.mxu0 0
        %2882 = vmatprep.subr.bf16.mxu0 0
        %2883 = vmatpush1.bf16.msra.mxu0 0
        %2884 = vmatprep.subr.bf16.mxu0 0
        %2885 = vmatpush1.bf16.msra.mxu0 0
        %2886 = vmatprep.subr.bf16.mxu0 0
        %2887 = vmatpush1.bf16.msra.mxu0 0
        %2888 = vmatprep.subr.bf16.mxu0 0
        %2889 = vmatpush1.bf16.msra.mxu0 0
        %2890 = vmatprep.mubr.bf16.mxu0 0
        %2891 = vmatmul.mubr.bf16.gmra.mrb[0].mxu0 %v2853
        %v2892 = vpop.f32.mrb[0].mxu0
        %v2893 = vadd.f32 %v435, %v2892
        %v2894 = vpop.f32.mrb[0].mxu0
        %v2895 = vpop.f32.mrb[0].mxu0
        %v2896 = vadd.f32 %v435, %v2895
        %v2897 = vpop.f32.mrb[0].mxu0
        %2898 = vmatprep.mubr.bf16.mxu0 0
        %2899 = vmatmul.mubr.bf16.gmra.mrb[0].mxu0 %v2856
        %v2900 = vpop.f32.mrb[0].mxu0
        %v2901 = vadd.f32 %v435, %v2900
        %v2902 = vpop.f32.mrb[0].mxu0
        %v2903 = vpop.f32.mrb[0].mxu0
        %v2904 = vadd.f32 %v435, %v2903
        %v2905 = vpop.f32.mrb[0].mxu0
        %2906 = vdwg.mxu0
        %s2907 = scalar_lea.vmem %s359, 224 [#allocation2]
        %2908 = vst [vmem:[%s2907] sm:$0xff] %v2893
        %2909 = vst [vmem:[%s2907 + $0x8] sm:$0xff] %v2896
        %2910 = vst [vmem:[%s2907 + $0x10] sm:$0xff] %v2901
        %2911 = vst [vmem:[%s2907 + $0x18] sm:$0xff] %v2904
        %2916 = vrot.lane.b32.xlu0 %v2840, 32
        %v2917 = vpop.permute.xlu0 %2916
        %2918 = vrot.lane.b32.xlu0 %v2841, 32
        %v2919 = vpop.permute.xlu0 %2918
        %2920 = vrot.lane.b32.xlu0 %v2842, 32
        %v2921 = vpop.permute.xlu0 %2920
        %2922 = vrot.lane.b32.xlu0 %v2843, 32
        %v2923 = vpop.permute.xlu0 %2922
        %2928 = vst.msk [vmem:[%s397] sm:$0xff] %vm468, %v2917
        %2929 = vst.msk [vmem:[%s397 + $0x8] sm:$0xff] %vm468, %v2919
        %2930 = vst.msk [vmem:[%s397 + $0x10] sm:$0xff] %vm468, %v2921
        %2931 = vst.msk [vmem:[%s397 + $0x18] sm:$0xff] %vm468, %v2923
        %2936 = vrot.lane.b32.xlu0 %v2816, 96
        %v2937 = vpop.permute.xlu0 %2936
        %2938 = vrot.lane.b32.xlu0 %v2817, 96
        %v2939 = vpop.permute.xlu0 %2938
        %2940 = vrot.lane.b32.xlu0 %v2818, 96
        %v2941 = vpop.permute.xlu0 %2940
        %2942 = vrot.lane.b32.xlu0 %v2819, 96
        %v2943 = vpop.permute.xlu0 %2942
        %2948 = vst.msk [vmem:[%s403] sm:$0xff] %vm468, %v2937
        %2949 = vst.msk [vmem:[%s403 + $0x8] sm:$0xff] %vm468, %v2939
        %2950 = vst.msk [vmem:[%s403 + $0x10] sm:$0xff] %vm468, %v2941
        %2951 = vst.msk [vmem:[%s403 + $0x18] sm:$0xff] %vm468, %v2943
        %s2952 = sand.u32 %s194, 1
        %s2953 = scalar_lea.sflag [#allocation3], %s2952
        %s2954 = sand.u32 %s194, 1
        %s2955 = smul.addr %s2954, 256
        %s2956 = scalar_lea.vmem [#allocation2], %s2955
        %s2957 = smul.u32 4, %s24
        %p2958 = scmp.lt.s32.totalorder %s2957, 7
        %s2959 = scalar_select %p2958, %s2957, 7
        %s2960 = smul.addr %s2959, 8
        %s2961 = scalar_lea.vmem %s8, %s2960
        %s2962 = smul.u32 4, %s24
        %p2963 = scmp.lt.s32.totalorder %s2962, 7
        %s2964 = scalar_select %p2963, %s2962, 7
        %s2965 = smul.addr %s2964, 8
        %s2966 = scalar_lea.vmem %s9, %s2965
        // Predicated region
        $region49: #{autocope_rollout.1} parent=47 // pred_check
          %p2967 = pneg %p204
        $region50: #{autocope_rollout.1} parent=47 // pred_check_branch
          %2969 = sbr.rel (%p2967) target = $region52
        $region51: #{autocope_rollout.1} parent=47 // pred_region
          #allocation5 [shape = 'u32[6]{0}', space=smem, size = 0x18, scoped, tag = 'DMA stride descriptor']
          %s2970 = smul.u32 4, %s24
          %s2972 = ssub.s32 4096, 4096
          %2973 = vsyncadd %s2953, %s2972
          %s2974 = smul.addr %s2970, 128
          %s2975 = scalar_lea.hbm %s7, %s2974
          %s2977 = sshll.u32 1, 14
          %s2978 = sxor.u32 4294967295, %s2977
          %s2981 = sshll.u32 7, 18
          %s2982 = sxor.u32 4294967295, %s2981
          %s2983 = sand.u32 0, %s2982
          %s2985 = sor.u32 %s2983, 0
          %s2987 = sshll.u32 3, 24
          %s2988 = sxor.u32 4294967295, %s2987
          %s2989 = sand.u32 %s2985, %s2988
          %s2991 = sor.u32 %s2989, 0
          %s2992 = sshll.u32 %s2956, 4
          %s2993 = int_to_ptr.vmem [resolvable:$true] %s2992
          %2999 = sst [smem:[#allocation5]] 512
          %s3000 = scalar_lea.smem [#allocation5], 1
          %3001 = sst [smem:[%s3000]] 1024
          %s3002 = scalar_lea.smem [#allocation5], 2
          %3003 = sst [smem:[%s3002]] 4
          %s3004 = scalar_lea.smem [#allocation5], 3
          %3005 = sst [smem:[%s3004]] 128
          %s3006 = scalar_lea.smem [#allocation5], 4
          %3007 = sst [smem:[%s3006]] 128
          %s3008 = scalar_lea.smem [#allocation5], 5
          %3009 = sst [smem:[%s3008]] 8
          %3011 = dma.general %s2993, 4096, %s2975, %s2953, [#allocation4], [#allocation5], %s2991, 0
        $region52: #{autocope_rollout.1} parent=47 // pred_fallthru
          _
        // Predicated region
        $region53: #{autocope_rollout.1} parent=47 // pred_check
          %p3012 = pneg %p230
        $region54: #{autocope_rollout.1} parent=47 // pred_check_branch
          %3014 = sbr.rel (%p3012) target = $region56
        $region55: #{autocope_rollout.1} parent=47 // pred_region
          %s3015 = smul.u32 4, %s24
        $region56: #{autocope_rollout.1} parent=47 // pred_fallthru
          _
        // Predicated region
        $region57: #{autocope_rollout.1} parent=47 // pred_check
          %p3016 = pneg %p256
        $region58: #{autocope_rollout.1} parent=47 // pred_check_branch
          %3018 = sbr.rel (%p3016) target = $region60
        $region59: #{autocope_rollout.1} parent=47 // pred_region
          %s3019 = smul.u32 4, %s24
        $region60: #{autocope_rollout.1} parent=47 // pred_fallthru
          _
      $region48: #{autocope_rollout.1} parent=5 // pred_fallthru
        _
      %p3020 = scmp.le.s32.totalorder 2, %s19
      // Predicated region
      $region61: #{autocope_rollout.1} parent=5 // pred_check
        %p3021 = pneg %p3020
      $region62: #{autocope_rollout.1} parent=5 // pred_check_branch
        %3023 = sbr.rel (%p3021) target = $region64
      $region63: #{autocope_rollout.1} parent=5 // pred_region
        %s3024 = ssub.s32 %s19, 2
        // Predicated region
        $region65: #{autocope_rollout.1} parent=63 // pred_check
          %p3025 = pneg %p210
        $region66: #{autocope_rollout.1} parent=63 // pred_check_branch
          %3027 = sbr.rel (%p3025) target = $region68
        $region67: #{autocope_rollout.1} parent=63 // pred_region
          %s3028 = sand.u32 %s195, 1
          %s3029 = scalar_lea.sflag [#allocation3], %s3028
          %s3030 = sand.u32 %s195, 1
          %s3031 = smul.addr %s3030, 256
          %s3032 = scalar_lea.vmem [#allocation2], %s3031
          %3033 = dma.done %s3029, 4096
        $region68: #{autocope_rollout.1} parent=63 // pred_fallthru
          _
        // Predicated region
        $region69: #{autocope_rollout.1} parent=63 // pred_check
          %p3034 = pneg %p236
        $region70: #{autocope_rollout.1} parent=63 // pred_check_branch
          %3036 = sbr.rel (%p3034) target = $region72
        $region71: #{autocope_rollout.1} parent=63 // pred_region
          %s3037 = smul.u32 4, %s25
          %p3038 = scmp.lt.s32.totalorder %s3037, 7
          %s3039 = scalar_select %p3038, %s3037, 7
          %s3040 = smul.addr %s3039, 8
          %s3041 = scalar_lea.vmem %s8, %s3040
        $region72: #{autocope_rollout.1} parent=63 // pred_fallthru
          _
        // Predicated region
        $region73: #{autocope_rollout.1} parent=63 // pred_check
          %p3042 = pneg %p262
        $region74: #{autocope_rollout.1} parent=63 // pred_check_branch
          %3044 = sbr.rel (%p3042) target = $region76
        $region75: #{autocope_rollout.1} parent=63 // pred_region
          %s3045 = smul.u32 4, %s25
          %p3046 = scmp.lt.s32.totalorder %s3045, 7
          %s3047 = scalar_select %p3046, %s3045, 7
          %s3048 = smul.addr %s3047, 8
          %s3049 = scalar_lea.vmem %s9, %s3048
        $region76: #{autocope_rollout.1} parent=63 // pred_fallthru
          _
      $region64: #{autocope_rollout.1} parent=5 // pred_fallthru
        _
    $region6: #{autocope_rollout.1} parent=1 // loop_footer
      %s23 = sadd.s32 1, %s19
    $region7: #{autocope_rollout.1} parent=1 // loop_footer_branch
      %18 = sbr.rel target = $region3
    $region8: #{autocope_rollout.1} parent=1 // loop_exit
      _
    %3050 = vsyncpa [#allocation3], 1
    %s3051 = scalar_lea.sflag [#allocation3], 1
    %3052 = vsyncpa %s3051, 1

</llo_original>
